<compile_context>
chip_gen: v6e
topology: v6e:2x2x1
jax: 0.10.0
libtpu: 0.0.40
codegen_flags: <defaults>
</compile_context>

<pallas_src>
import functools

import jax
import jax.numpy as jnp
from jax.experimental import pallas as pl
from jax.experimental.pallas import tpu as pltpu


def _round_up(x, m):
    return (x + m - 1) // m * m


# -----------------------------------------------------------------------------
# Fused kernel body: one grid step == one batch element, everything in VMEM.
# -----------------------------------------------------------------------------
def _unet_inner_kernel(xs_ref, wd_ref, bd_ref, wu_ref, bu_ref, o_ref, dpad_ref,
                       *, oh, ow, cin, inner_p, outer_p, outer_nc, slope):
    # xs: space-to-depth(2) of the spatially padded input, channels ordered
    #     (bh, bw, c):  xs[i, j, (bh*2+bw)*cin + c] = x_pad[2i+bh, 2j+bw, c]
    xs_raw = xs_ref[0]                                        # (oh+1, ow+1, 4*cin) f32
    xs_act = jnp.where(xs_raw >= 0, xs_raw, slope * xs_raw)   # LeakyReLU(0.2)

    taps = ((0, 0), (0, 1), (1, 0), (1, 1))
    kd = 4 * cin

    # ---------------- down: Conv2d(k=4, s=2, p=1) as 4 tap matmuls ----------
    acc = None
    for k, (a, b) in enumerate(taps):
        lhs = xs_act[a:a + oh, b:b + ow, :].reshape(oh * ow, kd)
        term = jnp.dot(lhs.astype(jnp.bfloat16),
                       wd_ref[k * kd:(k + 1) * kd, :],
                       preferred_element_type=jnp.float32)
        acc = term if acc is None else acc + term
    d = jnp.maximum(acc + bd_ref[...], 0.0)                   # ReLU, (oh*ow, inner_p) f32

    # zero-padded down activation: taps for the transposed-conv phases
    dpad_ref[...] = jnp.zeros_like(dpad_ref)
    dpad_ref[1:oh + 1, 1:ow + 1, :] = d.reshape(oh, ow, inner_p)

    bu = bu_ref[...]
    # ------------- up: ConvTranspose2d(k=4, s=2, p=1), phase split ----------
    # O[2m+pe, 2n+po] = bu + sum_{a,b} d_pad[m+pe+a, n+po+b] . Wt[:, :, 3-2a-pe, 3-2b-po]
    for pe in (0, 1):
        for po in (0, 1):
            ph = pe * 2 + po
            uacc = None
            for k, (a, b) in enumerate(taps):
                lhs = dpad_ref[pe + a:pe + a + oh, po + b:po + b + ow, :]
                lhs = lhs.reshape(oh * ow, inner_p).astype(jnp.bfloat16)
                term = jnp.dot(lhs,
                               wu_ref[ph, k * inner_p:(k + 1) * inner_p, :],
                               preferred_element_type=jnp.float32)
                uacc = term if uacc is None else uacc + term
            u = (uacc + bu).reshape(oh, ow, outer_p)
            # first channel half: up-path result for this output phase
            o_ref[0, ph, :, :, 0:outer_nc] = u[:, :, 0:outer_nc]
            # second channel half: skip connection (raw x at phase (pe, po)),
            # recovered from the s2d input:  x[2m+pe, 2n+po] = xs[m+pe, n+po, (1-pe,1-po,:)]
            q = ((1 - pe) * 2 + (1 - po)) * cin
            o_ref[0, ph, :, :, outer_nc:2 * outer_nc] = \
                xs_raw[pe:pe + oh, po:po + ow, q:q + cin]


# -----------------------------------------------------------------------------
# One-time weight repacking (hoisted out of the per-forward hot path).
# -----------------------------------------------------------------------------
def pack_params(w_down, b_down, w_up, b_up):
    inner, cin = w_down.shape[0], w_down.shape[1]
    outer = w_up.shape[1]
    ip = _round_up(inner, 128)
    op = _round_up(outer, 128)

    # Conv2d weight (inner, cin, kh, kw), kh=2a+bh, kw=2b+bw
    #   -> wd[(a,b,bh,bw,ic), oc]  with oc zero-padded to ip, bf16 for the MXU.
    wd = w_down.reshape(inner, cin, 2, 2, 2, 2)               # (oc, ic, a, bh, b, bw)
    wd = jnp.transpose(wd, (2, 4, 3, 5, 1, 0)).reshape(16 * cin, inner)
    wd = jnp.pad(wd, ((0, 0), (0, ip - inner))).astype(jnp.bfloat16)
    bd = jnp.pad(b_down, (0, ip - inner)).reshape(1, ip).astype(jnp.float32)

    # ConvTranspose2d weight (inner, outer, kh, kw) -> per-phase 2x2 kernels:
    #   wu[pe*2+po, (a*2+b)*ip + ic, oc] = w_up[ic, oc, 3-(2a+pe), 3-(2b+po)]
    wu = jnp.flip(w_up, (2, 3)).reshape(inner, outer, 2, 2, 2, 2)  # (ic, oc, a, pe, b, po)
    wu = jnp.transpose(wu, (3, 5, 2, 4, 0, 1))                     # (pe, po, a, b, ic, oc)
    wu = jnp.pad(wu, ((0, 0), (0, 0), (0, 0), (0, 0),
                      (0, ip - inner), (0, op - outer)))
    wu = wu.reshape(4, 4 * ip, op).astype(jnp.bfloat16)
    bu = jnp.pad(b_up, (0, op - outer)).reshape(1, op).astype(jnp.float32)
    return wd, bd, wu, bu


# -----------------------------------------------------------------------------
# Forward pass (NCHW in / NCHW out, matching the PyTorch module).
# -----------------------------------------------------------------------------
def unet_innermost_forward(x_nchw, wd, bd, wu, bu):
    B, cin, H, W = x_nchw.shape
    assert H % 2 == 0 and W % 2 == 0
    oh, ow = H // 2, W // 2
    ip, op = wd.shape[1], wu.shape[2]
    outer_nc = cin                      # skip concat => input channels == outer_nc
    c2 = 2 * outer_nc

    # NCHW -> NHWC -> pad(1) -> space-to-depth(2): (B, oh+1, ow+1, 4*cin).
    xh = jnp.transpose(x_nchw, (0, 2, 3, 1))
    xp = jnp.pad(xh, ((0, 0), (1, 1), (1, 1), (0, 0)))
    xs = xp.reshape(B, oh + 1, 2, ow + 1, 2, cin)
    xs = jnp.transpose(xs, (0, 1, 3, 2, 4, 5)).reshape(B, oh + 1, ow + 1, 4 * cin)

    kern = functools.partial(_unet_inner_kernel, oh=oh, ow=ow, cin=cin,
                             inner_p=ip, outer_p=op, outer_nc=outer_nc, slope=0.2)

    out5 = pl.pallas_call(
        kern,
        out_shape=jax.ShapeDtypeStruct((B, 4, oh, ow, c2), jnp.float32),
        grid=(B,),
        in_specs=[
            pl.BlockSpec((1, oh + 1, ow + 1, 4 * cin), lambda b: (b, 0, 0, 0)),
            pl.BlockSpec((16 * cin, ip), lambda b: (0, 0)),      # resident weights
            pl.BlockSpec((1, ip), lambda b: (0, 0)),
            pl.BlockSpec((4, 4 * ip, op), lambda b: (0, 0, 0)),
            pl.BlockSpec((1, op), lambda b: (0, 0)),
        ],
        out_specs=pl.BlockSpec((1, 4, oh, ow, c2), lambda b: (b, 0, 0, 0, 0)),
        scratch_shapes=[pltpu.VMEM((oh + 2, ow + 2, ip), jnp.float32)],
        compiler_params=pltpu.CompilerParams(
            dimension_semantics=("parallel",),        # batch split across TCs (v7x)
            vmem_limit_bytes=32 * 1024 * 1024,        # safe on v5e/v6e/v7x
        ),
    )(xs, wd, bd, wu, bu)

    # (B, phase, oh, ow, 2*outer) -> NCHW; single XLA relayout that folds the
    # phase interleave into the (unavoidable) NHWC->NCHW boundary transpose.
    out = out5.reshape(B, 2, 2, oh, ow, c2)
    out = jnp.transpose(out, (0, 5, 3, 1, 4, 2)).reshape(B, c2, H, W)
    return out


# -----------------------------------------------------------------------------
# Pure-JAX (XLA conv) reference mirroring the PyTorch ops.
# mxu_dtype=bf16 mirrors the kernel's MXU operand precision exactly.
# -----------------------------------------------------------------------------
def reference_forward(x, w_down, b_down, w_up, b_up, mxu_dtype=jnp.float32):
    dn = ("NCHW", "OIHW", "NCHW")
    h = jnp.where(x >= 0, x, 0.2 * x)
    h = jax.lax.conv_general_dilated(
        h.astype(mxu_dtype), w_down.astype(mxu_dtype), (2, 2), ((1, 1), (1, 1)),
        dimension_numbers=dn, preferred_element_type=jnp.float32)
    h = h + b_down[None, :, None, None]
    h = jnp.maximum(h, 0.0)
    w_conv = jnp.transpose(w_up[:, :, ::-1, ::-1], (1, 0, 2, 3))
    u = jax.lax.conv_general_dilated(
        h.astype(mxu_dtype), w_conv.astype(mxu_dtype), (1, 1), ((2, 2), (2, 2)),
        lhs_dilation=(2, 2), dimension_numbers=dn,
        preferred_element_type=jnp.float32)
    u = u + b_up[None, :, None, None]
    return jnp.concatenate([u, x], axis=1)


if __name__ == "__main__":
    # Small deterministic config: outer_nc=4, inner_nc=8, x = (2, 4, 16, 16)
    outer_nc, inner_nc = 4, 8
    B, H, W = 2, 16, 16

    key = jax.random.PRNGKey(0)
    kx, kwd, kbd, kwu, kbu = jax.random.split(key, 5)

    x = jax.random.normal(kx, (B, outer_nc, H, W), jnp.float32)
    # Conv2d(outer_nc, inner_nc, 4): weight (inner, outer, 4, 4), bias (inner,)
    w_down = 0.1 * jax.random.normal(kwd, (inner_nc, outer_nc, 4, 4), jnp.float32)
    b_down = 0.1 * jax.random.normal(kbd, (inner_nc,), jnp.float32)
    # ConvTranspose2d(inner_nc, outer_nc, 4): weight (inner, outer, 4, 4), bias (outer,)
    w_up = 0.1 * jax.random.normal(kwu, (inner_nc, outer_nc, 4, 4), jnp.float32)
    b_up = 0.1 * jax.random.normal(kbu, (outer_nc,), jnp.float32)

    packed = pack_params(w_down, b_down, w_up, b_up)     # once, outside the hot path
    out = jax.jit(unet_innermost_forward)(x, *packed)
    out = jax.block_until_ready(out)
    assert out.shape == (B, 2 * outer_nc, H, W), out.shape

    # Primary check: reference with the same bf16-operand / f32-accum precision.
    ref16 = jax.block_until_ready(
        reference_forward(x, w_down, b_down, w_up, b_up, mxu_dtype=jnp.bfloat16))
    err16 = float(jnp.max(jnp.abs(out - ref16)))
    assert jnp.allclose(out, ref16, atol=1e-2, rtol=1e-2), err16

    # Sanity check vs the exact f32 PyTorch semantics (loose tol: bf16 MXU operands).
    ref32 = jax.block_until_ready(
        reference_forward(x, w_down, b_down, w_up, b_up, mxu_dtype=jnp.float32))
    err32 = float(jnp.max(jnp.abs(out - ref32)))
    assert jnp.allclose(out, ref32, atol=8e-2, rtol=8e-2), err32

    print("KERNEL_OK")
</pallas_src>

<mosaic_0001>
module attributes {stable_mosaic.version = 11 : i64} {
  func.func @_unet_inner_kernel(%arg0: i32, %arg1: memref<1x9x9x16xf32, #tpu.memory_space<vmem>>, %arg2: memref<64x128xbf16, #tpu.memory_space<vmem>>, %arg3: memref<1x128xf32, #tpu.memory_space<vmem>>, %arg4: memref<4x512x128xbf16, #tpu.memory_space<vmem>>, %arg5: memref<1x128xf32, #tpu.memory_space<vmem>>, %arg6: memref<1x4x8x8x8xf32, #tpu.memory_space<vmem>>, %arg7: memref<10x10x128xf32, #tpu.memory_space<vmem>>) attributes {dimension_semantics = [#tpu.dimension_semantics<parallel>], iteration_bounds = array<i64: 2>, scalar_prefetch = 0 : i64, scratch_operands = 1 : i64, tpu.core_type = #tpu.core_type<tc>, window_params = [{transform_indices = @transform_0, window_bounds = array<i64: 1, 9, 9, 16>}, {pipeline_mode = #tpu.pipeline_mode<synchronous>, transform_indices = @transform_1, window_bounds = array<i64: 64, 128>}, {pipeline_mode = #tpu.pipeline_mode<synchronous>, transform_indices = @transform_2, window_bounds = array<i64: 1, 128>}, {pipeline_mode = #tpu.pipeline_mode<synchronous>, transform_indices = @transform_3, window_bounds = array<i64: 4, 512, 128>}, {pipeline_mode = #tpu.pipeline_mode<synchronous>, transform_indices = @transform_4, window_bounds = array<i64: 1, 128>}, {transform_indices = @transform_5, window_bounds = array<i64: 1, 4, 8, 8, 8>}]} {
    %c0 = arith.constant 0 : index
    %c0_0 = arith.constant 0 : index
    %c0_1 = arith.constant 0 : index
    %c0_2 = arith.constant 0 : index
    %0 = vector.load %arg1[%c0, %c0_0, %c0_1, %c0_2] : memref<1x9x9x16xf32, #tpu.memory_space<vmem>>, vector<1x9x9x16xf32>
    %1 = vector.shape_cast %0 : vector<1x9x9x16xf32> to vector<9x9x16xf32>
    %cst = arith.constant 0.000000e+00 : f32
    %2 = vector.broadcast %cst : f32 to vector<9x9x16xf32>
    %3 = arith.cmpf oge, %1, %2 : vector<9x9x16xf32>
    %cst_3 = arith.constant 2.000000e-01 : f32
    %4 = vector.broadcast %cst_3 : f32 to vector<9x9x16xf32>
    %5 = arith.mulf %4, %1 : vector<9x9x16xf32>
    %6 = arith.select %3, %1, %5 : vector<9x9x16xi1>, vector<9x9x16xf32>
    %7 = vector.extract_strided_slice %6 {offsets = [0, 0, 0], sizes = [8, 8, 16], strides = [1, 1, 1]} : vector<9x9x16xf32> to vector<8x8x16xf32>
    %8 = vector.shape_cast %7 : vector<8x8x16xf32> to vector<64x16xf32>
    %9 = arith.truncf %8 : vector<64x16xf32> to vector<64x16xbf16>
    %c0_4 = arith.constant 0 : index
    %c0_5 = arith.constant 0 : index
    %10 = vector.load %arg2[%c0_4, %c0_5] : memref<64x128xbf16, #tpu.memory_space<vmem>>, vector<16x128xbf16>
    %cst_6 = arith.constant dense<0.000000e+00> : vector<64x128xf32>
    %11 = tpu.matmul %9, %10, %cst_6 {dimension_numbers = #tpu.dot_dimension_numbers<[1], [0], [0], [1], [0, 0, 1, 1], [], []>} : vector<64x16xbf16>, vector<16x128xbf16>, vector<64x128xf32> -> vector<64x128xf32>
    %12 = vector.extract_strided_slice %6 {offsets = [0, 1, 0], sizes = [8, 8, 16], strides = [1, 1, 1]} : vector<9x9x16xf32> to vector<8x8x16xf32>
    %13 = vector.shape_cast %12 : vector<8x8x16xf32> to vector<64x16xf32>
    %14 = arith.truncf %13 : vector<64x16xf32> to vector<64x16xbf16>
    %c16 = arith.constant 16 : index
    %c0_7 = arith.constant 0 : index
    %15 = vector.load %arg2[%c16, %c0_7] : memref<64x128xbf16, #tpu.memory_space<vmem>>, vector<16x128xbf16>
    %cst_8 = arith.constant dense<0.000000e+00> : vector<64x128xf32>
    %16 = tpu.matmul %14, %15, %cst_8 {dimension_numbers = #tpu.dot_dimension_numbers<[1], [0], [0], [1], [0, 0, 1, 1], [], []>} : vector<64x16xbf16>, vector<16x128xbf16>, vector<64x128xf32> -> vector<64x128xf32>
    %17 = arith.addf %11, %16 : vector<64x128xf32>
    %18 = vector.extract_strided_slice %6 {offsets = [1, 0, 0], sizes = [8, 8, 16], strides = [1, 1, 1]} : vector<9x9x16xf32> to vector<8x8x16xf32>
    %19 = vector.shape_cast %18 : vector<8x8x16xf32> to vector<64x16xf32>
    %20 = arith.truncf %19 : vector<64x16xf32> to vector<64x16xbf16>
    %c32 = arith.constant 32 : index
    %c0_9 = arith.constant 0 : index
    %21 = vector.load %arg2[%c32, %c0_9] : memref<64x128xbf16, #tpu.memory_space<vmem>>, vector<16x128xbf16>
    %cst_10 = arith.constant dense<0.000000e+00> : vector<64x128xf32>
    %22 = tpu.matmul %20, %21, %cst_10 {dimension_numbers = #tpu.dot_dimension_numbers<[1], [0], [0], [1], [0, 0, 1, 1], [], []>} : vector<64x16xbf16>, vector<16x128xbf16>, vector<64x128xf32> -> vector<64x128xf32>
    %23 = arith.addf %17, %22 : vector<64x128xf32>
    %24 = vector.extract_strided_slice %6 {offsets = [1, 1, 0], sizes = [8, 8, 16], strides = [1, 1, 1]} : vector<9x9x16xf32> to vector<8x8x16xf32>
    %25 = vector.shape_cast %24 : vector<8x8x16xf32> to vector<64x16xf32>
    %26 = arith.truncf %25 : vector<64x16xf32> to vector<64x16xbf16>
    %c48 = arith.constant 48 : index
    %c0_11 = arith.constant 0 : index
    %27 = vector.load %arg2[%c48, %c0_11] : memref<64x128xbf16, #tpu.memory_space<vmem>>, vector<16x128xbf16>
    %cst_12 = arith.constant dense<0.000000e+00> : vector<64x128xf32>
    %28 = tpu.matmul %26, %27, %cst_12 {dimension_numbers = #tpu.dot_dimension_numbers<[1], [0], [0], [1], [0, 0, 1, 1], [], []>} : vector<64x16xbf16>, vector<16x128xbf16>, vector<64x128xf32> -> vector<64x128xf32>
    %29 = arith.addf %23, %28 : vector<64x128xf32>
    %c0_13 = arith.constant 0 : index
    %c0_14 = arith.constant 0 : index
    %30 = vector.load %arg3[%c0_13, %c0_14] : memref<1x128xf32, #tpu.memory_space<vmem>>, vector<1x128xf32>
    %31 = vector.broadcast %30 : vector<1x128xf32> to vector<64x128xf32>
    %32 = arith.addf %29, %31 : vector<64x128xf32>
    %cst_15 = arith.constant 0.000000e+00 : f32
    %33 = vector.broadcast %cst_15 : f32 to vector<64x128xf32>
    %34 = arith.maximumf %32, %33 : vector<64x128xf32>
    %cst_16 = arith.constant 0.000000e+00 : f32
    %35 = vector.broadcast %cst_16 : f32 to vector<10x10x128xf32>
    %c0_17 = arith.constant 0 : index
    %c0_18 = arith.constant 0 : index
    %c0_19 = arith.constant 0 : index
    %36 = vector.load %arg7[%c0_17, %c0_18, %c0_19] : memref<10x10x128xf32, #tpu.memory_space<vmem>>, vector<10x10x128xf32>
    tpu.vector_store %arg7[%c0_17, %c0_18, %c0_19], %35 {strides = array<i32>} : memref<10x10x128xf32, #tpu.memory_space<vmem>>, vector<10x10x128xf32>,
    %37 = vector.shape_cast %34 : vector<64x128xf32> to vector<8x8x128xf32>
    %c1 = arith.constant 1 : index
    %c1_20 = arith.constant 1 : index
    %c0_21 = arith.constant 0 : index
    %38 = vector.load %arg7[%c1, %c1_20, %c0_21] : memref<10x10x128xf32, #tpu.memory_space<vmem>>, vector<8x8x128xf32>
    tpu.vector_store %arg7[%c1, %c1_20, %c0_21], %37 {strides = array<i32>} : memref<10x10x128xf32, #tpu.memory_space<vmem>>, vector<8x8x128xf32>,
    %c0_22 = arith.constant 0 : index
    %c0_23 = arith.constant 0 : index
    %39 = vector.load %arg5[%c0_22, %c0_23] : memref<1x128xf32, #tpu.memory_space<vmem>>, vector<1x128xf32>
    %c0_24 = arith.constant 0 : index
    %c0_25 = arith.constant 0 : index
    %c0_26 = arith.constant 0 : index
    %40 = vector.load %arg7[%c0_24, %c0_25, %c0_26] : memref<10x10x128xf32, #tpu.memory_space<vmem>>, vector<8x8x128xf32>
    %41 = vector.shape_cast %40 : vector<8x8x128xf32> to vector<64x128xf32>
    %42 = arith.truncf %41 : vector<64x128xf32> to vector<64x128xbf16>
    %c0_27 = arith.constant 0 : index
    %c0_28 = arith.constant 0 : index
    %c0_29 = arith.constant 0 : index
    %43 = vector.load %arg4[%c0_27, %c0_28, %c0_29] : memref<4x512x128xbf16, #tpu.memory_space<vmem>>, vector<1x128x128xbf16>
    %44 = vector.shape_cast %43 : vector<1x128x128xbf16> to vector<128x128xbf16>
    %cst_30 = arith.constant dense<0.000000e+00> : vector<64x128xf32>
    %45 = tpu.matmul %42, %44, %cst_30 {dimension_numbers = #tpu.dot_dimension_numbers<[1], [0], [0], [1], [0, 0, 1, 1], [], []>} : vector<64x128xbf16>, vector<128x128xbf16>, vector<64x128xf32> -> vector<64x128xf32>
    %c0_31 = arith.constant 0 : index
    %c1_32 = arith.constant 1 : index
    %c0_33 = arith.constant 0 : index
    %46 = vector.load %arg7[%c0_31, %c1_32, %c0_33] : memref<10x10x128xf32, #tpu.memory_space<vmem>>, vector<8x8x128xf32>
    %47 = vector.shape_cast %46 : vector<8x8x128xf32> to vector<64x128xf32>
    %48 = arith.truncf %47 : vector<64x128xf32> to vector<64x128xbf16>
    %c0_34 = arith.constant 0 : index
    %c128 = arith.constant 128 : index
    %c0_35 = arith.constant 0 : index
    %49 = vector.load %arg4[%c0_34, %c128, %c0_35] : memref<4x512x128xbf16, #tpu.memory_space<vmem>>, vector<1x128x128xbf16>
    %50 = vector.shape_cast %49 : vector<1x128x128xbf16> to vector<128x128xbf16>
    %cst_36 = arith.constant dense<0.000000e+00> : vector<64x128xf32>
    %51 = tpu.matmul %48, %50, %cst_36 {dimension_numbers = #tpu.dot_dimension_numbers<[1], [0], [0], [1], [0, 0, 1, 1], [], []>} : vector<64x128xbf16>, vector<128x128xbf16>, vector<64x128xf32> -> vector<64x128xf32>
    %52 = arith.addf %45, %51 : vector<64x128xf32>
    %c1_37 = arith.constant 1 : index
    %c0_38 = arith.constant 0 : index
    %c0_39 = arith.constant 0 : index
    %53 = vector.load %arg7[%c1_37, %c0_38, %c0_39] : memref<10x10x128xf32, #tpu.memory_space<vmem>>, vector<8x8x128xf32>
    %54 = vector.shape_cast %53 : vector<8x8x128xf32> to vector<64x128xf32>
    %55 = arith.truncf %54 : vector<64x128xf32> to vector<64x128xbf16>
    %c0_40 = arith.constant 0 : index
    %c256 = arith.constant 256 : index
    %c0_41 = arith.constant 0 : index
    %56 = vector.load %arg4[%c0_40, %c256, %c0_41] : memref<4x512x128xbf16, #tpu.memory_space<vmem>>, vector<1x128x128xbf16>
    %57 = vector.shape_cast %56 : vector<1x128x128xbf16> to vector<128x128xbf16>
    %cst_42 = arith.constant dense<0.000000e+00> : vector<64x128xf32>
    %58 = tpu.matmul %55, %57, %cst_42 {dimension_numbers = #tpu.dot_dimension_numbers<[1], [0], [0], [1], [0, 0, 1, 1], [], []>} : vector<64x128xbf16>, vector<128x128xbf16>, vector<64x128xf32> -> vector<64x128xf32>
    %59 = arith.addf %52, %58 : vector<64x128xf32>
    %c1_43 = arith.constant 1 : index
    %c1_44 = arith.constant 1 : index
    %c0_45 = arith.constant 0 : index
    %60 = vector.load %arg7[%c1_43, %c1_44, %c0_45] : memref<10x10x128xf32, #tpu.memory_space<vmem>>, vector<8x8x128xf32>
    %61 = vector.shape_cast %60 : vector<8x8x128xf32> to vector<64x128xf32>
    %62 = arith.truncf %61 : vector<64x128xf32> to vector<64x128xbf16>
    %c0_46 = arith.constant 0 : index
    %c384 = arith.constant 384 : index
    %c0_47 = arith.constant 0 : index
    %63 = vector.load %arg4[%c0_46, %c384, %c0_47] : memref<4x512x128xbf16, #tpu.memory_space<vmem>>, vector<1x128x128xbf16>
    %64 = vector.shape_cast %63 : vector<1x128x128xbf16> to vector<128x128xbf16>
    %cst_48 = arith.constant dense<0.000000e+00> : vector<64x128xf32>
    %65 = tpu.matmul %62, %64, %cst_48 {dimension_numbers = #tpu.dot_dimension_numbers<[1], [0], [0], [1], [0, 0, 1, 1], [], []>} : vector<64x128xbf16>, vector<128x128xbf16>, vector<64x128xf32> -> vector<64x128xf32>
    %66 = arith.addf %59, %65 : vector<64x128xf32>
    %67 = vector.broadcast %39 : vector<1x128xf32> to vector<64x128xf32>
    %68 = arith.addf %66, %67 : vector<64x128xf32>
    %69 = vector.shape_cast %68 : vector<64x128xf32> to vector<8x8x128xf32>
    %70 = vector.extract_strided_slice %69 {offsets = [0, 0, 0], sizes = [8, 8, 4], strides = [1, 1, 1]} : vector<8x8x128xf32> to vector<8x8x4xf32>
    %c0_49 = arith.constant 0 : index
    %c0_50 = arith.constant 0 : index
    %c0_51 = arith.constant 0 : index
    %c0_52 = arith.constant 0 : index
    %c0_53 = arith.constant 0 : index
    %71 = vector.load %arg6[%c0_49, %c0_50, %c0_51, %c0_52, %c0_53] : memref<1x4x8x8x8xf32, #tpu.memory_space<vmem>>, vector<1x1x8x8x4xf32>
    %72 = vector.shape_cast %71 : vector<1x1x8x8x4xf32> to vector<8x8x4xf32>
    %73 = vector.shape_cast %70 : vector<8x8x4xf32> to vector<1x1x8x8x4xf32>
    tpu.vector_store %arg6[%c0_49, %c0_50, %c0_51, %c0_52, %c0_53], %73 {strides = array<i32>} : memref<1x4x8x8x8xf32, #tpu.memory_space<vmem>>, vector<1x1x8x8x4xf32>,
    %74 = vector.extract_strided_slice %1 {offsets = [0, 0, 12], sizes = [8, 8, 4], strides = [1, 1, 1]} : vector<9x9x16xf32> to vector<8x8x4xf32>
    %c0_54 = arith.constant 0 : index
    %c0_55 = arith.constant 0 : index
    %c0_56 = arith.constant 0 : index
    %c0_57 = arith.constant 0 : index
    %c4 = arith.constant 4 : index
    %75 = vector.load %arg6[%c0_54, %c0_55, %c0_56, %c0_57, %c4] : memref<1x4x8x8x8xf32, #tpu.memory_space<vmem>>, vector<1x1x8x8x4xf32>
    %76 = vector.shape_cast %75 : vector<1x1x8x8x4xf32> to vector<8x8x4xf32>
    %77 = vector.shape_cast %74 : vector<8x8x4xf32> to vector<1x1x8x8x4xf32>
    tpu.vector_store %arg6[%c0_54, %c0_55, %c0_56, %c0_57, %c4], %77 {strides = array<i32>} : memref<1x4x8x8x8xf32, #tpu.memory_space<vmem>>, vector<1x1x8x8x4xf32>,
    %c0_58 = arith.constant 0 : index
    %c1_59 = arith.constant 1 : index
    %c0_60 = arith.constant 0 : index
    %78 = vector.load %arg7[%c0_58, %c1_59, %c0_60] : memref<10x10x128xf32, #tpu.memory_space<vmem>>, vector<8x8x128xf32>
    %79 = vector.shape_cast %78 : vector<8x8x128xf32> to vector<64x128xf32>
    %80 = arith.truncf %79 : vector<64x128xf32> to vector<64x128xbf16>
    %c1_61 = arith.constant 1 : index
    %c0_62 = arith.constant 0 : index
    %c0_63 = arith.constant 0 : index
    %81 = vector.load %arg4[%c1_61, %c0_62, %c0_63] : memref<4x512x128xbf16, #tpu.memory_space<vmem>>, vector<1x128x128xbf16>
    %82 = vector.shape_cast %81 : vector<1x128x128xbf16> to vector<128x128xbf16>
    %cst_64 = arith.constant dense<0.000000e+00> : vector<64x128xf32>
    %83 = tpu.matmul %80, %82, %cst_64 {dimension_numbers = #tpu.dot_dimension_numbers<[1], [0], [0], [1], [0, 0, 1, 1], [], []>} : vector<64x128xbf16>, vector<128x128xbf16>, vector<64x128xf32> -> vector<64x128xf32>
    %c0_65 = arith.constant 0 : index
    %c2 = arith.constant 2 : index
    %c0_66 = arith.constant 0 : index
    %84 = vector.load %arg7[%c0_65, %c2, %c0_66] : memref<10x10x128xf32, #tpu.memory_space<vmem>>, vector<8x8x128xf32>
    %85 = vector.shape_cast %84 : vector<8x8x128xf32> to vector<64x128xf32>
    %86 = arith.truncf %85 : vector<64x128xf32> to vector<64x128xbf16>
    %c1_67 = arith.constant 1 : index
    %c128_68 = arith.constant 128 : index
    %c0_69 = arith.constant 0 : index
    %87 = vector.load %arg4[%c1_67, %c128_68, %c0_69] : memref<4x512x128xbf16, #tpu.memory_space<vmem>>, vector<1x128x128xbf16>
    %88 = vector.shape_cast %87 : vector<1x128x128xbf16> to vector<128x128xbf16>
    %cst_70 = arith.constant dense<0.000000e+00> : vector<64x128xf32>
    %89 = tpu.matmul %86, %88, %cst_70 {dimension_numbers = #tpu.dot_dimension_numbers<[1], [0], [0], [1], [0, 0, 1, 1], [], []>} : vector<64x128xbf16>, vector<128x128xbf16>, vector<64x128xf32> -> vector<64x128xf32>
    %90 = arith.addf %83, %89 : vector<64x128xf32>
    %c1_71 = arith.constant 1 : index
    %c1_72 = arith.constant 1 : index
    %c0_73 = arith.constant 0 : index
    %91 = vector.load %arg7[%c1_71, %c1_72, %c0_73] : memref<10x10x128xf32, #tpu.memory_space<vmem>>, vector<8x8x128xf32>
    %92 = vector.shape_cast %91 : vector<8x8x128xf32> to vector<64x128xf32>
    %93 = arith.truncf %92 : vector<64x128xf32> to vector<64x128xbf16>
    %c1_74 = arith.constant 1 : index
    %c256_75 = arith.constant 256 : index
    %c0_76 = arith.constant 0 : index
    %94 = vector.load %arg4[%c1_74, %c256_75, %c0_76] : memref<4x512x128xbf16, #tpu.memory_space<vmem>>, vector<1x128x128xbf16>
    %95 = vector.shape_cast %94 : vector<1x128x128xbf16> to vector<128x128xbf16>
    %cst_77 = arith.constant dense<0.000000e+00> : vector<64x128xf32>
    %96 = tpu.matmul %93, %95, %cst_77 {dimension_numbers = #tpu.dot_dimension_numbers<[1], [0], [0], [1], [0, 0, 1, 1], [], []>} : vector<64x128xbf16>, vector<128x128xbf16>, vector<64x128xf32> -> vector<64x128xf32>
    %97 = arith.addf %90, %96 : vector<64x128xf32>
    %c1_78 = arith.constant 1 : index
    %c2_79 = arith.constant 2 : index
    %c0_80 = arith.constant 0 : index
    %98 = vector.load %arg7[%c1_78, %c2_79, %c0_80] : memref<10x10x128xf32, #tpu.memory_space<vmem>>, vector<8x8x128xf32>
    %99 = vector.shape_cast %98 : vector<8x8x128xf32> to vector<64x128xf32>
    %100 = arith.truncf %99 : vector<64x128xf32> to vector<64x128xbf16>
    %c1_81 = arith.constant 1 : index
    %c384_82 = arith.constant 384 : index
    %c0_83 = arith.constant 0 : index
    %101 = vector.load %arg4[%c1_81, %c384_82, %c0_83] : memref<4x512x128xbf16, #tpu.memory_space<vmem>>, vector<1x128x128xbf16>
    %102 = vector.shape_cast %101 : vector<1x128x128xbf16> to vector<128x128xbf16>
    %cst_84 = arith.constant dense<0.000000e+00> : vector<64x128xf32>
    %103 = tpu.matmul %100, %102, %cst_84 {dimension_numbers = #tpu.dot_dimension_numbers<[1], [0], [0], [1], [0, 0, 1, 1], [], []>} : vector<64x128xbf16>, vector<128x128xbf16>, vector<64x128xf32> -> vector<64x128xf32>
    %104 = arith.addf %97, %103 : vector<64x128xf32>
    %105 = vector.broadcast %39 : vector<1x128xf32> to vector<64x128xf32>
    %106 = arith.addf %104, %105 : vector<64x128xf32>
    %107 = vector.shape_cast %106 : vector<64x128xf32> to vector<8x8x128xf32>
    %108 = vector.extract_strided_slice %107 {offsets = [0, 0, 0], sizes = [8, 8, 4], strides = [1, 1, 1]} : vector<8x8x128xf32> to vector<8x8x4xf32>
    %c0_85 = arith.constant 0 : index
    %c1_86 = arith.constant 1 : index
    %c0_87 = arith.constant 0 : index
    %c0_88 = arith.constant 0 : index
    %c0_89 = arith.constant 0 : index
    %109 = vector.load %arg6[%c0_85, %c1_86, %c0_87, %c0_88, %c0_89] : memref<1x4x8x8x8xf32, #tpu.memory_space<vmem>>, vector<1x1x8x8x4xf32>
    %110 = vector.shape_cast %109 : vector<1x1x8x8x4xf32> to vector<8x8x4xf32>
    %111 = vector.shape_cast %108 : vector<8x8x4xf32> to vector<1x1x8x8x4xf32>
    tpu.vector_store %arg6[%c0_85, %c1_86, %c0_87, %c0_88, %c0_89], %111 {strides = array<i32>} : memref<1x4x8x8x8xf32, #tpu.memory_space<vmem>>, vector<1x1x8x8x4xf32>,
    %112 = vector.extract_strided_slice %1 {offsets = [0, 1, 8], sizes = [8, 8, 4], strides = [1, 1, 1]} : vector<9x9x16xf32> to vector<8x8x4xf32>
    %c0_90 = arith.constant 0 : index
    %c1_91 = arith.constant 1 : index
    %c0_92 = arith.constant 0 : index
    %c0_93 = arith.constant 0 : index
    %c4_94 = arith.constant 4 : index
    %113 = vector.load %arg6[%c0_90, %c1_91, %c0_92, %c0_93, %c4_94] : memref<1x4x8x8x8xf32, #tpu.memory_space<vmem>>, vector<1x1x8x8x4xf32>
    %114 = vector.shape_cast %113 : vector<1x1x8x8x4xf32> to vector<8x8x4xf32>
    %115 = vector.shape_cast %112 : vector<8x8x4xf32> to vector<1x1x8x8x4xf32>
    tpu.vector_store %arg6[%c0_90, %c1_91, %c0_92, %c0_93, %c4_94], %115 {strides = array<i32>} : memref<1x4x8x8x8xf32, #tpu.memory_space<vmem>>, vector<1x1x8x8x4xf32>,
    %c1_95 = arith.constant 1 : index
    %c0_96 = arith.constant 0 : index
    %c0_97 = arith.constant 0 : index
    %116 = vector.load %arg7[%c1_95, %c0_96, %c0_97] : memref<10x10x128xf32, #tpu.memory_space<vmem>>, vector<8x8x128xf32>
    %117 = vector.shape_cast %116 : vector<8x8x128xf32> to vector<64x128xf32>
    %118 = arith.truncf %117 : vector<64x128xf32> to vector<64x128xbf16>
    %c2_98 = arith.constant 2 : index
    %c0_99 = arith.constant 0 : index
    %c0_100 = arith.constant 0 : index
    %119 = vector.load %arg4[%c2_98, %c0_99, %c0_100] : memref<4x512x128xbf16, #tpu.memory_space<vmem>>, vector<1x128x128xbf16>
    %120 = vector.shape_cast %119 : vector<1x128x128xbf16> to vector<128x128xbf16>
    %cst_101 = arith.constant dense<0.000000e+00> : vector<64x128xf32>
    %121 = tpu.matmul %118, %120, %cst_101 {dimension_numbers = #tpu.dot_dimension_numbers<[1], [0], [0], [1], [0, 0, 1, 1], [], []>} : vector<64x128xbf16>, vector<128x128xbf16>, vector<64x128xf32> -> vector<64x128xf32>
    %c1_102 = arith.constant 1 : index
    %c1_103 = arith.constant 1 : index
    %c0_104 = arith.constant 0 : index
    %122 = vector.load %arg7[%c1_102, %c1_103, %c0_104] : memref<10x10x128xf32, #tpu.memory_space<vmem>>, vector<8x8x128xf32>
    %123 = vector.shape_cast %122 : vector<8x8x128xf32> to vector<64x128xf32>
    %124 = arith.truncf %123 : vector<64x128xf32> to vector<64x128xbf16>
    %c2_105 = arith.constant 2 : index
    %c128_106 = arith.constant 128 : index
    %c0_107 = arith.constant 0 : index
    %125 = vector.load %arg4[%c2_105, %c128_106, %c0_107] : memref<4x512x128xbf16, #tpu.memory_space<vmem>>, vector<1x128x128xbf16>
    %126 = vector.shape_cast %125 : vector<1x128x128xbf16> to vector<128x128xbf16>
    %cst_108 = arith.constant dense<0.000000e+00> : vector<64x128xf32>
    %127 = tpu.matmul %124, %126, %cst_108 {dimension_numbers = #tpu.dot_dimension_numbers<[1], [0], [0], [1], [0, 0, 1, 1], [], []>} : vector<64x128xbf16>, vector<128x128xbf16>, vector<64x128xf32> -> vector<64x128xf32>
    %128 = arith.addf %121, %127 : vector<64x128xf32>
    %c2_109 = arith.constant 2 : index
    %c0_110 = arith.constant 0 : index
    %c0_111 = arith.constant 0 : index
    %129 = vector.load %arg7[%c2_109, %c0_110, %c0_111] : memref<10x10x128xf32, #tpu.memory_space<vmem>>, vector<8x8x128xf32>
    %130 = vector.shape_cast %129 : vector<8x8x128xf32> to vector<64x128xf32>
    %131 = arith.truncf %130 : vector<64x128xf32> to vector<64x128xbf16>
    %c2_112 = arith.constant 2 : index
    %c256_113 = arith.constant 256 : index
    %c0_114 = arith.constant 0 : index
    %132 = vector.load %arg4[%c2_112, %c256_113, %c0_114] : memref<4x512x128xbf16, #tpu.memory_space<vmem>>, vector<1x128x128xbf16>
    %133 = vector.shape_cast %132 : vector<1x128x128xbf16> to vector<128x128xbf16>
    %cst_115 = arith.constant dense<0.000000e+00> : vector<64x128xf32>
    %134 = tpu.matmul %131, %133, %cst_115 {dimension_numbers = #tpu.dot_dimension_numbers<[1], [0], [0], [1], [0, 0, 1, 1], [], []>} : vector<64x128xbf16>, vector<128x128xbf16>, vector<64x128xf32> -> vector<64x128xf32>
    %135 = arith.addf %128, %134 : vector<64x128xf32>
    %c2_116 = arith.constant 2 : index
    %c1_117 = arith.constant 1 : index
    %c0_118 = arith.constant 0 : index
    %136 = vector.load %arg7[%c2_116, %c1_117, %c0_118] : memref<10x10x128xf32, #tpu.memory_space<vmem>>, vector<8x8x128xf32>
    %137 = vector.shape_cast %136 : vector<8x8x128xf32> to vector<64x128xf32>
    %138 = arith.truncf %137 : vector<64x128xf32> to vector<64x128xbf16>
    %c2_119 = arith.constant 2 : index
    %c384_120 = arith.constant 384 : index
    %c0_121 = arith.constant 0 : index
    %139 = vector.load %arg4[%c2_119, %c384_120, %c0_121] : memref<4x512x128xbf16, #tpu.memory_space<vmem>>, vector<1x128x128xbf16>
    %140 = vector.shape_cast %139 : vector<1x128x128xbf16> to vector<128x128xbf16>
    %cst_122 = arith.constant dense<0.000000e+00> : vector<64x128xf32>
    %141 = tpu.matmul %138, %140, %cst_122 {dimension_numbers = #tpu.dot_dimension_numbers<[1], [0], [0], [1], [0, 0, 1, 1], [], []>} : vector<64x128xbf16>, vector<128x128xbf16>, vector<64x128xf32> -> vector<64x128xf32>
    %142 = arith.addf %135, %141 : vector<64x128xf32>
    %143 = vector.broadcast %39 : vector<1x128xf32> to vector<64x128xf32>
    %144 = arith.addf %142, %143 : vector<64x128xf32>
    %145 = vector.shape_cast %144 : vector<64x128xf32> to vector<8x8x128xf32>
    %146 = vector.extract_strided_slice %145 {offsets = [0, 0, 0], sizes = [8, 8, 4], strides = [1, 1, 1]} : vector<8x8x128xf32> to vector<8x8x4xf32>
    %c0_123 = arith.constant 0 : index
    %c2_124 = arith.constant 2 : index
    %c0_125 = arith.constant 0 : index
    %c0_126 = arith.constant 0 : index
    %c0_127 = arith.constant 0 : index
    %147 = vector.load %arg6[%c0_123, %c2_124, %c0_125, %c0_126, %c0_127] : memref<1x4x8x8x8xf32, #tpu.memory_space<vmem>>, vector<1x1x8x8x4xf32>
    %148 = vector.shape_cast %147 : vector<1x1x8x8x4xf32> to vector<8x8x4xf32>
    %149 = vector.shape_cast %146 : vector<8x8x4xf32> to vector<1x1x8x8x4xf32>
    tpu.vector_store %arg6[%c0_123, %c2_124, %c0_125, %c0_126, %c0_127], %149 {strides = array<i32>} : memref<1x4x8x8x8xf32, #tpu.memory_space<vmem>>, vector<1x1x8x8x4xf32>,
    %150 = vector.extract_strided_slice %1 {offsets = [1, 0, 4], sizes = [8, 8, 4], strides = [1, 1, 1]} : vector<9x9x16xf32> to vector<8x8x4xf32>
    %c0_128 = arith.constant 0 : index
    %c2_129 = arith.constant 2 : index
    %c0_130 = arith.constant 0 : index
    %c0_131 = arith.constant 0 : index
    %c4_132 = arith.constant 4 : index
    %151 = vector.load %arg6[%c0_128, %c2_129, %c0_130, %c0_131, %c4_132] : memref<1x4x8x8x8xf32, #tpu.memory_space<vmem>>, vector<1x1x8x8x4xf32>
    %152 = vector.shape_cast %151 : vector<1x1x8x8x4xf32> to vector<8x8x4xf32>
    %153 = vector.shape_cast %150 : vector<8x8x4xf32> to vector<1x1x8x8x4xf32>
    tpu.vector_store %arg6[%c0_128, %c2_129, %c0_130, %c0_131, %c4_132], %153 {strides = array<i32>} : memref<1x4x8x8x8xf32, #tpu.memory_space<vmem>>, vector<1x1x8x8x4xf32>,
    %c1_133 = arith.constant 1 : index
    %c1_134 = arith.constant 1 : index
    %c0_135 = arith.constant 0 : index
    %154 = vector.load %arg7[%c1_133, %c1_134, %c0_135] : memref<10x10x128xf32, #tpu.memory_space<vmem>>, vector<8x8x128xf32>
    %155 = vector.shape_cast %154 : vector<8x8x128xf32> to vector<64x128xf32>
    %156 = arith.truncf %155 : vector<64x128xf32> to vector<64x128xbf16>
    %c3 = arith.constant 3 : index
    %c0_136 = arith.constant 0 : index
    %c0_137 = arith.constant 0 : index
    %157 = vector.load %arg4[%c3, %c0_136, %c0_137] : memref<4x512x128xbf16, #tpu.memory_space<vmem>>, vector<1x128x128xbf16>
    %158 = vector.shape_cast %157 : vector<1x128x128xbf16> to vector<128x128xbf16>
    %cst_138 = arith.constant dense<0.000000e+00> : vector<64x128xf32>
    %159 = tpu.matmul %156, %158, %cst_138 {dimension_numbers = #tpu.dot_dimension_numbers<[1], [0], [0], [1], [0, 0, 1, 1], [], []>} : vector<64x128xbf16>, vector<128x128xbf16>, vector<64x128xf32> -> vector<64x128xf32>
    %c1_139 = arith.constant 1 : index
    %c2_140 = arith.constant 2 : index
    %c0_141 = arith.constant 0 : index
    %160 = vector.load %arg7[%c1_139, %c2_140, %c0_141] : memref<10x10x128xf32, #tpu.memory_space<vmem>>, vector<8x8x128xf32>
    %161 = vector.shape_cast %160 : vector<8x8x128xf32> to vector<64x128xf32>
    %162 = arith.truncf %161 : vector<64x128xf32> to vector<64x128xbf16>
    %c3_142 = arith.constant 3 : index
    %c128_143 = arith.constant 128 : index
    %c0_144 = arith.constant 0 : index
    %163 = vector.load %arg4[%c3_142, %c128_143, %c0_144] : memref<4x512x128xbf16, #tpu.memory_space<vmem>>, vector<1x128x128xbf16>
    %164 = vector.shape_cast %163 : vector<1x128x128xbf16> to vector<128x128xbf16>
    %cst_145 = arith.constant dense<0.000000e+00> : vector<64x128xf32>
    %165 = tpu.matmul %162, %164, %cst_145 {dimension_numbers = #tpu.dot_dimension_numbers<[1], [0], [0], [1], [0, 0, 1, 1], [], []>} : vector<64x128xbf16>, vector<128x128xbf16>, vector<64x128xf32> -> vector<64x128xf32>
    %166 = arith.addf %159, %165 : vector<64x128xf32>
    %c2_146 = arith.constant 2 : index
    %c1_147 = arith.constant 1 : index
    %c0_148 = arith.constant 0 : index
    %167 = vector.load %arg7[%c2_146, %c1_147, %c0_148] : memref<10x10x128xf32, #tpu.memory_space<vmem>>, vector<8x8x128xf32>
    %168 = vector.shape_cast %167 : vector<8x8x128xf32> to vector<64x128xf32>
    %169 = arith.truncf %168 : vector<64x128xf32> to vector<64x128xbf16>
    %c3_149 = arith.constant 3 : index
    %c256_150 = arith.constant 256 : index
    %c0_151 = arith.constant 0 : index
    %170 = vector.load %arg4[%c3_149, %c256_150, %c0_151] : memref<4x512x128xbf16, #tpu.memory_space<vmem>>, vector<1x128x128xbf16>
    %171 = vector.shape_cast %170 : vector<1x128x128xbf16> to vector<128x128xbf16>
    %cst_152 = arith.constant dense<0.000000e+00> : vector<64x128xf32>
    %172 = tpu.matmul %169, %171, %cst_152 {dimension_numbers = #tpu.dot_dimension_numbers<[1], [0], [0], [1], [0, 0, 1, 1], [], []>} : vector<64x128xbf16>, vector<128x128xbf16>, vector<64x128xf32> -> vector<64x128xf32>
    %173 = arith.addf %166, %172 : vector<64x128xf32>
    %c2_153 = arith.constant 2 : index
    %c2_154 = arith.constant 2 : index
    %c0_155 = arith.constant 0 : index
    %174 = vector.load %arg7[%c2_153, %c2_154, %c0_155] : memref<10x10x128xf32, #tpu.memory_space<vmem>>, vector<8x8x128xf32>
    %175 = vector.shape_cast %174 : vector<8x8x128xf32> to vector<64x128xf32>
    %176 = arith.truncf %175 : vector<64x128xf32> to vector<64x128xbf16>
    %c3_156 = arith.constant 3 : index
    %c384_157 = arith.constant 384 : index
    %c0_158 = arith.constant 0 : index
    %177 = vector.load %arg4[%c3_156, %c384_157, %c0_158] : memref<4x512x128xbf16, #tpu.memory_space<vmem>>, vector<1x128x128xbf16>
    %178 = vector.shape_cast %177 : vector<1x128x128xbf16> to vector<128x128xbf16>
    %cst_159 = arith.constant dense<0.000000e+00> : vector<64x128xf32>
    %179 = tpu.matmul %176, %178, %cst_159 {dimension_numbers = #tpu.dot_dimension_numbers<[1], [0], [0], [1], [0, 0, 1, 1], [], []>} : vector<64x128xbf16>, vector<128x128xbf16>, vector<64x128xf32> -> vector<64x128xf32>
    %180 = arith.addf %173, %179 : vector<64x128xf32>
    %181 = vector.broadcast %39 : vector<1x128xf32> to vector<64x128xf32>
    %182 = arith.addf %180, %181 : vector<64x128xf32>
    %183 = vector.shape_cast %182 : vector<64x128xf32> to vector<8x8x128xf32>
    %184 = vector.extract_strided_slice %183 {offsets = [0, 0, 0], sizes = [8, 8, 4], strides = [1, 1, 1]} : vector<8x8x128xf32> to vector<8x8x4xf32>
    %c0_160 = arith.constant 0 : index
    %c3_161 = arith.constant 3 : index
    %c0_162 = arith.constant 0 : index
    %c0_163 = arith.constant 0 : index
    %c0_164 = arith.constant 0 : index
    %185 = vector.load %arg6[%c0_160, %c3_161, %c0_162, %c0_163, %c0_164] : memref<1x4x8x8x8xf32, #tpu.memory_space<vmem>>, vector<1x1x8x8x4xf32>
    %186 = vector.shape_cast %185 : vector<1x1x8x8x4xf32> to vector<8x8x4xf32>
    %187 = vector.shape_cast %184 : vector<8x8x4xf32> to vector<1x1x8x8x4xf32>
    tpu.vector_store %arg6[%c0_160, %c3_161, %c0_162, %c0_163, %c0_164], %187 {strides = array<i32>} : memref<1x4x8x8x8xf32, #tpu.memory_space<vmem>>, vector<1x1x8x8x4xf32>,
    %188 = vector.extract_strided_slice %1 {offsets = [1, 1, 0], sizes = [8, 8, 4], strides = [1, 1, 1]} : vector<9x9x16xf32> to vector<8x8x4xf32>
    %c0_165 = arith.constant 0 : index
    %c3_166 = arith.constant 3 : index
    %c0_167 = arith.constant 0 : index
    %c0_168 = arith.constant 0 : index
    %c4_169 = arith.constant 4 : index
    %189 = vector.load %arg6[%c0_165, %c3_166, %c0_167, %c0_168, %c4_169] : memref<1x4x8x8x8xf32, #tpu.memory_space<vmem>>, vector<1x1x8x8x4xf32>
    %190 = vector.shape_cast %189 : vector<1x1x8x8x4xf32> to vector<8x8x4xf32>
    %191 = vector.shape_cast %188 : vector<8x8x4xf32> to vector<1x1x8x8x4xf32>
    tpu.vector_store %arg6[%c0_165, %c3_166, %c0_167, %c0_168, %c4_169], %191 {strides = array<i32>} : memref<1x4x8x8x8xf32, #tpu.memory_space<vmem>>, vector<1x1x8x8x4xf32>,
    return
  }
  func.func @transform_0(%arg0: i32) -> (i32, i32, i32, i32) {
    %c0_i32 = arith.constant 0 : i32
    %c0_i32_0 = arith.constant 0 : i32
    %c0_i32_1 = arith.constant 0 : i32
    %c0_i32_2 = arith.constant 0 : i32
    return %arg0, %c0_i32, %c0_i32_0, %c0_i32_1 : i32, i32, i32, i32
  }
  func.func @transform_1(%arg0: i32) -> (i32, i32) {
    %c0_i32 = arith.constant 0 : i32
    %c0_i32_0 = arith.constant 0 : i32
    %c0_i32_1 = arith.constant 0 : i32
    return %c0_i32, %c0_i32_0 : i32, i32
  }
  func.func @transform_2(%arg0: i32) -> (i32, i32) {
    %c0_i32 = arith.constant 0 : i32
    %c0_i32_0 = arith.constant 0 : i32
    %c0_i32_1 = arith.constant 0 : i32
    return %c0_i32, %c0_i32_0 : i32, i32
  }
  func.func @transform_3(%arg0: i32) -> (i32, i32, i32) {
    %c0_i32 = arith.constant 0 : i32
    %c0_i32_0 = arith.constant 0 : i32
    %c0_i32_1 = arith.constant 0 : i32
    %c0_i32_2 = arith.constant 0 : i32
    return %c0_i32, %c0_i32_0, %c0_i32_1 : i32, i32, i32
  }
  func.func @transform_4(%arg0: i32) -> (i32, i32) {
    %c0_i32 = arith.constant 0 : i32
    %c0_i32_0 = arith.constant 0 : i32
    %c0_i32_1 = arith.constant 0 : i32
    return %c0_i32, %c0_i32_0 : i32, i32
  }
  func.func @transform_5(%arg0: i32) -> (i32, i32, i32, i32, i32) {
    %c0_i32 = arith.constant 0 : i32
    %c0_i32_0 = arith.constant 0 : i32
    %c0_i32_1 = arith.constant 0 : i32
    %c0_i32_2 = arith.constant 0 : i32
    %c0_i32_3 = arith.constant 0 : i32
    return %arg0, %c0_i32, %c0_i32_0, %c0_i32_1, %c0_i32_2 : i32, i32, i32, i32, i32
  }
}

</mosaic_0001>

<llo_original>
// kernel: unet_innermost_forward.1
$region0: #{unet_innermost_forward.1}
  #allocation0 [shape = 'u32[]', space=smem, size = 0x4, offset = 0x4, fixed_abs, tag = 'smem constant byte address 0x4 - core index']
  #allocation1 [shape = 'u32[144,128]{1,0:T(1,128)}', space=vmem, size = 0x12000, scoped, tag = 'internal scratch']
  #allocation2 [shape = 'f32[10,10,128]{2,1,0:T(8,128)}', space=vmem, size = 0x14000, scoped, tag = 'scratch operand']
  %s0 = inlined_call_operand.vmem [shape: f32[2,9,9,16], index: 0, kind: input, shape index: {}]
  %s1 = inlined_call_operand.vmem [shape: bf16[64,128], index: 1, kind: input, shape index: {}]
  %s2 = inlined_call_operand.vmem [shape: f32[1,128], index: 2, kind: input, shape index: {}]
  %s3 = inlined_call_operand.vmem [shape: bf16[4,512,128], index: 3, kind: input, shape index: {}]
  %s4 = inlined_call_operand.vmem [shape: f32[1,128], index: 4, kind: input, shape index: {}]
  %s5 = inlined_call_operand.vmem [shape: f32[2,4,8,8,8], index: 5, kind: output, shape index: {}]
  %s6 = sld [smem:[#allocation0]]
  $region53: #{unet_innermost_forward.1} parent=0
    _
  %s8 = ssub.s32 1, %s6
  %s9 = scalar_select 0, %s8, %s6
  loop: start=0, step=1, limit=4
  $region2: #{unet_innermost_forward.1} parent=0 // loop_pre_header
    _
  $region3: #{unet_innermost_forward.1} parent=0 // loop_header
    %s11 = sphi 0, %s15
    %p12 = scmp.ge.s32.totalorder %s11, 4
    %s21 = sphi 0, %s23
    %s24 = sphi 0, %s21
    %s25 = sphi 0, %s24
    %s41 = sphi 0, %s25
    %s45 = sphi 0, %s45
    %s47 = sphi 0, %s45
    %s48 = sphi 0, %s47
    %s62 = sphi 0, %s48
    %s66 = sphi 0, %s66
    %s68 = sphi 0, %s66
    %s69 = sphi 0, %s68
    %s83 = sphi 0, %s69
    %s87 = sphi 0, %s87
    %s89 = sphi 0, %s87
    %s90 = sphi 0, %s89
    %s104 = sphi 0, %s90
    %s108 = sphi 0, %s108
    %s110 = sphi 0, %s108
    %s111 = sphi 0, %s110
    %s125 = sphi 0, %s111
    %s131 = sphi 0, %s133
    %s134 = sphi 0, %s131
    %s135 = sphi 0, %s134
    %s151 = sphi 0, %s135
  $region4: #{unet_innermost_forward.1} parent=0 // loop_header_branch
    %14 = sbr.rel (%p12) target = $region8
  $region5: #{unet_innermost_forward.1} parent=0 // loop_body
    %s16 = ssub.s32 %s11, 1
    %s17 = ssub.s32 %s11, 2
    %s18 = sadd.s32 %s11, 1
    %s19 = ssub.s32 %s11, %s18
    %p20 = scmp.eq.s32.totalorder %s19, 0
    %s22 = sadd.s32 %s21, 1
    %s23 = scalar_select %p20, %s21, %s22
    %p26 = pneg %p20
    %p27 = scmp.eq.s32.totalorder %s11, 1
    %p28 = por %p26, %p27
    %p29 = scmp.ne.s32.totalorder %s21, %s24
    %p30 = scmp.eq.s32.totalorder %s11, 0
    %p31 = por %p29, %p30
    %p32 = scmp.ne.s32.totalorder %s21, %s24
    %p33 = scmp.eq.s32.totalorder %s16, 1
    %p34 = por %p32, %p33
    %p35 = scmp.ne.s32.totalorder %s24, %s25
    %p36 = scmp.eq.s32.totalorder %s16, 0
    %p37 = por %p35, %p36
    %p38 = scmp.ne.s32.totalorder %s24, %s25
    %p39 = scmp.eq.s32.totalorder %s17, 1
    %p40 = por %p38, %p39
    %p42 = scmp.ne.s32.totalorder %s25, %s41
    %p43 = scmp.eq.s32.totalorder %s17, 0
    %p44 = por %p42, %p43
    %s46 = sadd.s32 %s45, 1
    %p49 = scmp.eq.s32.totalorder %s11, 1
    %p50 = scmp.ne.s32.totalorder %s45, %s47
    %p51 = scmp.eq.s32.totalorder %s11, 0
    %p52 = por %p50, %p51
    %p53 = scmp.ne.s32.totalorder %s45, %s47
    %p54 = scmp.eq.s32.totalorder %s16, 1
    %p55 = por %p53, %p54
    %p56 = scmp.ne.s32.totalorder %s47, %s48
    %p57 = scmp.eq.s32.totalorder %s16, 0
    %p58 = por %p56, %p57
    %p59 = scmp.ne.s32.totalorder %s47, %s48
    %p60 = scmp.eq.s32.totalorder %s17, 1
    %p61 = por %p59, %p60
    %p63 = scmp.ne.s32.totalorder %s48, %s62
    %p64 = scmp.eq.s32.totalorder %s17, 0
    %p65 = por %p63, %p64
    %s67 = sadd.s32 %s66, 1
    %p70 = scmp.eq.s32.totalorder %s11, 1
    %p71 = scmp.ne.s32.totalorder %s66, %s68
    %p72 = scmp.eq.s32.totalorder %s11, 0
    %p73 = por %p71, %p72
    %p74 = scmp.ne.s32.totalorder %s66, %s68
    %p75 = scmp.eq.s32.totalorder %s16, 1
    %p76 = por %p74, %p75
    %p77 = scmp.ne.s32.totalorder %s68, %s69
    %p78 = scmp.eq.s32.totalorder %s16, 0
    %p79 = por %p77, %p78
    %p80 = scmp.ne.s32.totalorder %s68, %s69
    %p81 = scmp.eq.s32.totalorder %s17, 1
    %p82 = por %p80, %p81
    %p84 = scmp.ne.s32.totalorder %s69, %s83
    %p85 = scmp.eq.s32.totalorder %s17, 0
    %p86 = por %p84, %p85
    %s88 = sadd.s32 %s87, 1
    %p91 = scmp.eq.s32.totalorder %s11, 1
    %p92 = scmp.ne.s32.totalorder %s87, %s89
    %p93 = scmp.eq.s32.totalorder %s11, 0
    %p94 = por %p92, %p93
    %p95 = scmp.ne.s32.totalorder %s87, %s89
    %p96 = scmp.eq.s32.totalorder %s16, 1
    %p97 = por %p95, %p96
    %p98 = scmp.ne.s32.totalorder %s89, %s90
    %p99 = scmp.eq.s32.totalorder %s16, 0
    %p100 = por %p98, %p99
    %p101 = scmp.ne.s32.totalorder %s89, %s90
    %p102 = scmp.eq.s32.totalorder %s17, 1
    %p103 = por %p101, %p102
    %p105 = scmp.ne.s32.totalorder %s90, %s104
    %p106 = scmp.eq.s32.totalorder %s17, 0
    %p107 = por %p105, %p106
    %s109 = sadd.s32 %s108, 1
    %p112 = scmp.eq.s32.totalorder %s11, 1
    %p113 = scmp.ne.s32.totalorder %s108, %s110
    %p114 = scmp.eq.s32.totalorder %s11, 0
    %p115 = por %p113, %p114
    %p116 = scmp.ne.s32.totalorder %s108, %s110
    %p117 = scmp.eq.s32.totalorder %s16, 1
    %p118 = por %p116, %p117
    %p119 = scmp.ne.s32.totalorder %s110, %s111
    %p120 = scmp.eq.s32.totalorder %s16, 0
    %p121 = por %p119, %p120
    %p122 = scmp.ne.s32.totalorder %s110, %s111
    %p123 = scmp.eq.s32.totalorder %s17, 1
    %p124 = por %p122, %p123
    %p126 = scmp.ne.s32.totalorder %s111, %s125
    %p127 = scmp.eq.s32.totalorder %s17, 0
    %p128 = por %p126, %p127
    %s129 = ssub.s32 %s11, %s18
    %p130 = scmp.eq.s32.totalorder %s129, 0
    %s132 = sadd.s32 %s131, 1
    %s133 = scalar_select %p130, %s131, %s132
    %p136 = pneg %p130
    %p137 = scmp.eq.s32.totalorder %s11, 1
    %p138 = por %p136, %p137
    %p139 = scmp.ne.s32.totalorder %s131, %s134
    %p140 = scmp.eq.s32.totalorder %s11, 0
    %p141 = por %p139, %p140
    %p142 = scmp.ne.s32.totalorder %s131, %s134
    %p143 = scmp.eq.s32.totalorder %s16, 1
    %p144 = por %p142, %p143
    %p145 = scmp.ne.s32.totalorder %s134, %s135
    %p146 = scmp.eq.s32.totalorder %s16, 0
    %p147 = por %p145, %p146
    %p148 = scmp.ne.s32.totalorder %s134, %s135
    %p149 = scmp.eq.s32.totalorder %s17, 1
    %p150 = por %p148, %p149
    %p152 = scmp.ne.s32.totalorder %s135, %s151
    %p153 = scmp.eq.s32.totalorder %s17, 0
    %p154 = por %p152, %p153
    %p155 = scmp.le.s32.totalorder 1, %s11
    %p156 = scmp.lt.s32.totalorder %s11, 3
    %p157 = pnand %p155, %p156
    %p158 = pneg %p157
    // Predicated region
    $region9: #{unet_innermost_forward.1} parent=5 // pred_check
      _
    $region10: #{unet_innermost_forward.1} parent=5 // pred_check_branch
      %160 = sbr.rel (%p157) target = $region12
    $region11: #{unet_innermost_forward.1} parent=5 // pred_region
      %s161 = ssub.s32 %s11, 1
      // Predicated region
      $region13: #{unet_innermost_forward.1} parent=11 // pred_check
        %p162 = pneg %p58
      $region14: #{unet_innermost_forward.1} parent=11 // pred_check_branch
        %164 = sbr.rel (%p162) target = $region16
      $region15: #{unet_innermost_forward.1} parent=11 // pred_region
        _
      $region16: #{unet_innermost_forward.1} parent=11 // pred_fallthru
        _
      // Predicated region
      $region17: #{unet_innermost_forward.1} parent=11 // pred_check
        %p165 = pneg %p79
      $region18: #{unet_innermost_forward.1} parent=11 // pred_check_branch
        %167 = sbr.rel (%p165) target = $region20
      $region19: #{unet_innermost_forward.1} parent=11 // pred_region
        _
      $region20: #{unet_innermost_forward.1} parent=11 // pred_fallthru
        _
      // Predicated region
      $region21: #{unet_innermost_forward.1} parent=11 // pred_check
        %p168 = pneg %p100
      $region22: #{unet_innermost_forward.1} parent=11 // pred_check_branch
        %170 = sbr.rel (%p168) target = $region24
      $region23: #{unet_innermost_forward.1} parent=11 // pred_region
        _
      $region24: #{unet_innermost_forward.1} parent=11 // pred_fallthru
        _
      // Predicated region
      $region25: #{unet_innermost_forward.1} parent=11 // pred_check
        %p171 = pneg %p121
      $region26: #{unet_innermost_forward.1} parent=11 // pred_check_branch
        %173 = sbr.rel (%p171) target = $region28
      $region27: #{unet_innermost_forward.1} parent=11 // pred_region
        _
      $region28: #{unet_innermost_forward.1} parent=11 // pred_fallthru
        _
    $region12: #{unet_innermost_forward.1} parent=5 // pred_fallthru
      _
    %p174 = scmp.lt.s32.totalorder %s11, 2
    // Predicated region
    $region29: #{unet_innermost_forward.1} parent=5 // pred_check
      %p175 = pneg %p174
    $region30: #{unet_innermost_forward.1} parent=5 // pred_check_branch
      %177 = sbr.rel (%p175) target = $region32
    $region31: #{unet_innermost_forward.1} parent=5 // pred_region
      // Predicated region
      $region33: #{unet_innermost_forward.1} parent=31 // pred_check
        %p178 = pneg %p31
      $region34: #{unet_innermost_forward.1} parent=31 // pred_check_branch
        %180 = sbr.rel (%p178) target = $region36
      $region35: #{unet_innermost_forward.1} parent=31 // pred_region
        %p181 = scmp.lt.s32.totalorder %s11, 1
        %s182 = scalar_select %p181, %s11, 1
        %s183 = smul.addr %s182, 18
        %s184 = smul.addr %s183, 8
        %s185 = scalar_lea.vmem %s0, %s184
      $region36: #{unet_innermost_forward.1} parent=31 // pred_fallthru
        _
    $region32: #{unet_innermost_forward.1} parent=5 // pred_fallthru
      _
    %p186 = scmp.le.s32.totalorder 1, %s11
    %p187 = scmp.lt.s32.totalorder %s11, 3
    %p188 = pnand %p186, %p187
    %p189 = pneg %p188
    // Predicated region
    $region37: #{unet_innermost_forward.1} parent=5 // pred_check
      _
    $region38: #{unet_innermost_forward.1} parent=5 // pred_check_branch
      %191 = sbr.rel (%p188) target = $region40
    $region39: #{unet_innermost_forward.1} parent=5 // pred_region
      %s192 = ssub.s32 %s11, 1
      %p193 = scmp.lt.s32.totalorder %s16, 1
      %s194 = scalar_select %p193, %s16, 1
      %s195 = smul.addr %s194, 18
      %s196 = smul.addr %s195, 8
      %s197 = scalar_lea.vmem %s0, %s196
      %p198 = pneg %p37
      %p199 = pneg %p34
      %p200 = pneg %p58
      %p201 = pneg %p55
      %p202 = pneg %p79
      %p203 = pneg %p76
      %p204 = pneg %p100
      %p205 = pneg %p97
      %p206 = pneg %p121
      %p207 = pneg %p118
      %p208 = pneg %p147
      %p209 = pneg %p144
      %p210 = scmp.lt.s32.totalorder %s16, 1
      %s211 = scalar_select %p210, %s16, 1
      %s212 = smul.addr %s211, 32
      %s213 = smul.addr %s212, 8
      %s214 = scalar_lea.vmem %s5, %s213
      %p215 = scmp.lt.s32.totalorder %s16, 1
      %s216 = scalar_select %p215, %s16, 1
      %s217 = smul.addr %s216, 18
      %s218 = smul.addr %s217, 8
      %s219 = scalar_lea.vmem %s0, %s218
      %p220 = scmp.lt.s32.totalorder %s16, 1
      %s221 = scalar_select %p220, %s16, 1
      %s222 = smul.addr %s221, 32
      %s223 = smul.addr %s222, 8
      %s224 = scalar_lea.vmem %s5, %s223
      %v226 = vld [vmem:[%s219] sm:$0xff]
      %v227 = vld [vmem:[%s219 + $0x8] sm:$0x1]
      %v228 = vld [vmem:[%s219 + $0x10] sm:$0xff]
      %v229 = vld [vmem:[%s219 + $0x18] sm:$0x1]
      %v230 = vld [vmem:[%s219 + $0x20] sm:$0xff]
      %v231 = vld [vmem:[%s219 + $0x28] sm:$0x1]
      %v232 = vld [vmem:[%s219 + $0x30] sm:$0xff]
      %v233 = vld [vmem:[%s219 + $0x38] sm:$0x1]
      %v234 = vld [vmem:[%s219 + $0x40] sm:$0xff]
      %v235 = vld [vmem:[%s219 + $0x48] sm:$0x1]
      %v236 = vld [vmem:[%s219 + $0x50] sm:$0xff]
      %v237 = vld [vmem:[%s219 + $0x58] sm:$0x1]
      %v238 = vld [vmem:[%s219 + $0x60] sm:$0xff]
      %v239 = vld [vmem:[%s219 + $0x68] sm:$0x1]
      %v240 = vld [vmem:[%s219 + $0x70] sm:$0xff]
      %v241 = vld [vmem:[%s219 + $0x78] sm:$0x1]
      %v242 = vld [vmem:[%s219 + $0x80] sm:$0xff]
      %v243 = vld [vmem:[%s219 + $0x88] sm:$0x1]
      %vm244 = vcmp.ge.f32.partialorder %v226, 0.0
      %vm245 = vcmp.ge.f32.partialorder %v227, 0.0
      %vm246 = vcmp.ge.f32.partialorder %v228, 0.0
      %vm247 = vcmp.ge.f32.partialorder %v229, 0.0
      %vm248 = vcmp.ge.f32.partialorder %v230, 0.0
      %vm249 = vcmp.ge.f32.partialorder %v231, 0.0
      %vm250 = vcmp.ge.f32.partialorder %v232, 0.0
      %vm251 = vcmp.ge.f32.partialorder %v233, 0.0
      %vm252 = vcmp.ge.f32.partialorder %v234, 0.0
      %vm253 = vcmp.ge.f32.partialorder %v235, 0.0
      %vm254 = vcmp.ge.f32.partialorder %v236, 0.0
      %vm255 = vcmp.ge.f32.partialorder %v237, 0.0
      %vm256 = vcmp.ge.f32.partialorder %v238, 0.0
      %vm257 = vcmp.ge.f32.partialorder %v239, 0.0
      %vm258 = vcmp.ge.f32.partialorder %v240, 0.0
      %vm259 = vcmp.ge.f32.partialorder %v241, 0.0
      %vm260 = vcmp.ge.f32.partialorder %v242, 0.0
      %vm261 = vcmp.ge.f32.partialorder %v243, 0.0
      %v262 = vmul.f32 %v226, 0.2
      %v263 = vmul.f32 %v227, 0.2
      %v264 = vmul.f32 %v228, 0.2
      %v265 = vmul.f32 %v229, 0.2
      %v266 = vmul.f32 %v230, 0.2
      %v267 = vmul.f32 %v231, 0.2
      %v268 = vmul.f32 %v232, 0.2
      %v269 = vmul.f32 %v233, 0.2
      %v270 = vmul.f32 %v234, 0.2
      %v271 = vmul.f32 %v235, 0.2
      %v272 = vmul.f32 %v236, 0.2
      %v273 = vmul.f32 %v237, 0.2
      %v274 = vmul.f32 %v238, 0.2
      %v275 = vmul.f32 %v239, 0.2
      %v276 = vmul.f32 %v240, 0.2
      %v277 = vmul.f32 %v241, 0.2
      %v278 = vmul.f32 %v242, 0.2
      %v279 = vmul.f32 %v243, 0.2
      %v280 = vsel %vm244, %v226, %v262
      %v281 = vsel %vm245, %v227, %v263
      %v282 = vsel %vm246, %v228, %v264
      %v283 = vsel %vm247, %v229, %v265
      %v284 = vsel %vm248, %v230, %v266
      %v285 = vsel %vm249, %v231, %v267
      %v286 = vsel %vm250, %v232, %v268
      %v287 = vsel %vm251, %v233, %v269
      %v288 = vsel %vm252, %v234, %v270
      %v289 = vsel %vm253, %v235, %v271
      %v290 = vsel %vm254, %v236, %v272
      %v291 = vsel %vm255, %v237, %v273
      %v292 = vsel %vm256, %v238, %v274
      %v293 = vsel %vm257, %v239, %v275
      %v294 = vsel %vm258, %v240, %v276
      %v295 = vsel %vm259, %v241, %v277
      %v296 = vsel %vm260, %v242, %v278
      %v297 = vsel %vm261, %v243, %v279
      %v298 = vpack.c.bf16 %v282, %v280
      %v299 = vpack.c.bf16 %v286, %v284
      %v300 = vpack.c.bf16 %v290, %v288
      %v301 = vpack.c.bf16 %v294, %v292
      %v302 = vld [vmem:[%s1] sm:$0xf]
      %v303 = vld [vmem:[%s1 + $0x4] sm:$0xf]
      %vm320 = vcmask 1046528
      %v321 = vrot.slane %v280, 1
      %v322 = vrot.slane %v281, 1
      %v323 = vsel %vm320, %v321, %v322
      %v324 = vrot.slane %v282, 1
      %v325 = vrot.slane %v283, 1
      %v326 = vsel %vm320, %v324, %v325
      %v327 = vrot.slane %v284, 1
      %v328 = vrot.slane %v285, 1
      %v329 = vsel %vm320, %v327, %v328
      %v330 = vrot.slane %v286, 1
      %v331 = vrot.slane %v287, 1
      %v332 = vsel %vm320, %v330, %v331
      %v333 = vrot.slane %v288, 1
      %v334 = vrot.slane %v289, 1
      %v335 = vsel %vm320, %v333, %v334
      %v336 = vrot.slane %v290, 1
      %v337 = vrot.slane %v291, 1
      %v338 = vsel %vm320, %v336, %v337
      %v339 = vrot.slane %v292, 1
      %v340 = vrot.slane %v293, 1
      %v341 = vsel %vm320, %v339, %v340
      %v342 = vrot.slane %v294, 1
      %v343 = vrot.slane %v295, 1
      %v344 = vsel %vm320, %v342, %v343
      %v353 = vpack.c.bf16 %v326, %v323
      %v354 = vpack.c.bf16 %v332, %v329
      %v355 = vpack.c.bf16 %v338, %v335
      %v356 = vpack.c.bf16 %v344, %v341
      %v357 = vld [vmem:[%s1 + $0x8] sm:$0xf]
      %v358 = vld [vmem:[%s1 + $0xc] sm:$0xf]
      %v361 = vunpack.c.l.b16 %v357
      %v362 = vunpack.c.l.b16 %v358
      %v363 = vpack.c.b16 %v362, %v361
      %vm365 = vcmask 130048
      %v367 = vsel %vm365, %v353, 0
      %v370 = vsel %vm365, %v354, 0
      %v373 = vsel %vm365, %v355, 0
      %v376 = vsel %vm365, %v356, 0
      %378 = vmatprep.subr.bf16.mxu0 0
      %379 = vmatpush1.bf16.msra.mxu0 0
      %380 = vmatprep.subr.bf16.mxu0 0
      %381 = vmatpush1.bf16.msra.mxu0 0
      %382 = vmatprep.subr.bf16.mxu0 0
      %383 = vmatpush1.bf16.msra.mxu0 0
      %384 = vmatprep.subr.bf16.mxu0 0
      %385 = vmatpush1.bf16.msra.mxu0 0
      %386 = vmatprep.subr.bf16.mxu0 0
      %387 = vmatpush1.bf16.msra.mxu0 0
      %388 = vmatprep.subr.bf16.mxu0 0
      %389 = vmatpush1.bf16.msra.mxu0 0
      %390 = vmatprep.subr.bf16.mxu0 0
      %391 = vmatpush1.bf16.msra.mxu0 0
      %392 = vmatprep.subr.bf16.mxu0 0
      %393 = vmatpush1.bf16.msra.mxu0 %v363
      %394 = vmatprep.subr.bf16.mxu0 0
      %395 = vmatpush2.bf16.msra.mxu0 0
      %396 = vmatprep.subr.bf16.mxu0 0
      %397 = vmatpush2.bf16.msra.mxu0 0
      %398 = vmatprep.subr.bf16.mxu0 0
      %399 = vmatpush2.bf16.msra.mxu0 0
      %400 = vmatprep.subr.bf16.mxu0 0
      %401 = vmatpush2.bf16.msra.mxu0 0
      %402 = vmatprep.subr.bf16.mxu0 0
      %403 = vmatpush2.bf16.msra.mxu0 0
      %404 = vmatprep.subr.bf16.mxu0 0
      %405 = vmatpush2.bf16.msra.mxu0 0
      %406 = vmatprep.subr.bf16.mxu0 0
      %407 = vmatpush2.bf16.msra.mxu0 0
      %408 = vmatprep.subr.bf16.mxu0 0
      %409 = vmatpush2.bf16.msra.mxu0 0
      %410 = vmatprep.mubr.bf16.mxu0 0
      %411 = vmatmul.mubr.bf16.gmra.mxu0 %v367
      %v412 = vpop.f32.mrf.mxu0
      %v413 = vadd.f32 0.0, %v412
      %v414 = vpop.f32.mrf.mxu0
      %v415 = vpop.f32.mrf.mxu0
      %v416 = vadd.f32 0.0, %v415
      %v417 = vpop.f32.mrf.mxu0
      %418 = vmatprep.mubr.bf16.mxu0 0
      %419 = vmatmul.mubr.bf16.gmra.mxu0 %v370
      %v420 = vpop.f32.mrf.mxu0
      %v421 = vadd.f32 0.0, %v420
      %v422 = vpop.f32.mrf.mxu0
      %v423 = vpop.f32.mrf.mxu0
      %v424 = vadd.f32 0.0, %v423
      %v425 = vpop.f32.mrf.mxu0
      %426 = vmatprep.mubr.bf16.mxu0 0
      %427 = vmatmul.mubr.bf16.gmra.mxu0 %v373
      %v428 = vpop.f32.mrf.mxu0
      %v429 = vadd.f32 0.0, %v428
      %v430 = vpop.f32.mrf.mxu0
      %v431 = vpop.f32.mrf.mxu0
      %v432 = vadd.f32 0.0, %v431
      %v433 = vpop.f32.mrf.mxu0
      %434 = vmatprep.mubr.bf16.mxu0 0
      %435 = vmatmul.mubr.bf16.gmra.mxu0 %v376
      %v436 = vpop.f32.mrf.mxu0
      %v437 = vadd.f32 0.0, %v436
      %v438 = vpop.f32.mrf.mxu0
      %v439 = vpop.f32.mrf.mxu0
      %v440 = vadd.f32 0.0, %v439
      %v441 = vpop.f32.mrf.mxu0
      %442 = vdwg.mxu0
      %v445 = vunpack.c.l.b16 %v302
      %v446 = vunpack.c.l.b16 %v303
      %v447 = vpack.c.b16 %v446, %v445
      %v450 = vsel %vm365, %v298, 0
      %v453 = vsel %vm365, %v299, 0
      %v456 = vsel %vm365, %v300, 0
      %v459 = vsel %vm365, %v301, 0
      %461 = vmatprep.subr.bf16.mxu0 0
      %462 = vmatpush1.bf16.msra.mxu0 0
      %463 = vmatprep.subr.bf16.mxu0 0
      %464 = vmatpush1.bf16.msra.mxu0 0
      %465 = vmatprep.subr.bf16.mxu0 0
      %466 = vmatpush1.bf16.msra.mxu0 0
      %467 = vmatprep.subr.bf16.mxu0 0
      %468 = vmatpush1.bf16.msra.mxu0 0
      %469 = vmatprep.subr.bf16.mxu0 0
      %470 = vmatpush1.bf16.msra.mxu0 0
      %471 = vmatprep.subr.bf16.mxu0 0
      %472 = vmatpush1.bf16.msra.mxu0 0
      %473 = vmatprep.subr.bf16.mxu0 0
      %474 = vmatpush1.bf16.msra.mxu0 0
      %475 = vmatprep.subr.bf16.mxu0 0
      %476 = vmatpush1.bf16.msra.mxu0 %v447
      %477 = vmatprep.subr.bf16.mxu0 0
      %478 = vmatpush2.bf16.msra.mxu0 0
      %479 = vmatprep.subr.bf16.mxu0 0
      %480 = vmatpush2.bf16.msra.mxu0 0
      %481 = vmatprep.subr.bf16.mxu0 0
      %482 = vmatpush2.bf16.msra.mxu0 0
      %483 = vmatprep.subr.bf16.mxu0 0
      %484 = vmatpush2.bf16.msra.mxu0 0
      %485 = vmatprep.subr.bf16.mxu0 0
      %486 = vmatpush2.bf16.msra.mxu0 0
      %487 = vmatprep.subr.bf16.mxu0 0
      %488 = vmatpush2.bf16.msra.mxu0 0
      %489 = vmatprep.subr.bf16.mxu0 0
      %490 = vmatpush2.bf16.msra.mxu0 0
      %491 = vmatprep.subr.bf16.mxu0 0
      %492 = vmatpush2.bf16.msra.mxu0 0
      %493 = vmatprep.mubr.bf16.mxu0 0
      %494 = vmatmul.mubr.bf16.gmra.mxu0 %v450
      %v495 = vpop.f32.mrf.mxu0
      %v496 = vadd.f32 %v413, %v495
      %v497 = vpop.f32.mrf.mxu0
      %v498 = vpop.f32.mrf.mxu0
      %v499 = vadd.f32 %v416, %v498
      %v500 = vpop.f32.mrf.mxu0
      %501 = vmatprep.mubr.bf16.mxu0 0
      %502 = vmatmul.mubr.bf16.gmra.mxu0 %v453
      %v503 = vpop.f32.mrf.mxu0
      %v504 = vadd.f32 %v421, %v503
      %v505 = vpop.f32.mrf.mxu0
      %v506 = vpop.f32.mrf.mxu0
      %v507 = vadd.f32 %v424, %v506
      %v508 = vpop.f32.mrf.mxu0
      %509 = vmatprep.mubr.bf16.mxu0 0
      %510 = vmatmul.mubr.bf16.gmra.mxu0 %v456
      %v511 = vpop.f32.mrf.mxu0
      %v512 = vadd.f32 %v429, %v511
      %v513 = vpop.f32.mrf.mxu0
      %v514 = vpop.f32.mrf.mxu0
      %v515 = vadd.f32 %v432, %v514
      %v516 = vpop.f32.mrf.mxu0
      %517 = vmatprep.mubr.bf16.mxu0 0
      %518 = vmatmul.mubr.bf16.gmra.mxu0 %v459
      %v519 = vpop.f32.mrf.mxu0
      %v520 = vadd.f32 %v437, %v519
      %v521 = vpop.f32.mrf.mxu0
      %v522 = vpop.f32.mrf.mxu0
      %v523 = vadd.f32 %v440, %v522
      %v524 = vpop.f32.mrf.mxu0
      %525 = vdwg.mxu0
      %v526 = vpack.c.bf16 %v284, %v282
      %v527 = vpack.c.bf16 %v288, %v286
      %v528 = vpack.c.bf16 %v292, %v290
      %v529 = vpack.c.bf16 %v296, %v294
      %v530 = vld [vmem:[%s1 + $0x10] sm:$0xf]
      %v531 = vld [vmem:[%s1 + $0x14] sm:$0xf]
      %v534 = vunpack.c.l.b16 %v530
      %v535 = vunpack.c.l.b16 %v531
      %v536 = vpack.c.b16 %v535, %v534
      %v539 = vsel %vm365, %v526, 0
      %v542 = vsel %vm365, %v527, 0
      %v545 = vsel %vm365, %v528, 0
      %v548 = vsel %vm365, %v529, 0
      %550 = vmatprep.subr.bf16.mxu0 0
      %551 = vmatpush1.bf16.msra.mxu0 0
      %552 = vmatprep.subr.bf16.mxu0 0
      %553 = vmatpush1.bf16.msra.mxu0 0
      %554 = vmatprep.subr.bf16.mxu0 0
      %555 = vmatpush1.bf16.msra.mxu0 0
      %556 = vmatprep.subr.bf16.mxu0 0
      %557 = vmatpush1.bf16.msra.mxu0 0
      %558 = vmatprep.subr.bf16.mxu0 0
      %559 = vmatpush1.bf16.msra.mxu0 0
      %560 = vmatprep.subr.bf16.mxu0 0
      %561 = vmatpush1.bf16.msra.mxu0 0
      %562 = vmatprep.subr.bf16.mxu0 0
      %563 = vmatpush1.bf16.msra.mxu0 0
      %564 = vmatprep.subr.bf16.mxu0 0
      %565 = vmatpush1.bf16.msra.mxu0 %v536
      %566 = vmatprep.subr.bf16.mxu0 0
      %567 = vmatpush2.bf16.msra.mxu0 0
      %568 = vmatprep.subr.bf16.mxu0 0
      %569 = vmatpush2.bf16.msra.mxu0 0
      %570 = vmatprep.subr.bf16.mxu0 0
      %571 = vmatpush2.bf16.msra.mxu0 0
      %572 = vmatprep.subr.bf16.mxu0 0
      %573 = vmatpush2.bf16.msra.mxu0 0
      %574 = vmatprep.subr.bf16.mxu0 0
      %575 = vmatpush2.bf16.msra.mxu0 0
      %576 = vmatprep.subr.bf16.mxu0 0
      %577 = vmatpush2.bf16.msra.mxu0 0
      %578 = vmatprep.subr.bf16.mxu0 0
      %579 = vmatpush2.bf16.msra.mxu0 0
      %580 = vmatprep.subr.bf16.mxu0 0
      %581 = vmatpush2.bf16.msra.mxu0 0
      %582 = vmatprep.mubr.bf16.mxu0 0
      %583 = vmatmul.mubr.bf16.gmra.mxu0 %v539
      %v584 = vpop.f32.mrf.mxu0
      %v585 = vadd.f32 0.0, %v584
      %v586 = vpop.f32.mrf.mxu0
      %v587 = vpop.f32.mrf.mxu0
      %v588 = vadd.f32 0.0, %v587
      %v589 = vpop.f32.mrf.mxu0
      %590 = vmatprep.mubr.bf16.mxu0 0
      %591 = vmatmul.mubr.bf16.gmra.mxu0 %v542
      %v592 = vpop.f32.mrf.mxu0
      %v593 = vadd.f32 0.0, %v592
      %v594 = vpop.f32.mrf.mxu0
      %v595 = vpop.f32.mrf.mxu0
      %v596 = vadd.f32 0.0, %v595
      %v597 = vpop.f32.mrf.mxu0
      %598 = vmatprep.mubr.bf16.mxu0 0
      %599 = vmatmul.mubr.bf16.gmra.mxu0 %v545
      %v600 = vpop.f32.mrf.mxu0
      %v601 = vadd.f32 0.0, %v600
      %v602 = vpop.f32.mrf.mxu0
      %v603 = vpop.f32.mrf.mxu0
      %v604 = vadd.f32 0.0, %v603
      %v605 = vpop.f32.mrf.mxu0
      %606 = vmatprep.mubr.bf16.mxu0 0
      %607 = vmatmul.mubr.bf16.gmra.mxu0 %v548
      %v608 = vpop.f32.mrf.mxu0
      %v609 = vadd.f32 0.0, %v608
      %v610 = vpop.f32.mrf.mxu0
      %v611 = vpop.f32.mrf.mxu0
      %v612 = vadd.f32 0.0, %v611
      %v613 = vpop.f32.mrf.mxu0
      %614 = vdwg.mxu0
      %v615 = vadd.f32 %v496, %v585
      %v616 = vadd.f32 %v499, %v588
      %v617 = vadd.f32 %v504, %v593
      %v618 = vadd.f32 %v507, %v596
      %v619 = vadd.f32 %v512, %v601
      %v620 = vadd.f32 %v515, %v604
      %v621 = vadd.f32 %v520, %v609
      %v622 = vadd.f32 %v523, %v612
      %v625 = vrot.slane %v296, 1
      %v626 = vrot.slane %v297, 1
      %v627 = vsel %vm320, %v625, %v626
      %v629 = vpack.c.bf16 %v329, %v326
      %v630 = vpack.c.bf16 %v335, %v332
      %v631 = vpack.c.bf16 %v341, %v338
      %v632 = vpack.c.bf16 %v627, %v344
      %v633 = vld [vmem:[%s1 + $0x18] sm:$0xf]
      %v634 = vld [vmem:[%s1 + $0x1c] sm:$0xf]
      %v637 = vunpack.c.l.b16 %v633
      %v638 = vunpack.c.l.b16 %v634
      %v639 = vpack.c.b16 %v638, %v637
      %v642 = vsel %vm365, %v629, 0
      %v645 = vsel %vm365, %v630, 0
      %v648 = vsel %vm365, %v631, 0
      %v651 = vsel %vm365, %v632, 0
      %653 = vmatprep.subr.bf16.mxu0 0
      %654 = vmatpush1.bf16.msra.mxu0 0
      %655 = vmatprep.subr.bf16.mxu0 0
      %656 = vmatpush1.bf16.msra.mxu0 0
      %657 = vmatprep.subr.bf16.mxu0 0
      %658 = vmatpush1.bf16.msra.mxu0 0
      %659 = vmatprep.subr.bf16.mxu0 0
      %660 = vmatpush1.bf16.msra.mxu0 0
      %661 = vmatprep.subr.bf16.mxu0 0
      %662 = vmatpush1.bf16.msra.mxu0 0
      %663 = vmatprep.subr.bf16.mxu0 0
      %664 = vmatpush1.bf16.msra.mxu0 0
      %665 = vmatprep.subr.bf16.mxu0 0
      %666 = vmatpush1.bf16.msra.mxu0 0
      %667 = vmatprep.subr.bf16.mxu0 0
      %668 = vmatpush1.bf16.msra.mxu0 %v639
      %669 = vmatprep.subr.bf16.mxu0 0
      %670 = vmatpush2.bf16.msra.mxu0 0
      %671 = vmatprep.subr.bf16.mxu0 0
      %672 = vmatpush2.bf16.msra.mxu0 0
      %673 = vmatprep.subr.bf16.mxu0 0
      %674 = vmatpush2.bf16.msra.mxu0 0
      %675 = vmatprep.subr.bf16.mxu0 0
      %676 = vmatpush2.bf16.msra.mxu0 0
      %677 = vmatprep.subr.bf16.mxu0 0
      %678 = vmatpush2.bf16.msra.mxu0 0
      %679 = vmatprep.subr.bf16.mxu0 0
      %680 = vmatpush2.bf16.msra.mxu0 0
      %681 = vmatprep.subr.bf16.mxu0 0
      %682 = vmatpush2.bf16.msra.mxu0 0
      %683 = vmatprep.subr.bf16.mxu0 0
      %684 = vmatpush2.bf16.msra.mxu0 0
      %685 = vmatprep.mubr.bf16.mxu0 0
      %686 = vmatmul.mubr.bf16.gmra.mxu0 %v642
      %v687 = vpop.f32.mrf.mxu0
      %v688 = vadd.f32 0.0, %v687
      %v689 = vpop.f32.mrf.mxu0
      %v690 = vpop.f32.mrf.mxu0
      %v691 = vadd.f32 0.0, %v690
      %v692 = vpop.f32.mrf.mxu0
      %693 = vmatprep.mubr.bf16.mxu0 0
      %694 = vmatmul.mubr.bf16.gmra.mxu0 %v645
      %v695 = vpop.f32.mrf.mxu0
      %v696 = vadd.f32 0.0, %v695
      %v697 = vpop.f32.mrf.mxu0
      %v698 = vpop.f32.mrf.mxu0
      %v699 = vadd.f32 0.0, %v698
      %v700 = vpop.f32.mrf.mxu0
      %701 = vmatprep.mubr.bf16.mxu0 0
      %702 = vmatmul.mubr.bf16.gmra.mxu0 %v648
      %v703 = vpop.f32.mrf.mxu0
      %v704 = vadd.f32 0.0, %v703
      %v705 = vpop.f32.mrf.mxu0
      %v706 = vpop.f32.mrf.mxu0
      %v707 = vadd.f32 0.0, %v706
      %v708 = vpop.f32.mrf.mxu0
      %709 = vmatprep.mubr.bf16.mxu0 0
      %710 = vmatmul.mubr.bf16.gmra.mxu0 %v651
      %v711 = vpop.f32.mrf.mxu0
      %v712 = vadd.f32 0.0, %v711
      %v713 = vpop.f32.mrf.mxu0
      %v714 = vpop.f32.mrf.mxu0
      %v715 = vadd.f32 0.0, %v714
      %v716 = vpop.f32.mrf.mxu0
      %717 = vdwg.mxu0
      %v718 = vadd.f32 %v615, %v688
      %v719 = vadd.f32 %v616, %v691
      %v720 = vadd.f32 %v617, %v696
      %v721 = vadd.f32 %v618, %v699
      %v722 = vadd.f32 %v619, %v704
      %v723 = vadd.f32 %v620, %v707
      %v724 = vadd.f32 %v621, %v712
      %v725 = vadd.f32 %v622, %v715
      %v726 = vld [vmem:[%s2] sm:$0x1]
      %v728 = vlaneseq
      %v729 = vshrl.u32 %v728, 7
      %v730 = vsub.s32 0, %v729
      %v731 = vrot.slane %v726, %v730
      %v733 = vadd.f32 %v718, %v731
      %v734 = vadd.f32 %v719, %v731
      %v735 = vadd.f32 %v720, %v731
      %v736 = vadd.f32 %v721, %v731
      %v737 = vadd.f32 %v722, %v731
      %v738 = vadd.f32 %v723, %v731
      %v739 = vadd.f32 %v724, %v731
      %v740 = vadd.f32 %v725, %v731
      %v741 = vmax.f32 %v733, 0.0
      %v742 = vmax.f32 %v734, 0.0
      %v743 = vmax.f32 %v735, 0.0
      %v744 = vmax.f32 %v736, 0.0
      %v745 = vmax.f32 %v737, 0.0
      %v746 = vmax.f32 %v738, 0.0
      %v747 = vmax.f32 %v739, 0.0
      %v748 = vmax.f32 %v740, 0.0
      %749 = vst [vmem:[#allocation2] sm:$0xff] 0.0
      %750 = vst [vmem:[#allocation2 + $0x8] sm:$0x3] 0.0
      %751 = vst [vmem:[#allocation2 + $0x10] sm:$0xff] 0.0
      %752 = vst [vmem:[#allocation2 + $0x18] sm:$0x3] 0.0
      %753 = vst [vmem:[#allocation2 + $0x20] sm:$0xff] 0.0
      %754 = vst [vmem:[#allocation2 + $0x28] sm:$0x3] 0.0
      %755 = vst [vmem:[#allocation2 + $0x30] sm:$0xff] 0.0
      %756 = vst [vmem:[#allocation2 + $0x38] sm:$0x3] 0.0
      %757 = vst [vmem:[#allocation2 + $0x40] sm:$0xff] 0.0
      %758 = vst [vmem:[#allocation2 + $0x48] sm:$0x3] 0.0
      %759 = vst [vmem:[#allocation2 + $0x50] sm:$0xff] 0.0
      %760 = vst [vmem:[#allocation2 + $0x58] sm:$0x3] 0.0
      %761 = vst [vmem:[#allocation2 + $0x60] sm:$0xff] 0.0
      %762 = vst [vmem:[#allocation2 + $0x68] sm:$0x3] 0.0
      %763 = vst [vmem:[#allocation2 + $0x70] sm:$0xff] 0.0
      %764 = vst [vmem:[#allocation2 + $0x78] sm:$0x3] 0.0
      %765 = vst [vmem:[#allocation2 + $0x80] sm:$0xff] 0.0
      %766 = vst [vmem:[#allocation2 + $0x88] sm:$0x3] 0.0
      %767 = vst [vmem:[#allocation2 + $0x90] sm:$0xff] 0.0
      %768 = vst [vmem:[#allocation2 + $0x98] sm:$0x3] 0.0
      %s769 = scalar_lea.vmem [#allocation2], 16
      %770 = vst [vmem:[%s769 + $0x1] sm:$0xff] %v741
      %771 = vst [vmem:[%s769 + $0x11] sm:$0xff] %v742
      %772 = vst [vmem:[%s769 + $0x21] sm:$0xff] %v743
      %773 = vst [vmem:[%s769 + $0x31] sm:$0xff] %v744
      %774 = vst [vmem:[%s769 + $0x41] sm:$0xff] %v745
      %775 = vst [vmem:[%s769 + $0x51] sm:$0xff] %v746
      %776 = vst [vmem:[%s769 + $0x61] sm:$0xff] %v747
      %777 = vst [vmem:[%s769 + $0x71] sm:$0xff] %v748
      %v778 = vld [vmem:[%s4] sm:$0x1]
      %v779 = vld [vmem:[#allocation2] sm:$0xff]
      %v780 = vld [vmem:[#allocation2 + $0x10] sm:$0xff]
      %v781 = vld [vmem:[#allocation2 + $0x20] sm:$0xff]
      %v782 = vld [vmem:[#allocation2 + $0x30] sm:$0xff]
      %v783 = vld [vmem:[#allocation2 + $0x40] sm:$0xff]
      %v784 = vld [vmem:[#allocation2 + $0x50] sm:$0xff]
      %v785 = vld [vmem:[#allocation2 + $0x60] sm:$0xff]
      %v786 = vld [vmem:[#allocation2 + $0x70] sm:$0xff]
      %v787 = vpack.c.bf16 %v780, %v779
      %v788 = vpack.c.bf16 %v782, %v781
      %v789 = vpack.c.bf16 %v784, %v783
      %v790 = vpack.c.bf16 %v786, %v785
      %v791 = vld [vmem:[%s3] sm:$0xf]
      %v792 = vld [vmem:[%s3 + $0x4] sm:$0xf]
      %v793 = vld [vmem:[%s3 + $0x8] sm:$0xf]
      %v794 = vld [vmem:[%s3 + $0xc] sm:$0xf]
      %v795 = vld [vmem:[%s3 + $0x10] sm:$0xf]
      %v796 = vld [vmem:[%s3 + $0x14] sm:$0xf]
      %v797 = vld [vmem:[%s3 + $0x18] sm:$0xf]
      %v798 = vld [vmem:[%s3 + $0x1c] sm:$0xf]
      %v799 = vld [vmem:[%s3 + $0x20] sm:$0xf]
      %v800 = vld [vmem:[%s3 + $0x24] sm:$0xf]
      %v801 = vld [vmem:[%s3 + $0x28] sm:$0xf]
      %v802 = vld [vmem:[%s3 + $0x2c] sm:$0xf]
      %v803 = vld [vmem:[%s3 + $0x30] sm:$0xf]
      %v804 = vld [vmem:[%s3 + $0x34] sm:$0xf]
      %v805 = vld [vmem:[%s3 + $0x38] sm:$0xf]
      %v806 = vld [vmem:[%s3 + $0x3c] sm:$0xf]
      %v807 = vld [vmem:[#allocation2 + $0x1] sm:$0xff]
      %v808 = vld [vmem:[#allocation2 + $0x11] sm:$0xff]
      %v809 = vld [vmem:[#allocation2 + $0x21] sm:$0xff]
      %v810 = vld [vmem:[#allocation2 + $0x31] sm:$0xff]
      %v811 = vld [vmem:[#allocation2 + $0x41] sm:$0xff]
      %v812 = vld [vmem:[#allocation2 + $0x51] sm:$0xff]
      %v813 = vld [vmem:[#allocation2 + $0x61] sm:$0xff]
      %v814 = vld [vmem:[#allocation2 + $0x71] sm:$0xff]
      %v815 = vpack.c.bf16 %v808, %v807
      %v816 = vpack.c.bf16 %v810, %v809
      %v817 = vpack.c.bf16 %v812, %v811
      %v818 = vpack.c.bf16 %v814, %v813
      %v819 = vld [vmem:[%s3 + $0x40] sm:$0xf]
      %v820 = vld [vmem:[%s3 + $0x44] sm:$0xf]
      %v821 = vld [vmem:[%s3 + $0x48] sm:$0xf]
      %v822 = vld [vmem:[%s3 + $0x4c] sm:$0xf]
      %v823 = vld [vmem:[%s3 + $0x50] sm:$0xf]
      %v824 = vld [vmem:[%s3 + $0x54] sm:$0xf]
      %v825 = vld [vmem:[%s3 + $0x58] sm:$0xf]
      %v826 = vld [vmem:[%s3 + $0x5c] sm:$0xf]
      %v827 = vld [vmem:[%s3 + $0x60] sm:$0xf]
      %v828 = vld [vmem:[%s3 + $0x64] sm:$0xf]
      %v829 = vld [vmem:[%s3 + $0x68] sm:$0xf]
      %v830 = vld [vmem:[%s3 + $0x6c] sm:$0xf]
      %v831 = vld [vmem:[%s3 + $0x70] sm:$0xf]
      %v832 = vld [vmem:[%s3 + $0x74] sm:$0xf]
      %v833 = vld [vmem:[%s3 + $0x78] sm:$0xf]
      %v834 = vld [vmem:[%s3 + $0x7c] sm:$0xf]
      %v851 = vunpack.c.l.b16 %v819
      %v852 = vunpack.c.l.b16 %v820
      %v853 = vunpack.c.l.b16 %v821
      %v854 = vunpack.c.l.b16 %v822
      %v855 = vunpack.c.l.b16 %v823
      %v856 = vunpack.c.l.b16 %v824
      %v857 = vunpack.c.l.b16 %v825
      %v858 = vunpack.c.l.b16 %v826
      %v859 = vunpack.c.l.b16 %v827
      %v860 = vunpack.c.l.b16 %v828
      %v861 = vunpack.c.l.b16 %v829
      %v862 = vunpack.c.l.b16 %v830
      %v863 = vunpack.c.l.b16 %v831
      %v864 = vunpack.c.l.b16 %v832
      %v865 = vunpack.c.l.b16 %v833
      %v866 = vunpack.c.l.b16 %v834
      %v867 = vpack.c.b16 %v852, %v851
      %v868 = vpack.c.b16 %v854, %v853
      %v869 = vpack.c.b16 %v856, %v855
      %v870 = vpack.c.b16 %v858, %v857
      %v871 = vpack.c.b16 %v860, %v859
      %v872 = vpack.c.b16 %v862, %v861
      %v873 = vpack.c.b16 %v864, %v863
      %v874 = vpack.c.b16 %v866, %v865
      %883 = vmatprep.subr.bf16.mxu0 0
      %884 = vmatpush1.bf16.msra.mxu0 %v874
      %885 = vmatprep.subr.bf16.mxu0 0
      %886 = vmatpush1.bf16.msra.mxu0 %v873
      %887 = vmatprep.subr.bf16.mxu0 0
      %888 = vmatpush1.bf16.msra.mxu0 %v872
      %889 = vmatprep.subr.bf16.mxu0 0
      %890 = vmatpush1.bf16.msra.mxu0 %v871
      %891 = vmatprep.subr.bf16.mxu0 0
      %892 = vmatpush1.bf16.msra.mxu0 %v870
      %893 = vmatprep.subr.bf16.mxu0 0
      %894 = vmatpush1.bf16.msra.mxu0 %v869
      %895 = vmatprep.subr.bf16.mxu0 0
      %896 = vmatpush1.bf16.msra.mxu0 %v868
      %897 = vmatprep.subr.bf16.mxu0 0
      %898 = vmatpush1.bf16.msra.mxu0 %v867
      %899 = vmatprep.subr.bf16.mxu0 0
      %900 = vmatpush2.bf16.msra.mxu0 0
      %901 = vmatprep.subr.bf16.mxu0 0
      %902 = vmatpush2.bf16.msra.mxu0 0
      %903 = vmatprep.subr.bf16.mxu0 0
      %904 = vmatpush2.bf16.msra.mxu0 0
      %905 = vmatprep.subr.bf16.mxu0 0
      %906 = vmatpush2.bf16.msra.mxu0 0
      %907 = vmatprep.subr.bf16.mxu0 0
      %908 = vmatpush2.bf16.msra.mxu0 0
      %909 = vmatprep.subr.bf16.mxu0 0
      %910 = vmatpush2.bf16.msra.mxu0 0
      %911 = vmatprep.subr.bf16.mxu0 0
      %912 = vmatpush2.bf16.msra.mxu0 0
      %913 = vmatprep.subr.bf16.mxu0 0
      %914 = vmatpush2.bf16.msra.mxu0 0
      %915 = vmatprep.mubr.bf16.mxu0 0
      %916 = vmatmul.mubr.bf16.gmra.mxu0 %v815
      %v917 = vpop.f32.mrf.mxu0
      %v918 = vadd.f32 0.0, %v917
      %v919 = vpop.f32.mrf.mxu0
      %v920 = vpop.f32.mrf.mxu0
      %v921 = vadd.f32 0.0, %v920
      %v922 = vpop.f32.mrf.mxu0
      %923 = vmatprep.mubr.bf16.mxu0 0
      %924 = vmatmul.mubr.bf16.gmra.mxu0 %v816
      %v925 = vpop.f32.mrf.mxu0
      %v926 = vadd.f32 0.0, %v925
      %v927 = vpop.f32.mrf.mxu0
      %v928 = vpop.f32.mrf.mxu0
      %v929 = vadd.f32 0.0, %v928
      %v930 = vpop.f32.mrf.mxu0
      %931 = vmatprep.mubr.bf16.mxu0 0
      %932 = vmatmul.mubr.bf16.gmra.mxu0 %v817
      %v933 = vpop.f32.mrf.mxu0
      %v934 = vadd.f32 0.0, %v933
      %v935 = vpop.f32.mrf.mxu0
      %v936 = vpop.f32.mrf.mxu0
      %v937 = vadd.f32 0.0, %v936
      %v938 = vpop.f32.mrf.mxu0
      %939 = vmatprep.mubr.bf16.mxu0 0
      %940 = vmatmul.mubr.bf16.gmra.mxu0 %v818
      %v941 = vpop.f32.mrf.mxu0
      %v942 = vadd.f32 0.0, %v941
      %v943 = vpop.f32.mrf.mxu0
      %v944 = vpop.f32.mrf.mxu0
      %v945 = vadd.f32 0.0, %v944
      %v946 = vpop.f32.mrf.mxu0
      %947 = vdwg.mxu0
      %v964 = vunpack.c.l.b16 %v791
      %v965 = vunpack.c.l.b16 %v792
      %v966 = vunpack.c.l.b16 %v793
      %v967 = vunpack.c.l.b16 %v794
      %v968 = vunpack.c.l.b16 %v795
      %v969 = vunpack.c.l.b16 %v796
      %v970 = vunpack.c.l.b16 %v797
      %v971 = vunpack.c.l.b16 %v798
      %v972 = vunpack.c.l.b16 %v799
      %v973 = vunpack.c.l.b16 %v800
      %v974 = vunpack.c.l.b16 %v801
      %v975 = vunpack.c.l.b16 %v802
      %v976 = vunpack.c.l.b16 %v803
      %v977 = vunpack.c.l.b16 %v804
      %v978 = vunpack.c.l.b16 %v805
      %v979 = vunpack.c.l.b16 %v806
      %v980 = vpack.c.b16 %v965, %v964
      %v981 = vpack.c.b16 %v967, %v966
      %v982 = vpack.c.b16 %v969, %v968
      %v983 = vpack.c.b16 %v971, %v970
      %v984 = vpack.c.b16 %v973, %v972
      %v985 = vpack.c.b16 %v975, %v974
      %v986 = vpack.c.b16 %v977, %v976
      %v987 = vpack.c.b16 %v979, %v978
      %996 = vmatprep.subr.bf16.mxu0 0
      %997 = vmatpush1.bf16.msra.mxu0 %v987
      %998 = vmatprep.subr.bf16.mxu0 0
      %999 = vmatpush1.bf16.msra.mxu0 %v986
      %1000 = vmatprep.subr.bf16.mxu0 0
      %1001 = vmatpush1.bf16.msra.mxu0 %v985
      %1002 = vmatprep.subr.bf16.mxu0 0
      %1003 = vmatpush1.bf16.msra.mxu0 %v984
      %1004 = vmatprep.subr.bf16.mxu0 0
      %1005 = vmatpush1.bf16.msra.mxu0 %v983
      %1006 = vmatprep.subr.bf16.mxu0 0
      %1007 = vmatpush1.bf16.msra.mxu0 %v982
      %1008 = vmatprep.subr.bf16.mxu0 0
      %1009 = vmatpush1.bf16.msra.mxu0 %v981
      %1010 = vmatprep.subr.bf16.mxu0 0
      %1011 = vmatpush1.bf16.msra.mxu0 %v980
      %1012 = vmatprep.subr.bf16.mxu0 0
      %1013 = vmatpush2.bf16.msra.mxu0 0
      %1014 = vmatprep.subr.bf16.mxu0 0
      %1015 = vmatpush2.bf16.msra.mxu0 0
      %1016 = vmatprep.subr.bf16.mxu0 0
      %1017 = vmatpush2.bf16.msra.mxu0 0
      %1018 = vmatprep.subr.bf16.mxu0 0
      %1019 = vmatpush2.bf16.msra.mxu0 0
      %1020 = vmatprep.subr.bf16.mxu0 0
      %1021 = vmatpush2.bf16.msra.mxu0 0
      %1022 = vmatprep.subr.bf16.mxu0 0
      %1023 = vmatpush2.bf16.msra.mxu0 0
      %1024 = vmatprep.subr.bf16.mxu0 0
      %1025 = vmatpush2.bf16.msra.mxu0 0
      %1026 = vmatprep.subr.bf16.mxu0 0
      %1027 = vmatpush2.bf16.msra.mxu0 0
      %1028 = vmatprep.mubr.bf16.mxu0 0
      %1029 = vmatmul.mubr.bf16.gmra.mxu0 %v787
      %v1030 = vpop.f32.mrf.mxu0
      %v1031 = vadd.f32 %v918, %v1030
      %v1032 = vpop.f32.mrf.mxu0
      %v1033 = vpop.f32.mrf.mxu0
      %v1034 = vadd.f32 %v921, %v1033
      %v1035 = vpop.f32.mrf.mxu0
      %1036 = vmatprep.mubr.bf16.mxu0 0
      %1037 = vmatmul.mubr.bf16.gmra.mxu0 %v788
      %v1038 = vpop.f32.mrf.mxu0
      %v1039 = vadd.f32 %v926, %v1038
      %v1040 = vpop.f32.mrf.mxu0
      %v1041 = vpop.f32.mrf.mxu0
      %v1042 = vadd.f32 %v929, %v1041
      %v1043 = vpop.f32.mrf.mxu0
      %1044 = vmatprep.mubr.bf16.mxu0 0
      %1045 = vmatmul.mubr.bf16.gmra.mxu0 %v789
      %v1046 = vpop.f32.mrf.mxu0
      %v1047 = vadd.f32 %v934, %v1046
      %v1048 = vpop.f32.mrf.mxu0
      %v1049 = vpop.f32.mrf.mxu0
      %v1050 = vadd.f32 %v937, %v1049
      %v1051 = vpop.f32.mrf.mxu0
      %1052 = vmatprep.mubr.bf16.mxu0 0
      %1053 = vmatmul.mubr.bf16.gmra.mxu0 %v790
      %v1054 = vpop.f32.mrf.mxu0
      %v1055 = vadd.f32 %v942, %v1054
      %v1056 = vpop.f32.mrf.mxu0
      %v1057 = vpop.f32.mrf.mxu0
      %v1058 = vadd.f32 %v945, %v1057
      %v1059 = vpop.f32.mrf.mxu0
      %1060 = vdwg.mxu0
      %v1061 = vld [vmem:[%s769] sm:$0xff]
      %v1062 = vld [vmem:[%s769 + $0x10] sm:$0xff]
      %v1063 = vld [vmem:[%s769 + $0x20] sm:$0xff]
      %v1064 = vld [vmem:[%s769 + $0x30] sm:$0xff]
      %v1065 = vld [vmem:[%s769 + $0x40] sm:$0xff]
      %v1066 = vld [vmem:[%s769 + $0x50] sm:$0xff]
      %v1067 = vld [vmem:[%s769 + $0x60] sm:$0xff]
      %v1068 = vld [vmem:[%s769 + $0x70] sm:$0xff]
      %v1069 = vpack.c.bf16 %v1062, %v1061
      %v1070 = vpack.c.bf16 %v1064, %v1063
      %v1071 = vpack.c.bf16 %v1066, %v1065
      %v1072 = vpack.c.bf16 %v1068, %v1067
      %v1073 = vld [vmem:[%s3 + $0x80] sm:$0xf]
      %v1074 = vld [vmem:[%s3 + $0x84] sm:$0xf]
      %v1075 = vld [vmem:[%s3 + $0x88] sm:$0xf]
      %v1076 = vld [vmem:[%s3 + $0x8c] sm:$0xf]
      %v1077 = vld [vmem:[%s3 + $0x90] sm:$0xf]
      %v1078 = vld [vmem:[%s3 + $0x94] sm:$0xf]
      %v1079 = vld [vmem:[%s3 + $0x98] sm:$0xf]
      %v1080 = vld [vmem:[%s3 + $0x9c] sm:$0xf]
      %v1081 = vld [vmem:[%s3 + $0xa0] sm:$0xf]
      %v1082 = vld [vmem:[%s3 + $0xa4] sm:$0xf]
      %v1083 = vld [vmem:[%s3 + $0xa8] sm:$0xf]
      %v1084 = vld [vmem:[%s3 + $0xac] sm:$0xf]
      %v1085 = vld [vmem:[%s3 + $0xb0] sm:$0xf]
      %v1086 = vld [vmem:[%s3 + $0xb4] sm:$0xf]
      %v1087 = vld [vmem:[%s3 + $0xb8] sm:$0xf]
      %v1088 = vld [vmem:[%s3 + $0xbc] sm:$0xf]
      %v1105 = vunpack.c.l.b16 %v1073
      %v1106 = vunpack.c.l.b16 %v1074
      %v1107 = vunpack.c.l.b16 %v1075
      %v1108 = vunpack.c.l.b16 %v1076
      %v1109 = vunpack.c.l.b16 %v1077
      %v1110 = vunpack.c.l.b16 %v1078
      %v1111 = vunpack.c.l.b16 %v1079
      %v1112 = vunpack.c.l.b16 %v1080
      %v1113 = vunpack.c.l.b16 %v1081
      %v1114 = vunpack.c.l.b16 %v1082
      %v1115 = vunpack.c.l.b16 %v1083
      %v1116 = vunpack.c.l.b16 %v1084
      %v1117 = vunpack.c.l.b16 %v1085
      %v1118 = vunpack.c.l.b16 %v1086
      %v1119 = vunpack.c.l.b16 %v1087
      %v1120 = vunpack.c.l.b16 %v1088
      %v1121 = vpack.c.b16 %v1106, %v1105
      %v1122 = vpack.c.b16 %v1108, %v1107
      %v1123 = vpack.c.b16 %v1110, %v1109
      %v1124 = vpack.c.b16 %v1112, %v1111
      %v1125 = vpack.c.b16 %v1114, %v1113
      %v1126 = vpack.c.b16 %v1116, %v1115
      %v1127 = vpack.c.b16 %v1118, %v1117
      %v1128 = vpack.c.b16 %v1120, %v1119
      %1137 = vmatprep.subr.bf16.mxu0 0
      %1138 = vmatpush1.bf16.msra.mxu0 %v1128
      %1139 = vmatprep.subr.bf16.mxu0 0
      %1140 = vmatpush1.bf16.msra.mxu0 %v1127
      %1141 = vmatprep.subr.bf16.mxu0 0
      %1142 = vmatpush1.bf16.msra.mxu0 %v1126
      %1143 = vmatprep.subr.bf16.mxu0 0
      %1144 = vmatpush1.bf16.msra.mxu0 %v1125
      %1145 = vmatprep.subr.bf16.mxu0 0
      %1146 = vmatpush1.bf16.msra.mxu0 %v1124
      %1147 = vmatprep.subr.bf16.mxu0 0
      %1148 = vmatpush1.bf16.msra.mxu0 %v1123
      %1149 = vmatprep.subr.bf16.mxu0 0
      %1150 = vmatpush1.bf16.msra.mxu0 %v1122
      %1151 = vmatprep.subr.bf16.mxu0 0
      %1152 = vmatpush1.bf16.msra.mxu0 %v1121
      %1153 = vmatprep.subr.bf16.mxu0 0
      %1154 = vmatpush2.bf16.msra.mxu0 0
      %1155 = vmatprep.subr.bf16.mxu0 0
      %1156 = vmatpush2.bf16.msra.mxu0 0
      %1157 = vmatprep.subr.bf16.mxu0 0
      %1158 = vmatpush2.bf16.msra.mxu0 0
      %1159 = vmatprep.subr.bf16.mxu0 0
      %1160 = vmatpush2.bf16.msra.mxu0 0
      %1161 = vmatprep.subr.bf16.mxu0 0
      %1162 = vmatpush2.bf16.msra.mxu0 0
      %1163 = vmatprep.subr.bf16.mxu0 0
      %1164 = vmatpush2.bf16.msra.mxu0 0
      %1165 = vmatprep.subr.bf16.mxu0 0
      %1166 = vmatpush2.bf16.msra.mxu0 0
      %1167 = vmatprep.subr.bf16.mxu0 0
      %1168 = vmatpush2.bf16.msra.mxu0 0
      %1169 = vmatprep.mubr.bf16.mxu0 0
      %1170 = vmatmul.mubr.bf16.gmra.mxu0 %v1069
      %v1171 = vpop.f32.mrf.mxu0
      %v1172 = vadd.f32 0.0, %v1171
      %v1173 = vpop.f32.mrf.mxu0
      %v1174 = vpop.f32.mrf.mxu0
      %v1175 = vadd.f32 0.0, %v1174
      %v1176 = vpop.f32.mrf.mxu0
      %1177 = vmatprep.mubr.bf16.mxu0 0
      %1178 = vmatmul.mubr.bf16.gmra.mxu0 %v1070
      %v1179 = vpop.f32.mrf.mxu0
      %v1180 = vadd.f32 0.0, %v1179
      %v1181 = vpop.f32.mrf.mxu0
      %v1182 = vpop.f32.mrf.mxu0
      %v1183 = vadd.f32 0.0, %v1182
      %v1184 = vpop.f32.mrf.mxu0
      %1185 = vmatprep.mubr.bf16.mxu0 0
      %1186 = vmatmul.mubr.bf16.gmra.mxu0 %v1071
      %v1187 = vpop.f32.mrf.mxu0
      %v1188 = vadd.f32 0.0, %v1187
      %v1189 = vpop.f32.mrf.mxu0
      %v1190 = vpop.f32.mrf.mxu0
      %v1191 = vadd.f32 0.0, %v1190
      %v1192 = vpop.f32.mrf.mxu0
      %1193 = vmatprep.mubr.bf16.mxu0 0
      %1194 = vmatmul.mubr.bf16.gmra.mxu0 %v1072
      %v1195 = vpop.f32.mrf.mxu0
      %v1196 = vadd.f32 0.0, %v1195
      %v1197 = vpop.f32.mrf.mxu0
      %v1198 = vpop.f32.mrf.mxu0
      %v1199 = vadd.f32 0.0, %v1198
      %v1200 = vpop.f32.mrf.mxu0
      %1201 = vdwg.mxu0
      %v1202 = vadd.f32 %v1031, %v1172
      %v1203 = vadd.f32 %v1034, %v1175
      %v1204 = vadd.f32 %v1039, %v1180
      %v1205 = vadd.f32 %v1042, %v1183
      %v1206 = vadd.f32 %v1047, %v1188
      %v1207 = vadd.f32 %v1050, %v1191
      %v1208 = vadd.f32 %v1055, %v1196
      %v1209 = vadd.f32 %v1058, %v1199
      %v1210 = vld [vmem:[%s769 + $0x1] sm:$0xff]
      %v1211 = vld [vmem:[%s769 + $0x11] sm:$0xff]
      %v1212 = vld [vmem:[%s769 + $0x21] sm:$0xff]
      %v1213 = vld [vmem:[%s769 + $0x31] sm:$0xff]
      %v1214 = vld [vmem:[%s769 + $0x41] sm:$0xff]
      %v1215 = vld [vmem:[%s769 + $0x51] sm:$0xff]
      %v1216 = vld [vmem:[%s769 + $0x61] sm:$0xff]
      %v1217 = vld [vmem:[%s769 + $0x71] sm:$0xff]
      %v1218 = vpack.c.bf16 %v1211, %v1210
      %v1219 = vpack.c.bf16 %v1213, %v1212
      %v1220 = vpack.c.bf16 %v1215, %v1214
      %v1221 = vpack.c.bf16 %v1217, %v1216
      %v1222 = vld [vmem:[%s3 + $0xc0] sm:$0xf]
      %v1223 = vld [vmem:[%s3 + $0xc4] sm:$0xf]
      %v1224 = vld [vmem:[%s3 + $0xc8] sm:$0xf]
      %v1225 = vld [vmem:[%s3 + $0xcc] sm:$0xf]
      %v1226 = vld [vmem:[%s3 + $0xd0] sm:$0xf]
      %v1227 = vld [vmem:[%s3 + $0xd4] sm:$0xf]
      %v1228 = vld [vmem:[%s3 + $0xd8] sm:$0xf]
      %v1229 = vld [vmem:[%s3 + $0xdc] sm:$0xf]
      %v1230 = vld [vmem:[%s3 + $0xe0] sm:$0xf]
      %v1231 = vld [vmem:[%s3 + $0xe4] sm:$0xf]
      %v1232 = vld [vmem:[%s3 + $0xe8] sm:$0xf]
      %v1233 = vld [vmem:[%s3 + $0xec] sm:$0xf]
      %v1234 = vld [vmem:[%s3 + $0xf0] sm:$0xf]
      %v1235 = vld [vmem:[%s3 + $0xf4] sm:$0xf]
      %v1236 = vld [vmem:[%s3 + $0xf8] sm:$0xf]
      %v1237 = vld [vmem:[%s3 + $0xfc] sm:$0xf]
      %v1254 = vunpack.c.l.b16 %v1222
      %v1255 = vunpack.c.l.b16 %v1223
      %v1256 = vunpack.c.l.b16 %v1224
      %v1257 = vunpack.c.l.b16 %v1225
      %v1258 = vunpack.c.l.b16 %v1226
      %v1259 = vunpack.c.l.b16 %v1227
      %v1260 = vunpack.c.l.b16 %v1228
      %v1261 = vunpack.c.l.b16 %v1229
      %v1262 = vunpack.c.l.b16 %v1230
      %v1263 = vunpack.c.l.b16 %v1231
      %v1264 = vunpack.c.l.b16 %v1232
      %v1265 = vunpack.c.l.b16 %v1233
      %v1266 = vunpack.c.l.b16 %v1234
      %v1267 = vunpack.c.l.b16 %v1235
      %v1268 = vunpack.c.l.b16 %v1236
      %v1269 = vunpack.c.l.b16 %v1237
      %v1270 = vpack.c.b16 %v1255, %v1254
      %v1271 = vpack.c.b16 %v1257, %v1256
      %v1272 = vpack.c.b16 %v1259, %v1258
      %v1273 = vpack.c.b16 %v1261, %v1260
      %v1274 = vpack.c.b16 %v1263, %v1262
      %v1275 = vpack.c.b16 %v1265, %v1264
      %v1276 = vpack.c.b16 %v1267, %v1266
      %v1277 = vpack.c.b16 %v1269, %v1268
      %1286 = vmatprep.subr.bf16.mxu0 0
      %1287 = vmatpush1.bf16.msra.mxu0 %v1277
      %1288 = vmatprep.subr.bf16.mxu0 0
      %1289 = vmatpush1.bf16.msra.mxu0 %v1276
      %1290 = vmatprep.subr.bf16.mxu0 0
      %1291 = vmatpush1.bf16.msra.mxu0 %v1275
      %1292 = vmatprep.subr.bf16.mxu0 0
      %1293 = vmatpush1.bf16.msra.mxu0 %v1274
      %1294 = vmatprep.subr.bf16.mxu0 0
      %1295 = vmatpush1.bf16.msra.mxu0 %v1273
      %1296 = vmatprep.subr.bf16.mxu0 0
      %1297 = vmatpush1.bf16.msra.mxu0 %v1272
      %1298 = vmatprep.subr.bf16.mxu0 0
      %1299 = vmatpush1.bf16.msra.mxu0 %v1271
      %1300 = vmatprep.subr.bf16.mxu0 0
      %1301 = vmatpush1.bf16.msra.mxu0 %v1270
      %1302 = vmatprep.subr.bf16.mxu0 0
      %1303 = vmatpush2.bf16.msra.mxu0 0
      %1304 = vmatprep.subr.bf16.mxu0 0
      %1305 = vmatpush2.bf16.msra.mxu0 0
      %1306 = vmatprep.subr.bf16.mxu0 0
      %1307 = vmatpush2.bf16.msra.mxu0 0
      %1308 = vmatprep.subr.bf16.mxu0 0
      %1309 = vmatpush2.bf16.msra.mxu0 0
      %1310 = vmatprep.subr.bf16.mxu0 0
      %1311 = vmatpush2.bf16.msra.mxu0 0
      %1312 = vmatprep.subr.bf16.mxu0 0
      %1313 = vmatpush2.bf16.msra.mxu0 0
      %1314 = vmatprep.subr.bf16.mxu0 0
      %1315 = vmatpush2.bf16.msra.mxu0 0
      %1316 = vmatprep.subr.bf16.mxu0 0
      %1317 = vmatpush2.bf16.msra.mxu0 0
      %1318 = vmatprep.mubr.bf16.mxu0 0
      %1319 = vmatmul.mubr.bf16.gmra.mxu0 %v1218
      %v1320 = vpop.f32.mrf.mxu0
      %v1321 = vadd.f32 0.0, %v1320
      %v1322 = vpop.f32.mrf.mxu0
      %v1323 = vpop.f32.mrf.mxu0
      %v1324 = vadd.f32 0.0, %v1323
      %v1325 = vpop.f32.mrf.mxu0
      %1326 = vmatprep.mubr.bf16.mxu0 0
      %1327 = vmatmul.mubr.bf16.gmra.mxu0 %v1219
      %v1328 = vpop.f32.mrf.mxu0
      %v1329 = vadd.f32 0.0, %v1328
      %v1330 = vpop.f32.mrf.mxu0
      %v1331 = vpop.f32.mrf.mxu0
      %v1332 = vadd.f32 0.0, %v1331
      %v1333 = vpop.f32.mrf.mxu0
      %1334 = vmatprep.mubr.bf16.mxu0 0
      %1335 = vmatmul.mubr.bf16.gmra.mxu0 %v1220
      %v1336 = vpop.f32.mrf.mxu0
      %v1337 = vadd.f32 0.0, %v1336
      %v1338 = vpop.f32.mrf.mxu0
      %v1339 = vpop.f32.mrf.mxu0
      %v1340 = vadd.f32 0.0, %v1339
      %v1341 = vpop.f32.mrf.mxu0
      %1342 = vmatprep.mubr.bf16.mxu0 0
      %1343 = vmatmul.mubr.bf16.gmra.mxu0 %v1221
      %v1344 = vpop.f32.mrf.mxu0
      %v1345 = vadd.f32 0.0, %v1344
      %v1346 = vpop.f32.mrf.mxu0
      %v1347 = vpop.f32.mrf.mxu0
      %v1348 = vadd.f32 0.0, %v1347
      %v1349 = vpop.f32.mrf.mxu0
      %1350 = vdwg.mxu0
      %v1351 = vadd.f32 %v1202, %v1321
      %v1352 = vadd.f32 %v1203, %v1324
      %v1353 = vadd.f32 %v1204, %v1329
      %v1354 = vadd.f32 %v1205, %v1332
      %v1355 = vadd.f32 %v1206, %v1337
      %v1356 = vadd.f32 %v1207, %v1340
      %v1357 = vadd.f32 %v1208, %v1345
      %v1358 = vadd.f32 %v1209, %v1348
      %v1360 = vlaneseq
      %v1361 = vshrl.u32 %v1360, 7
      %v1362 = vsub.s32 0, %v1361
      %v1363 = vrot.slane %v778, %v1362
      %v1365 = vadd.f32 %v1351, %v1363
      %v1366 = vadd.f32 %v1352, %v1363
      %v1367 = vadd.f32 %v1353, %v1363
      %v1368 = vadd.f32 %v1354, %v1363
      %v1369 = vadd.f32 %v1355, %v1363
      %v1370 = vadd.f32 %v1356, %v1363
      %v1371 = vadd.f32 %v1357, %v1363
      %v1372 = vadd.f32 %v1358, %v1363
      %vm1373 = vcmask 31744
      %1374 = vst.msk [vmem:[%s224] sm:$0xff] %vm1373, %v1365
      %1375 = vst.msk [vmem:[%s224 + $0x8] sm:$0xff] %vm1373, %v1366
      %1376 = vst.msk [vmem:[%s224 + $0x10] sm:$0xff] %vm1373, %v1367
      %1377 = vst.msk [vmem:[%s224 + $0x18] sm:$0xff] %vm1373, %v1368
      %1378 = vst.msk [vmem:[%s224 + $0x20] sm:$0xff] %vm1373, %v1369
      %1379 = vst.msk [vmem:[%s224 + $0x28] sm:$0xff] %vm1373, %v1370
      %1380 = vst.msk [vmem:[%s224 + $0x30] sm:$0xff] %vm1373, %v1371
      %1381 = vst.msk [vmem:[%s224 + $0x38] sm:$0xff] %vm1373, %v1372
      %1390 = vrot.lane.b32.xlu0 %v226, 120
      %v1391 = vpop.permute.xlu0 %1390
      %1392 = vrot.lane.b32.xlu0 %v228, 120
      %v1393 = vpop.permute.xlu0 %1392
      %1394 = vrot.lane.b32.xlu0 %v230, 120
      %v1395 = vpop.permute.xlu0 %1394
      %1396 = vrot.lane.b32.xlu0 %v232, 120
      %v1397 = vpop.permute.xlu0 %1396
      %1398 = vrot.lane.b32.xlu0 %v234, 120
      %v1399 = vpop.permute.xlu0 %1398
      %1400 = vrot.lane.b32.xlu0 %v236, 120
      %v1401 = vpop.permute.xlu0 %1400
      %1402 = vrot.lane.b32.xlu0 %v238, 120
      %v1403 = vpop.permute.xlu0 %1402
      %1404 = vrot.lane.b32.xlu0 %v240, 120
      %v1405 = vpop.permute.xlu0 %1404
      %vm1414 = vcmask 64544
      %1415 = vst.msk [vmem:[%s224] sm:$0xff] %vm1414, %v1391
      %1416 = vst.msk [vmem:[%s224 + $0x8] sm:$0xff] %vm1414, %v1393
      %1417 = vst.msk [vmem:[%s224 + $0x10] sm:$0xff] %vm1414, %v1395
      %1418 = vst.msk [vmem:[%s224 + $0x18] sm:$0xff] %vm1414, %v1397
      %1419 = vst.msk [vmem:[%s224 + $0x20] sm:$0xff] %vm1414, %v1399
      %1420 = vst.msk [vmem:[%s224 + $0x28] sm:$0xff] %vm1414, %v1401
      %1421 = vst.msk [vmem:[%s224 + $0x30] sm:$0xff] %vm1414, %v1403
      %1422 = vst.msk [vmem:[%s224 + $0x38] sm:$0xff] %vm1414, %v1405
      %v1423 = vld [vmem:[#allocation2 + $0x1] sm:$0xff]
      %v1424 = vld [vmem:[#allocation2 + $0x11] sm:$0xff]
      %v1425 = vld [vmem:[#allocation2 + $0x21] sm:$0xff]
      %v1426 = vld [vmem:[#allocation2 + $0x31] sm:$0xff]
      %v1427 = vld [vmem:[#allocation2 + $0x41] sm:$0xff]
      %v1428 = vld [vmem:[#allocation2 + $0x51] sm:$0xff]
      %v1429 = vld [vmem:[#allocation2 + $0x61] sm:$0xff]
      %v1430 = vld [vmem:[#allocation2 + $0x71] sm:$0xff]
      %v1431 = vpack.c.bf16 %v1424, %v1423
      %v1432 = vpack.c.bf16 %v1426, %v1425
      %v1433 = vpack.c.bf16 %v1428, %v1427
      %v1434 = vpack.c.bf16 %v1430, %v1429
      %s1435 = scalar_lea.vmem %s3, 256
      %v1436 = vld [vmem:[%s1435] sm:$0xf]
      %v1437 = vld [vmem:[%s1435 + $0x4] sm:$0xf]
      %v1438 = vld [vmem:[%s1435 + $0x8] sm:$0xf]
      %v1439 = vld [vmem:[%s1435 + $0xc] sm:$0xf]
      %v1440 = vld [vmem:[%s1435 + $0x10] sm:$0xf]
      %v1441 = vld [vmem:[%s1435 + $0x14] sm:$0xf]
      %v1442 = vld [vmem:[%s1435 + $0x18] sm:$0xf]
      %v1443 = vld [vmem:[%s1435 + $0x1c] sm:$0xf]
      %v1444 = vld [vmem:[%s1435 + $0x20] sm:$0xf]
      %v1445 = vld [vmem:[%s1435 + $0x24] sm:$0xf]
      %v1446 = vld [vmem:[%s1435 + $0x28] sm:$0xf]
      %v1447 = vld [vmem:[%s1435 + $0x2c] sm:$0xf]
      %v1448 = vld [vmem:[%s1435 + $0x30] sm:$0xf]
      %v1449 = vld [vmem:[%s1435 + $0x34] sm:$0xf]
      %v1450 = vld [vmem:[%s1435 + $0x38] sm:$0xf]
      %v1451 = vld [vmem:[%s1435 + $0x3c] sm:$0xf]
      %v1452 = vld [vmem:[#allocation2 + $0x2] sm:$0xff]
      %v1453 = vld [vmem:[#allocation2 + $0x12] sm:$0xff]
      %v1454 = vld [vmem:[#allocation2 + $0x22] sm:$0xff]
      %v1455 = vld [vmem:[#allocation2 + $0x32] sm:$0xff]
      %v1456 = vld [vmem:[#allocation2 + $0x42] sm:$0xff]
      %v1457 = vld [vmem:[#allocation2 + $0x52] sm:$0xff]
      %v1458 = vld [vmem:[#allocation2 + $0x62] sm:$0xff]
      %v1459 = vld [vmem:[#allocation2 + $0x72] sm:$0xff]
      %v1460 = vpack.c.bf16 %v1453, %v1452
      %v1461 = vpack.c.bf16 %v1455, %v1454
      %v1462 = vpack.c.bf16 %v1457, %v1456
      %v1463 = vpack.c.bf16 %v1459, %v1458
      %v1464 = vld [vmem:[%s1435 + $0x40] sm:$0xf]
      %v1465 = vld [vmem:[%s1435 + $0x44] sm:$0xf]
      %v1466 = vld [vmem:[%s1435 + $0x48] sm:$0xf]
      %v1467 = vld [vmem:[%s1435 + $0x4c] sm:$0xf]
      %v1468 = vld [vmem:[%s1435 + $0x50] sm:$0xf]
      %v1469 = vld [vmem:[%s1435 + $0x54] sm:$0xf]
      %v1470 = vld [vmem:[%s1435 + $0x58] sm:$0xf]
      %v1471 = vld [vmem:[%s1435 + $0x5c] sm:$0xf]
      %v1472 = vld [vmem:[%s1435 + $0x60] sm:$0xf]
      %v1473 = vld [vmem:[%s1435 + $0x64] sm:$0xf]
      %v1474 = vld [vmem:[%s1435 + $0x68] sm:$0xf]
      %v1475 = vld [vmem:[%s1435 + $0x6c] sm:$0xf]
      %v1476 = vld [vmem:[%s1435 + $0x70] sm:$0xf]
      %v1477 = vld [vmem:[%s1435 + $0x74] sm:$0xf]
      %v1478 = vld [vmem:[%s1435 + $0x78] sm:$0xf]
      %v1479 = vld [vmem:[%s1435 + $0x7c] sm:$0xf]
      %v1496 = vunpack.c.l.b16 %v1464
      %v1497 = vunpack.c.l.b16 %v1465
      %v1498 = vunpack.c.l.b16 %v1466
      %v1499 = vunpack.c.l.b16 %v1467
      %v1500 = vunpack.c.l.b16 %v1468
      %v1501 = vunpack.c.l.b16 %v1469
      %v1502 = vunpack.c.l.b16 %v1470
      %v1503 = vunpack.c.l.b16 %v1471
      %v1504 = vunpack.c.l.b16 %v1472
      %v1505 = vunpack.c.l.b16 %v1473
      %v1506 = vunpack.c.l.b16 %v1474
      %v1507 = vunpack.c.l.b16 %v1475
      %v1508 = vunpack.c.l.b16 %v1476
      %v1509 = vunpack.c.l.b16 %v1477
      %v1510 = vunpack.c.l.b16 %v1478
      %v1511 = vunpack.c.l.b16 %v1479
      %v1512 = vpack.c.b16 %v1497, %v1496
      %v1513 = vpack.c.b16 %v1499, %v1498
      %v1514 = vpack.c.b16 %v1501, %v1500
      %v1515 = vpack.c.b16 %v1503, %v1502
      %v1516 = vpack.c.b16 %v1505, %v1504
      %v1517 = vpack.c.b16 %v1507, %v1506
      %v1518 = vpack.c.b16 %v1509, %v1508
      %v1519 = vpack.c.b16 %v1511, %v1510
      %1528 = vmatprep.subr.bf16.mxu0 0
      %1529 = vmatpush1.bf16.msra.mxu0 %v1519
      %1530 = vmatprep.subr.bf16.mxu0 0
      %1531 = vmatpush1.bf16.msra.mxu0 %v1518
      %1532 = vmatprep.subr.bf16.mxu0 0
      %1533 = vmatpush1.bf16.msra.mxu0 %v1517
      %1534 = vmatprep.subr.bf16.mxu0 0
      %1535 = vmatpush1.bf16.msra.mxu0 %v1516
      %1536 = vmatprep.subr.bf16.mxu0 0
      %1537 = vmatpush1.bf16.msra.mxu0 %v1515
      %1538 = vmatprep.subr.bf16.mxu0 0
      %1539 = vmatpush1.bf16.msra.mxu0 %v1514
      %1540 = vmatprep.subr.bf16.mxu0 0
      %1541 = vmatpush1.bf16.msra.mxu0 %v1513
      %1542 = vmatprep.subr.bf16.mxu0 0
      %1543 = vmatpush1.bf16.msra.mxu0 %v1512
      %1544 = vmatprep.subr.bf16.mxu0 0
      %1545 = vmatpush2.bf16.msra.mxu0 0
      %1546 = vmatprep.subr.bf16.mxu0 0
      %1547 = vmatpush2.bf16.msra.mxu0 0
      %1548 = vmatprep.subr.bf16.mxu0 0
      %1549 = vmatpush2.bf16.msra.mxu0 0
      %1550 = vmatprep.subr.bf16.mxu0 0
      %1551 = vmatpush2.bf16.msra.mxu0 0
      %1552 = vmatprep.subr.bf16.mxu0 0
      %1553 = vmatpush2.bf16.msra.mxu0 0
      %1554 = vmatprep.subr.bf16.mxu0 0
      %1555 = vmatpush2.bf16.msra.mxu0 0
      %1556 = vmatprep.subr.bf16.mxu0 0
      %1557 = vmatpush2.bf16.msra.mxu0 0
      %1558 = vmatprep.subr.bf16.mxu0 0
      %1559 = vmatpush2.bf16.msra.mxu0 0
      %1560 = vmatprep.mubr.bf16.mxu0 0
      %1561 = vmatmul.mubr.bf16.gmra.mxu0 %v1460
      %v1562 = vpop.f32.mrf.mxu0
      %v1563 = vadd.f32 0.0, %v1562
      %v1564 = vpop.f32.mrf.mxu0
      %v1565 = vpop.f32.mrf.mxu0
      %v1566 = vadd.f32 0.0, %v1565
      %v1567 = vpop.f32.mrf.mxu0
      %1568 = vmatprep.mubr.bf16.mxu0 0
      %1569 = vmatmul.mubr.bf16.gmra.mxu0 %v1461
      %v1570 = vpop.f32.mrf.mxu0
      %v1571 = vadd.f32 0.0, %v1570
      %v1572 = vpop.f32.mrf.mxu0
      %v1573 = vpop.f32.mrf.mxu0
      %v1574 = vadd.f32 0.0, %v1573
      %v1575 = vpop.f32.mrf.mxu0
      %1576 = vmatprep.mubr.bf16.mxu0 0
      %1577 = vmatmul.mubr.bf16.gmra.mxu0 %v1462
      %v1578 = vpop.f32.mrf.mxu0
      %v1579 = vadd.f32 0.0, %v1578
      %v1580 = vpop.f32.mrf.mxu0
      %v1581 = vpop.f32.mrf.mxu0
      %v1582 = vadd.f32 0.0, %v1581
      %v1583 = vpop.f32.mrf.mxu0
      %1584 = vmatprep.mubr.bf16.mxu0 0
      %1585 = vmatmul.mubr.bf16.gmra.mxu0 %v1463
      %v1586 = vpop.f32.mrf.mxu0
      %v1587 = vadd.f32 0.0, %v1586
      %v1588 = vpop.f32.mrf.mxu0
      %v1589 = vpop.f32.mrf.mxu0
      %v1590 = vadd.f32 0.0, %v1589
      %v1591 = vpop.f32.mrf.mxu0
      %1592 = vdwg.mxu0
      %v1609 = vunpack.c.l.b16 %v1436
      %v1610 = vunpack.c.l.b16 %v1437
      %v1611 = vunpack.c.l.b16 %v1438
      %v1612 = vunpack.c.l.b16 %v1439
      %v1613 = vunpack.c.l.b16 %v1440
      %v1614 = vunpack.c.l.b16 %v1441
      %v1615 = vunpack.c.l.b16 %v1442
      %v1616 = vunpack.c.l.b16 %v1443
      %v1617 = vunpack.c.l.b16 %v1444
      %v1618 = vunpack.c.l.b16 %v1445
      %v1619 = vunpack.c.l.b16 %v1446
      %v1620 = vunpack.c.l.b16 %v1447
      %v1621 = vunpack.c.l.b16 %v1448
      %v1622 = vunpack.c.l.b16 %v1449
      %v1623 = vunpack.c.l.b16 %v1450
      %v1624 = vunpack.c.l.b16 %v1451
      %v1625 = vpack.c.b16 %v1610, %v1609
      %v1626 = vpack.c.b16 %v1612, %v1611
      %v1627 = vpack.c.b16 %v1614, %v1613
      %v1628 = vpack.c.b16 %v1616, %v1615
      %v1629 = vpack.c.b16 %v1618, %v1617
      %v1630 = vpack.c.b16 %v1620, %v1619
      %v1631 = vpack.c.b16 %v1622, %v1621
      %v1632 = vpack.c.b16 %v1624, %v1623
      %1641 = vmatprep.subr.bf16.mxu0 0
      %1642 = vmatpush1.bf16.msra.mxu0 %v1632
      %1643 = vmatprep.subr.bf16.mxu0 0
      %1644 = vmatpush1.bf16.msra.mxu0 %v1631
      %1645 = vmatprep.subr.bf16.mxu0 0
      %1646 = vmatpush1.bf16.msra.mxu0 %v1630
      %1647 = vmatprep.subr.bf16.mxu0 0
      %1648 = vmatpush1.bf16.msra.mxu0 %v1629
      %1649 = vmatprep.subr.bf16.mxu0 0
      %1650 = vmatpush1.bf16.msra.mxu0 %v1628
      %1651 = vmatprep.subr.bf16.mxu0 0
      %1652 = vmatpush1.bf16.msra.mxu0 %v1627
      %1653 = vmatprep.subr.bf16.mxu0 0
      %1654 = vmatpush1.bf16.msra.mxu0 %v1626
      %1655 = vmatprep.subr.bf16.mxu0 0
      %1656 = vmatpush1.bf16.msra.mxu0 %v1625
      %1657 = vmatprep.subr.bf16.mxu0 0
      %1658 = vmatpush2.bf16.msra.mxu0 0
      %1659 = vmatprep.subr.bf16.mxu0 0
      %1660 = vmatpush2.bf16.msra.mxu0 0
      %1661 = vmatprep.subr.bf16.mxu0 0
      %1662 = vmatpush2.bf16.msra.mxu0 0
      %1663 = vmatprep.subr.bf16.mxu0 0
      %1664 = vmatpush2.bf16.msra.mxu0 0
      %1665 = vmatprep.subr.bf16.mxu0 0
      %1666 = vmatpush2.bf16.msra.mxu0 0
      %1667 = vmatprep.subr.bf16.mxu0 0
      %1668 = vmatpush2.bf16.msra.mxu0 0
      %1669 = vmatprep.subr.bf16.mxu0 0
      %1670 = vmatpush2.bf16.msra.mxu0 0
      %1671 = vmatprep.subr.bf16.mxu0 0
      %1672 = vmatpush2.bf16.msra.mxu0 0
      %1673 = vmatprep.mubr.bf16.mxu0 0
      %1674 = vmatmul.mubr.bf16.gmra.mxu0 %v1431
      %v1675 = vpop.f32.mrf.mxu0
      %v1676 = vadd.f32 %v1563, %v1675
      %v1677 = vpop.f32.mrf.mxu0
      %v1678 = vpop.f32.mrf.mxu0
      %v1679 = vadd.f32 %v1566, %v1678
      %v1680 = vpop.f32.mrf.mxu0
      %1681 = vmatprep.mubr.bf16.mxu0 0
      %1682 = vmatmul.mubr.bf16.gmra.mxu0 %v1432
      %v1683 = vpop.f32.mrf.mxu0
      %v1684 = vadd.f32 %v1571, %v1683
      %v1685 = vpop.f32.mrf.mxu0
      %v1686 = vpop.f32.mrf.mxu0
      %v1687 = vadd.f32 %v1574, %v1686
      %v1688 = vpop.f32.mrf.mxu0
      %1689 = vmatprep.mubr.bf16.mxu0 0
      %1690 = vmatmul.mubr.bf16.gmra.mxu0 %v1433
      %v1691 = vpop.f32.mrf.mxu0
      %v1692 = vadd.f32 %v1579, %v1691
      %v1693 = vpop.f32.mrf.mxu0
      %v1694 = vpop.f32.mrf.mxu0
      %v1695 = vadd.f32 %v1582, %v1694
      %v1696 = vpop.f32.mrf.mxu0
      %1697 = vmatprep.mubr.bf16.mxu0 0
      %1698 = vmatmul.mubr.bf16.gmra.mxu0 %v1434
      %v1699 = vpop.f32.mrf.mxu0
      %v1700 = vadd.f32 %v1587, %v1699
      %v1701 = vpop.f32.mrf.mxu0
      %v1702 = vpop.f32.mrf.mxu0
      %v1703 = vadd.f32 %v1590, %v1702
      %v1704 = vpop.f32.mrf.mxu0
      %1705 = vdwg.mxu0
      %v1706 = vld [vmem:[%s769 + $0x1] sm:$0xff]
      %v1707 = vld [vmem:[%s769 + $0x11] sm:$0xff]
      %v1708 = vld [vmem:[%s769 + $0x21] sm:$0xff]
      %v1709 = vld [vmem:[%s769 + $0x31] sm:$0xff]
      %v1710 = vld [vmem:[%s769 + $0x41] sm:$0xff]
      %v1711 = vld [vmem:[%s769 + $0x51] sm:$0xff]
      %v1712 = vld [vmem:[%s769 + $0x61] sm:$0xff]
      %v1713 = vld [vmem:[%s769 + $0x71] sm:$0xff]
      %v1714 = vpack.c.bf16 %v1707, %v1706
      %v1715 = vpack.c.bf16 %v1709, %v1708
      %v1716 = vpack.c.bf16 %v1711, %v1710
      %v1717 = vpack.c.bf16 %v1713, %v1712
      %v1718 = vld [vmem:[%s1435 + $0x80] sm:$0xf]
      %v1719 = vld [vmem:[%s1435 + $0x84] sm:$0xf]
      %v1720 = vld [vmem:[%s1435 + $0x88] sm:$0xf]
      %v1721 = vld [vmem:[%s1435 + $0x8c] sm:$0xf]
      %v1722 = vld [vmem:[%s1435 + $0x90] sm:$0xf]
      %v1723 = vld [vmem:[%s1435 + $0x94] sm:$0xf]
      %v1724 = vld [vmem:[%s1435 + $0x98] sm:$0xf]
      %v1725 = vld [vmem:[%s1435 + $0x9c] sm:$0xf]
      %v1726 = vld [vmem:[%s1435 + $0xa0] sm:$0xf]
      %v1727 = vld [vmem:[%s1435 + $0xa4] sm:$0xf]
      %v1728 = vld [vmem:[%s1435 + $0xa8] sm:$0xf]
      %v1729 = vld [vmem:[%s1435 + $0xac] sm:$0xf]
      %v1730 = vld [vmem:[%s1435 + $0xb0] sm:$0xf]
      %v1731 = vld [vmem:[%s1435 + $0xb4] sm:$0xf]
      %v1732 = vld [vmem:[%s1435 + $0xb8] sm:$0xf]
      %v1733 = vld [vmem:[%s1435 + $0xbc] sm:$0xf]
      %v1750 = vunpack.c.l.b16 %v1718
      %v1751 = vunpack.c.l.b16 %v1719
      %v1752 = vunpack.c.l.b16 %v1720
      %v1753 = vunpack.c.l.b16 %v1721
      %v1754 = vunpack.c.l.b16 %v1722
      %v1755 = vunpack.c.l.b16 %v1723
      %v1756 = vunpack.c.l.b16 %v1724
      %v1757 = vunpack.c.l.b16 %v1725
      %v1758 = vunpack.c.l.b16 %v1726
      %v1759 = vunpack.c.l.b16 %v1727
      %v1760 = vunpack.c.l.b16 %v1728
      %v1761 = vunpack.c.l.b16 %v1729
      %v1762 = vunpack.c.l.b16 %v1730
      %v1763 = vunpack.c.l.b16 %v1731
      %v1764 = vunpack.c.l.b16 %v1732
      %v1765 = vunpack.c.l.b16 %v1733
      %v1766 = vpack.c.b16 %v1751, %v1750
      %v1767 = vpack.c.b16 %v1753, %v1752
      %v1768 = vpack.c.b16 %v1755, %v1754
      %v1769 = vpack.c.b16 %v1757, %v1756
      %v1770 = vpack.c.b16 %v1759, %v1758
      %v1771 = vpack.c.b16 %v1761, %v1760
      %v1772 = vpack.c.b16 %v1763, %v1762
      %v1773 = vpack.c.b16 %v1765, %v1764
      %1782 = vmatprep.subr.bf16.mxu0 0
      %1783 = vmatpush1.bf16.msra.mxu0 %v1773
      %1784 = vmatprep.subr.bf16.mxu0 0
      %1785 = vmatpush1.bf16.msra.mxu0 %v1772
      %1786 = vmatprep.subr.bf16.mxu0 0
      %1787 = vmatpush1.bf16.msra.mxu0 %v1771
      %1788 = vmatprep.subr.bf16.mxu0 0
      %1789 = vmatpush1.bf16.msra.mxu0 %v1770
      %1790 = vmatprep.subr.bf16.mxu0 0
      %1791 = vmatpush1.bf16.msra.mxu0 %v1769
      %1792 = vmatprep.subr.bf16.mxu0 0
      %1793 = vmatpush1.bf16.msra.mxu0 %v1768
      %1794 = vmatprep.subr.bf16.mxu0 0
      %1795 = vmatpush1.bf16.msra.mxu0 %v1767
      %1796 = vmatprep.subr.bf16.mxu0 0
      %1797 = vmatpush1.bf16.msra.mxu0 %v1766
      %1798 = vmatprep.subr.bf16.mxu0 0
      %1799 = vmatpush2.bf16.msra.mxu0 0
      %1800 = vmatprep.subr.bf16.mxu0 0
      %1801 = vmatpush2.bf16.msra.mxu0 0
      %1802 = vmatprep.subr.bf16.mxu0 0
      %1803 = vmatpush2.bf16.msra.mxu0 0
      %1804 = vmatprep.subr.bf16.mxu0 0
      %1805 = vmatpush2.bf16.msra.mxu0 0
      %1806 = vmatprep.subr.bf16.mxu0 0
      %1807 = vmatpush2.bf16.msra.mxu0 0
      %1808 = vmatprep.subr.bf16.mxu0 0
      %1809 = vmatpush2.bf16.msra.mxu0 0
      %1810 = vmatprep.subr.bf16.mxu0 0
      %1811 = vmatpush2.bf16.msra.mxu0 0
      %1812 = vmatprep.subr.bf16.mxu0 0
      %1813 = vmatpush2.bf16.msra.mxu0 0
      %1814 = vmatprep.mubr.bf16.mxu0 0
      %1815 = vmatmul.mubr.bf16.gmra.mxu0 %v1714
      %v1816 = vpop.f32.mrf.mxu0
      %v1817 = vadd.f32 0.0, %v1816
      %v1818 = vpop.f32.mrf.mxu0
      %v1819 = vpop.f32.mrf.mxu0
      %v1820 = vadd.f32 0.0, %v1819
      %v1821 = vpop.f32.mrf.mxu0
      %1822 = vmatprep.mubr.bf16.mxu0 0
      %1823 = vmatmul.mubr.bf16.gmra.mxu0 %v1715
      %v1824 = vpop.f32.mrf.mxu0
      %v1825 = vadd.f32 0.0, %v1824
      %v1826 = vpop.f32.mrf.mxu0
      %v1827 = vpop.f32.mrf.mxu0
      %v1828 = vadd.f32 0.0, %v1827
      %v1829 = vpop.f32.mrf.mxu0
      %1830 = vmatprep.mubr.bf16.mxu0 0
      %1831 = vmatmul.mubr.bf16.gmra.mxu0 %v1716
      %v1832 = vpop.f32.mrf.mxu0
      %v1833 = vadd.f32 0.0, %v1832
      %v1834 = vpop.f32.mrf.mxu0
      %v1835 = vpop.f32.mrf.mxu0
      %v1836 = vadd.f32 0.0, %v1835
      %v1837 = vpop.f32.mrf.mxu0
      %1838 = vmatprep.mubr.bf16.mxu0 0
      %1839 = vmatmul.mubr.bf16.gmra.mxu0 %v1717
      %v1840 = vpop.f32.mrf.mxu0
      %v1841 = vadd.f32 0.0, %v1840
      %v1842 = vpop.f32.mrf.mxu0
      %v1843 = vpop.f32.mrf.mxu0
      %v1844 = vadd.f32 0.0, %v1843
      %v1845 = vpop.f32.mrf.mxu0
      %1846 = vdwg.mxu0
      %v1847 = vadd.f32 %v1676, %v1817
      %v1848 = vadd.f32 %v1679, %v1820
      %v1849 = vadd.f32 %v1684, %v1825
      %v1850 = vadd.f32 %v1687, %v1828
      %v1851 = vadd.f32 %v1692, %v1833
      %v1852 = vadd.f32 %v1695, %v1836
      %v1853 = vadd.f32 %v1700, %v1841
      %v1854 = vadd.f32 %v1703, %v1844
      %v1855 = vld [vmem:[%s769 + $0x2] sm:$0xff]
      %v1856 = vld [vmem:[%s769 + $0x12] sm:$0xff]
      %v1857 = vld [vmem:[%s769 + $0x22] sm:$0xff]
      %v1858 = vld [vmem:[%s769 + $0x32] sm:$0xff]
      %v1859 = vld [vmem:[%s769 + $0x42] sm:$0xff]
      %v1860 = vld [vmem:[%s769 + $0x52] sm:$0xff]
      %v1861 = vld [vmem:[%s769 + $0x62] sm:$0xff]
      %v1862 = vld [vmem:[%s769 + $0x72] sm:$0xff]
      %v1863 = vpack.c.bf16 %v1856, %v1855
      %v1864 = vpack.c.bf16 %v1858, %v1857
      %v1865 = vpack.c.bf16 %v1860, %v1859
      %v1866 = vpack.c.bf16 %v1862, %v1861
      %v1867 = vld [vmem:[%s1435 + $0xc0] sm:$0xf]
      %v1868 = vld [vmem:[%s1435 + $0xc4] sm:$0xf]
      %v1869 = vld [vmem:[%s1435 + $0xc8] sm:$0xf]
      %v1870 = vld [vmem:[%s1435 + $0xcc] sm:$0xf]
      %v1871 = vld [vmem:[%s1435 + $0xd0] sm:$0xf]
      %v1872 = vld [vmem:[%s1435 + $0xd4] sm:$0xf]
      %v1873 = vld [vmem:[%s1435 + $0xd8] sm:$0xf]
      %v1874 = vld [vmem:[%s1435 + $0xdc] sm:$0xf]
      %v1875 = vld [vmem:[%s1435 + $0xe0] sm:$0xf]
      %v1876 = vld [vmem:[%s1435 + $0xe4] sm:$0xf]
      %v1877 = vld [vmem:[%s1435 + $0xe8] sm:$0xf]
      %v1878 = vld [vmem:[%s1435 + $0xec] sm:$0xf]
      %v1879 = vld [vmem:[%s1435 + $0xf0] sm:$0xf]
      %v1880 = vld [vmem:[%s1435 + $0xf4] sm:$0xf]
      %v1881 = vld [vmem:[%s1435 + $0xf8] sm:$0xf]
      %v1882 = vld [vmem:[%s1435 + $0xfc] sm:$0xf]
      %v1899 = vunpack.c.l.b16 %v1867
      %v1900 = vunpack.c.l.b16 %v1868
      %v1901 = vunpack.c.l.b16 %v1869
      %v1902 = vunpack.c.l.b16 %v1870
      %v1903 = vunpack.c.l.b16 %v1871
      %v1904 = vunpack.c.l.b16 %v1872
      %v1905 = vunpack.c.l.b16 %v1873
      %v1906 = vunpack.c.l.b16 %v1874
      %v1907 = vunpack.c.l.b16 %v1875
      %v1908 = vunpack.c.l.b16 %v1876
      %v1909 = vunpack.c.l.b16 %v1877
      %v1910 = vunpack.c.l.b16 %v1878
      %v1911 = vunpack.c.l.b16 %v1879
      %v1912 = vunpack.c.l.b16 %v1880
      %v1913 = vunpack.c.l.b16 %v1881
      %v1914 = vunpack.c.l.b16 %v1882
      %v1915 = vpack.c.b16 %v1900, %v1899
      %v1916 = vpack.c.b16 %v1902, %v1901
      %v1917 = vpack.c.b16 %v1904, %v1903
      %v1918 = vpack.c.b16 %v1906, %v1905
      %v1919 = vpack.c.b16 %v1908, %v1907
      %v1920 = vpack.c.b16 %v1910, %v1909
      %v1921 = vpack.c.b16 %v1912, %v1911
      %v1922 = vpack.c.b16 %v1914, %v1913
      %1931 = vmatprep.subr.bf16.mxu0 0
      %1932 = vmatpush1.bf16.msra.mxu0 %v1922
      %1933 = vmatprep.subr.bf16.mxu0 0
      %1934 = vmatpush1.bf16.msra.mxu0 %v1921
      %1935 = vmatprep.subr.bf16.mxu0 0
      %1936 = vmatpush1.bf16.msra.mxu0 %v1920
      %1937 = vmatprep.subr.bf16.mxu0 0
      %1938 = vmatpush1.bf16.msra.mxu0 %v1919
      %1939 = vmatprep.subr.bf16.mxu0 0
      %1940 = vmatpush1.bf16.msra.mxu0 %v1918
      %1941 = vmatprep.subr.bf16.mxu0 0
      %1942 = vmatpush1.bf16.msra.mxu0 %v1917
      %1943 = vmatprep.subr.bf16.mxu0 0
      %1944 = vmatpush1.bf16.msra.mxu0 %v1916
      %1945 = vmatprep.subr.bf16.mxu0 0
      %1946 = vmatpush1.bf16.msra.mxu0 %v1915
      %1947 = vmatprep.subr.bf16.mxu0 0
      %1948 = vmatpush2.bf16.msra.mxu0 0
      %1949 = vmatprep.subr.bf16.mxu0 0
      %1950 = vmatpush2.bf16.msra.mxu0 0
      %1951 = vmatprep.subr.bf16.mxu0 0
      %1952 = vmatpush2.bf16.msra.mxu0 0
      %1953 = vmatprep.subr.bf16.mxu0 0
      %1954 = vmatpush2.bf16.msra.mxu0 0
      %1955 = vmatprep.subr.bf16.mxu0 0
      %1956 = vmatpush2.bf16.msra.mxu0 0
      %1957 = vmatprep.subr.bf16.mxu0 0
      %1958 = vmatpush2.bf16.msra.mxu0 0
      %1959 = vmatprep.subr.bf16.mxu0 0
      %1960 = vmatpush2.bf16.msra.mxu0 0
      %1961 = vmatprep.subr.bf16.mxu0 0
      %1962 = vmatpush2.bf16.msra.mxu0 0
      %1963 = vmatprep.mubr.bf16.mxu0 0
      %1964 = vmatmul.mubr.bf16.gmra.mxu0 %v1863
      %v1965 = vpop.f32.mrf.mxu0
      %v1966 = vadd.f32 0.0, %v1965
      %v1967 = vpop.f32.mrf.mxu0
      %v1968 = vpop.f32.mrf.mxu0
      %v1969 = vadd.f32 0.0, %v1968
      %v1970 = vpop.f32.mrf.mxu0
      %1971 = vmatprep.mubr.bf16.mxu0 0
      %1972 = vmatmul.mubr.bf16.gmra.mxu0 %v1864
      %v1973 = vpop.f32.mrf.mxu0
      %v1974 = vadd.f32 0.0, %v1973
      %v1975 = vpop.f32.mrf.mxu0
      %v1976 = vpop.f32.mrf.mxu0
      %v1977 = vadd.f32 0.0, %v1976
      %v1978 = vpop.f32.mrf.mxu0
      %1979 = vmatprep.mubr.bf16.mxu0 0
      %1980 = vmatmul.mubr.bf16.gmra.mxu0 %v1865
      %v1981 = vpop.f32.mrf.mxu0
      %v1982 = vadd.f32 0.0, %v1981
      %v1983 = vpop.f32.mrf.mxu0
      %v1984 = vpop.f32.mrf.mxu0
      %v1985 = vadd.f32 0.0, %v1984
      %v1986 = vpop.f32.mrf.mxu0
      %1987 = vmatprep.mubr.bf16.mxu0 0
      %1988 = vmatmul.mubr.bf16.gmra.mxu0 %v1866
      %v1989 = vpop.f32.mrf.mxu0
      %v1990 = vadd.f32 0.0, %v1989
      %v1991 = vpop.f32.mrf.mxu0
      %v1992 = vpop.f32.mrf.mxu0
      %v1993 = vadd.f32 0.0, %v1992
      %v1994 = vpop.f32.mrf.mxu0
      %1995 = vdwg.mxu0
      %v1996 = vadd.f32 %v1847, %v1966
      %v1997 = vadd.f32 %v1848, %v1969
      %v1998 = vadd.f32 %v1849, %v1974
      %v1999 = vadd.f32 %v1850, %v1977
      %v2000 = vadd.f32 %v1851, %v1982
      %v2001 = vadd.f32 %v1852, %v1985
      %v2002 = vadd.f32 %v1853, %v1990
      %v2003 = vadd.f32 %v1854, %v1993
      %v2004 = vadd.f32 %v1996, %v1363
      %v2005 = vadd.f32 %v1997, %v1363
      %v2006 = vadd.f32 %v1998, %v1363
      %v2007 = vadd.f32 %v1999, %v1363
      %v2008 = vadd.f32 %v2000, %v1363
      %v2009 = vadd.f32 %v2001, %v1363
      %v2010 = vadd.f32 %v2002, %v1363
      %v2011 = vadd.f32 %v2003, %v1363
      %s2012 = scalar_lea.vmem %s224, 64
      %2013 = vst.msk [vmem:[%s2012] sm:$0xff] %vm1373, %v2004
      %2014 = vst.msk [vmem:[%s2012 + $0x8] sm:$0xff] %vm1373, %v2005
      %2015 = vst.msk [vmem:[%s2012 + $0x10] sm:$0xff] %vm1373, %v2006
      %2016 = vst.msk [vmem:[%s2012 + $0x18] sm:$0xff] %vm1373, %v2007
      %2017 = vst.msk [vmem:[%s2012 + $0x20] sm:$0xff] %vm1373, %v2008
      %2018 = vst.msk [vmem:[%s2012 + $0x28] sm:$0xff] %vm1373, %v2009
      %2019 = vst.msk [vmem:[%s2012 + $0x30] sm:$0xff] %vm1373, %v2010
      %2020 = vst.msk [vmem:[%s2012 + $0x38] sm:$0xff] %vm1373, %v2011
      %2029 = vrot.lane.b32.xlu0 %v226, 124
      %v2030 = vpop.permute.xlu0 %2029
      %2031 = vrot.lane.b32.xlu0 %v227, 124
      %v2032 = vpop.permute.xlu0 %2031
      %2033 = vrot.lane.b32.xlu0 %v228, 124
      %v2034 = vpop.permute.xlu0 %2033
      %2035 = vrot.lane.b32.xlu0 %v229, 124
      %v2036 = vpop.permute.xlu0 %2035
      %2037 = vrot.lane.b32.xlu0 %v230, 124
      %v2038 = vpop.permute.xlu0 %2037
      %2039 = vrot.lane.b32.xlu0 %v231, 124
      %v2040 = vpop.permute.xlu0 %2039
      %2041 = vrot.lane.b32.xlu0 %v232, 124
      %v2042 = vpop.permute.xlu0 %2041
      %2043 = vrot.lane.b32.xlu0 %v233, 124
      %v2044 = vpop.permute.xlu0 %2043
      %2045 = vrot.lane.b32.xlu0 %v234, 124
      %v2046 = vpop.permute.xlu0 %2045
      %2047 = vrot.lane.b32.xlu0 %v235, 124
      %v2048 = vpop.permute.xlu0 %2047
      %2049 = vrot.lane.b32.xlu0 %v236, 124
      %v2050 = vpop.permute.xlu0 %2049
      %2051 = vrot.lane.b32.xlu0 %v237, 124
      %v2052 = vpop.permute.xlu0 %2051
      %2053 = vrot.lane.b32.xlu0 %v238, 124
      %v2054 = vpop.permute.xlu0 %2053
      %2055 = vrot.lane.b32.xlu0 %v239, 124
      %v2056 = vpop.permute.xlu0 %2055
      %2057 = vrot.lane.b32.xlu0 %v240, 124
      %v2058 = vpop.permute.xlu0 %2057
      %2059 = vrot.lane.b32.xlu0 %v241, 124
      %v2060 = vpop.permute.xlu0 %2059
      %vm2077 = vcmask 64545
      %2078 = vst.msk [vmem:[%s2012 - $0x1] sm:$0xfe] %vm2077, %v2030
      %vm2079 = vcmask 57376
      %2080 = vst.msk [vmem:[%s2012 + $0x7] sm:$0x1] %vm2079, %v2032
      %2081 = vst.msk [vmem:[%s2012 + $0x7] sm:$0xfe] %vm2077, %v2034
      %2082 = vst.msk [vmem:[%s2012 + $0xf] sm:$0x1] %vm2079, %v2036
      %2083 = vst.msk [vmem:[%s2012 + $0xf] sm:$0xfe] %vm2077, %v2038
      %2084 = vst.msk [vmem:[%s2012 + $0x17] sm:$0x1] %vm2079, %v2040
      %2085 = vst.msk [vmem:[%s2012 + $0x17] sm:$0xfe] %vm2077, %v2042
      %2086 = vst.msk [vmem:[%s2012 + $0x1f] sm:$0x1] %vm2079, %v2044
      %2087 = vst.msk [vmem:[%s2012 + $0x1f] sm:$0xfe] %vm2077, %v2046
      %2088 = vst.msk [vmem:[%s2012 + $0x27] sm:$0x1] %vm2079, %v2048
      %2089 = vst.msk [vmem:[%s2012 + $0x27] sm:$0xfe] %vm2077, %v2050
      %2090 = vst.msk [vmem:[%s2012 + $0x2f] sm:$0x1] %vm2079, %v2052
      %2091 = vst.msk [vmem:[%s2012 + $0x2f] sm:$0xfe] %vm2077, %v2054
      %2092 = vst.msk [vmem:[%s2012 + $0x37] sm:$0x1] %vm2079, %v2056
      %2093 = vst.msk [vmem:[%s2012 + $0x37] sm:$0xfe] %vm2077, %v2058
      %2094 = vst.msk [vmem:[%s2012 + $0x3f] sm:$0x1] %vm2079, %v2060
      %v2095 = vld [vmem:[%s769] sm:$0xff]
      %v2096 = vld [vmem:[%s769 + $0x10] sm:$0xff]
      %v2097 = vld [vmem:[%s769 + $0x20] sm:$0xff]
      %v2098 = vld [vmem:[%s769 + $0x30] sm:$0xff]
      %v2099 = vld [vmem:[%s769 + $0x40] sm:$0xff]
      %v2100 = vld [vmem:[%s769 + $0x50] sm:$0xff]
      %v2101 = vld [vmem:[%s769 + $0x60] sm:$0xff]
      %v2102 = vld [vmem:[%s769 + $0x70] sm:$0xff]
      %v2103 = vpack.c.bf16 %v2096, %v2095
      %v2104 = vpack.c.bf16 %v2098, %v2097
      %v2105 = vpack.c.bf16 %v2100, %v2099
      %v2106 = vpack.c.bf16 %v2102, %v2101
      %s2107 = scalar_lea.vmem %s3, 512
      %v2108 = vld [vmem:[%s2107] sm:$0xf]
      %v2109 = vld [vmem:[%s2107 + $0x4] sm:$0xf]
      %v2110 = vld [vmem:[%s2107 + $0x8] sm:$0xf]
      %v2111 = vld [vmem:[%s2107 + $0xc] sm:$0xf]
      %v2112 = vld [vmem:[%s2107 + $0x10] sm:$0xf]
      %v2113 = vld [vmem:[%s2107 + $0x14] sm:$0xf]
      %v2114 = vld [vmem:[%s2107 + $0x18] sm:$0xf]
      %v2115 = vld [vmem:[%s2107 + $0x1c] sm:$0xf]
      %v2116 = vld [vmem:[%s2107 + $0x20] sm:$0xf]
      %v2117 = vld [vmem:[%s2107 + $0x24] sm:$0xf]
      %v2118 = vld [vmem:[%s2107 + $0x28] sm:$0xf]
      %v2119 = vld [vmem:[%s2107 + $0x2c] sm:$0xf]
      %v2120 = vld [vmem:[%s2107 + $0x30] sm:$0xf]
      %v2121 = vld [vmem:[%s2107 + $0x34] sm:$0xf]
      %v2122 = vld [vmem:[%s2107 + $0x38] sm:$0xf]
      %v2123 = vld [vmem:[%s2107 + $0x3c] sm:$0xf]
      %v2124 = vld [vmem:[%s769 + $0x1] sm:$0xff]
      %v2125 = vld [vmem:[%s769 + $0x11] sm:$0xff]
      %v2126 = vld [vmem:[%s769 + $0x21] sm:$0xff]
      %v2127 = vld [vmem:[%s769 + $0x31] sm:$0xff]
      %v2128 = vld [vmem:[%s769 + $0x41] sm:$0xff]
      %v2129 = vld [vmem:[%s769 + $0x51] sm:$0xff]
      %v2130 = vld [vmem:[%s769 + $0x61] sm:$0xff]
      %v2131 = vld [vmem:[%s769 + $0x71] sm:$0xff]
      %v2132 = vpack.c.bf16 %v2125, %v2124
      %v2133 = vpack.c.bf16 %v2127, %v2126
      %v2134 = vpack.c.bf16 %v2129, %v2128
      %v2135 = vpack.c.bf16 %v2131, %v2130
      %v2136 = vld [vmem:[%s2107 + $0x40] sm:$0xf]
      %v2137 = vld [vmem:[%s2107 + $0x44] sm:$0xf]
      %v2138 = vld [vmem:[%s2107 + $0x48] sm:$0xf]
      %v2139 = vld [vmem:[%s2107 + $0x4c] sm:$0xf]
      %v2140 = vld [vmem:[%s2107 + $0x50] sm:$0xf]
      %v2141 = vld [vmem:[%s2107 + $0x54] sm:$0xf]
      %v2142 = vld [vmem:[%s2107 + $0x58] sm:$0xf]
      %v2143 = vld [vmem:[%s2107 + $0x5c] sm:$0xf]
      %v2144 = vld [vmem:[%s2107 + $0x60] sm:$0xf]
      %v2145 = vld [vmem:[%s2107 + $0x64] sm:$0xf]
      %v2146 = vld [vmem:[%s2107 + $0x68] sm:$0xf]
      %v2147 = vld [vmem:[%s2107 + $0x6c] sm:$0xf]
      %v2148 = vld [vmem:[%s2107 + $0x70] sm:$0xf]
      %v2149 = vld [vmem:[%s2107 + $0x74] sm:$0xf]
      %v2150 = vld [vmem:[%s2107 + $0x78] sm:$0xf]
      %v2151 = vld [vmem:[%s2107 + $0x7c] sm:$0xf]
      %v2168 = vunpack.c.l.b16 %v2136
      %v2169 = vunpack.c.l.b16 %v2137
      %v2170 = vunpack.c.l.b16 %v2138
      %v2171 = vunpack.c.l.b16 %v2139
      %v2172 = vunpack.c.l.b16 %v2140
      %v2173 = vunpack.c.l.b16 %v2141
      %v2174 = vunpack.c.l.b16 %v2142
      %v2175 = vunpack.c.l.b16 %v2143
      %v2176 = vunpack.c.l.b16 %v2144
      %v2177 = vunpack.c.l.b16 %v2145
      %v2178 = vunpack.c.l.b16 %v2146
      %v2179 = vunpack.c.l.b16 %v2147
      %v2180 = vunpack.c.l.b16 %v2148
      %v2181 = vunpack.c.l.b16 %v2149
      %v2182 = vunpack.c.l.b16 %v2150
      %v2183 = vunpack.c.l.b16 %v2151
      %v2184 = vpack.c.b16 %v2169, %v2168
      %v2185 = vpack.c.b16 %v2171, %v2170
      %v2186 = vpack.c.b16 %v2173, %v2172
      %v2187 = vpack.c.b16 %v2175, %v2174
      %v2188 = vpack.c.b16 %v2177, %v2176
      %v2189 = vpack.c.b16 %v2179, %v2178
      %v2190 = vpack.c.b16 %v2181, %v2180
      %v2191 = vpack.c.b16 %v2183, %v2182
      %2200 = vmatprep.subr.bf16.mxu0 0
      %2201 = vmatpush1.bf16.msra.mxu0 %v2191
      %2202 = vmatprep.subr.bf16.mxu0 0
      %2203 = vmatpush1.bf16.msra.mxu0 %v2190
      %2204 = vmatprep.subr.bf16.mxu0 0
      %2205 = vmatpush1.bf16.msra.mxu0 %v2189
      %2206 = vmatprep.subr.bf16.mxu0 0
      %2207 = vmatpush1.bf16.msra.mxu0 %v2188
      %2208 = vmatprep.subr.bf16.mxu0 0
      %2209 = vmatpush1.bf16.msra.mxu0 %v2187
      %2210 = vmatprep.subr.bf16.mxu0 0
      %2211 = vmatpush1.bf16.msra.mxu0 %v2186
      %2212 = vmatprep.subr.bf16.mxu0 0
      %2213 = vmatpush1.bf16.msra.mxu0 %v2185
      %2214 = vmatprep.subr.bf16.mxu0 0
      %2215 = vmatpush1.bf16.msra.mxu0 %v2184
      %2216 = vmatprep.subr.bf16.mxu0 0
      %2217 = vmatpush2.bf16.msra.mxu0 0
      %2218 = vmatprep.subr.bf16.mxu0 0
      %2219 = vmatpush2.bf16.msra.mxu0 0
      %2220 = vmatprep.subr.bf16.mxu0 0
      %2221 = vmatpush2.bf16.msra.mxu0 0
      %2222 = vmatprep.subr.bf16.mxu0 0
      %2223 = vmatpush2.bf16.msra.mxu0 0
      %2224 = vmatprep.subr.bf16.mxu0 0
      %2225 = vmatpush2.bf16.msra.mxu0 0
      %2226 = vmatprep.subr.bf16.mxu0 0
      %2227 = vmatpush2.bf16.msra.mxu0 0
      %2228 = vmatprep.subr.bf16.mxu0 0
      %2229 = vmatpush2.bf16.msra.mxu0 0
      %2230 = vmatprep.subr.bf16.mxu0 0
      %2231 = vmatpush2.bf16.msra.mxu0 0
      %2232 = vmatprep.mubr.bf16.mxu0 0
      %2233 = vmatmul.mubr.bf16.gmra.mxu0 %v2132
      %v2234 = vpop.f32.mrf.mxu0
      %v2235 = vadd.f32 0.0, %v2234
      %v2236 = vpop.f32.mrf.mxu0
      %v2237 = vpop.f32.mrf.mxu0
      %v2238 = vadd.f32 0.0, %v2237
      %v2239 = vpop.f32.mrf.mxu0
      %2240 = vmatprep.mubr.bf16.mxu0 0
      %2241 = vmatmul.mubr.bf16.gmra.mxu0 %v2133
      %v2242 = vpop.f32.mrf.mxu0
      %v2243 = vadd.f32 0.0, %v2242
      %v2244 = vpop.f32.mrf.mxu0
      %v2245 = vpop.f32.mrf.mxu0
      %v2246 = vadd.f32 0.0, %v2245
      %v2247 = vpop.f32.mrf.mxu0
      %2248 = vmatprep.mubr.bf16.mxu0 0
      %2249 = vmatmul.mubr.bf16.gmra.mxu0 %v2134
      %v2250 = vpop.f32.mrf.mxu0
      %v2251 = vadd.f32 0.0, %v2250
      %v2252 = vpop.f32.mrf.mxu0
      %v2253 = vpop.f32.mrf.mxu0
      %v2254 = vadd.f32 0.0, %v2253
      %v2255 = vpop.f32.mrf.mxu0
      %2256 = vmatprep.mubr.bf16.mxu0 0
      %2257 = vmatmul.mubr.bf16.gmra.mxu0 %v2135
      %v2258 = vpop.f32.mrf.mxu0
      %v2259 = vadd.f32 0.0, %v2258
      %v2260 = vpop.f32.mrf.mxu0
      %v2261 = vpop.f32.mrf.mxu0
      %v2262 = vadd.f32 0.0, %v2261
      %v2263 = vpop.f32.mrf.mxu0
      %2264 = vdwg.mxu0
      %v2281 = vunpack.c.l.b16 %v2108
      %v2282 = vunpack.c.l.b16 %v2109
      %v2283 = vunpack.c.l.b16 %v2110
      %v2284 = vunpack.c.l.b16 %v2111
      %v2285 = vunpack.c.l.b16 %v2112
      %v2286 = vunpack.c.l.b16 %v2113
      %v2287 = vunpack.c.l.b16 %v2114
      %v2288 = vunpack.c.l.b16 %v2115
      %v2289 = vunpack.c.l.b16 %v2116
      %v2290 = vunpack.c.l.b16 %v2117
      %v2291 = vunpack.c.l.b16 %v2118
      %v2292 = vunpack.c.l.b16 %v2119
      %v2293 = vunpack.c.l.b16 %v2120
      %v2294 = vunpack.c.l.b16 %v2121
      %v2295 = vunpack.c.l.b16 %v2122
      %v2296 = vunpack.c.l.b16 %v2123
      %v2297 = vpack.c.b16 %v2282, %v2281
      %v2298 = vpack.c.b16 %v2284, %v2283
      %v2299 = vpack.c.b16 %v2286, %v2285
      %v2300 = vpack.c.b16 %v2288, %v2287
      %v2301 = vpack.c.b16 %v2290, %v2289
      %v2302 = vpack.c.b16 %v2292, %v2291
      %v2303 = vpack.c.b16 %v2294, %v2293
      %v2304 = vpack.c.b16 %v2296, %v2295
      %2313 = vmatprep.subr.bf16.mxu0 0
      %2314 = vmatpush1.bf16.msra.mxu0 %v2304
      %2315 = vmatprep.subr.bf16.mxu0 0
      %2316 = vmatpush1.bf16.msra.mxu0 %v2303
      %2317 = vmatprep.subr.bf16.mxu0 0
      %2318 = vmatpush1.bf16.msra.mxu0 %v2302
      %2319 = vmatprep.subr.bf16.mxu0 0
      %2320 = vmatpush1.bf16.msra.mxu0 %v2301
      %2321 = vmatprep.subr.bf16.mxu0 0
      %2322 = vmatpush1.bf16.msra.mxu0 %v2300
      %2323 = vmatprep.subr.bf16.mxu0 0
      %2324 = vmatpush1.bf16.msra.mxu0 %v2299
      %2325 = vmatprep.subr.bf16.mxu0 0
      %2326 = vmatpush1.bf16.msra.mxu0 %v2298
      %2327 = vmatprep.subr.bf16.mxu0 0
      %2328 = vmatpush1.bf16.msra.mxu0 %v2297
      %2329 = vmatprep.subr.bf16.mxu0 0
      %2330 = vmatpush2.bf16.msra.mxu0 0
      %2331 = vmatprep.subr.bf16.mxu0 0
      %2332 = vmatpush2.bf16.msra.mxu0 0
      %2333 = vmatprep.subr.bf16.mxu0 0
      %2334 = vmatpush2.bf16.msra.mxu0 0
      %2335 = vmatprep.subr.bf16.mxu0 0
      %2336 = vmatpush2.bf16.msra.mxu0 0
      %2337 = vmatprep.subr.bf16.mxu0 0
      %2338 = vmatpush2.bf16.msra.mxu0 0
      %2339 = vmatprep.subr.bf16.mxu0 0
      %2340 = vmatpush2.bf16.msra.mxu0 0
      %2341 = vmatprep.subr.bf16.mxu0 0
      %2342 = vmatpush2.bf16.msra.mxu0 0
      %2343 = vmatprep.subr.bf16.mxu0 0
      %2344 = vmatpush2.bf16.msra.mxu0 0
      %2345 = vmatprep.mubr.bf16.mxu0 0
      %2346 = vmatmul.mubr.bf16.gmra.mxu0 %v2103
      %v2347 = vpop.f32.mrf.mxu0
      %v2348 = vadd.f32 %v2235, %v2347
      %v2349 = vpop.f32.mrf.mxu0
      %v2350 = vpop.f32.mrf.mxu0
      %v2351 = vadd.f32 %v2238, %v2350
      %v2352 = vpop.f32.mrf.mxu0
      %2353 = vmatprep.mubr.bf16.mxu0 0
      %2354 = vmatmul.mubr.bf16.gmra.mxu0 %v2104
      %v2355 = vpop.f32.mrf.mxu0
      %v2356 = vadd.f32 %v2243, %v2355
      %v2357 = vpop.f32.mrf.mxu0
      %v2358 = vpop.f32.mrf.mxu0
      %v2359 = vadd.f32 %v2246, %v2358
      %v2360 = vpop.f32.mrf.mxu0
      %2361 = vmatprep.mubr.bf16.mxu0 0
      %2362 = vmatmul.mubr.bf16.gmra.mxu0 %v2105
      %v2363 = vpop.f32.mrf.mxu0
      %v2364 = vadd.f32 %v2251, %v2363
      %v2365 = vpop.f32.mrf.mxu0
      %v2366 = vpop.f32.mrf.mxu0
      %v2367 = vadd.f32 %v2254, %v2366
      %v2368 = vpop.f32.mrf.mxu0
      %2369 = vmatprep.mubr.bf16.mxu0 0
      %2370 = vmatmul.mubr.bf16.gmra.mxu0 %v2106
      %v2371 = vpop.f32.mrf.mxu0
      %v2372 = vadd.f32 %v2259, %v2371
      %v2373 = vpop.f32.mrf.mxu0
      %v2374 = vpop.f32.mrf.mxu0
      %v2375 = vadd.f32 %v2262, %v2374
      %v2376 = vpop.f32.mrf.mxu0
      %2377 = vdwg.mxu0
      %s2378 = scalar_lea.vmem [#allocation2], 32
      %v2379 = vld [vmem:[%s2378] sm:$0xff]
      %v2380 = vld [vmem:[%s2378 + $0x10] sm:$0xff]
      %v2381 = vld [vmem:[%s2378 + $0x20] sm:$0xff]
      %v2382 = vld [vmem:[%s2378 + $0x30] sm:$0xff]
      %v2383 = vld [vmem:[%s2378 + $0x40] sm:$0xff]
      %v2384 = vld [vmem:[%s2378 + $0x50] sm:$0xff]
      %v2385 = vld [vmem:[%s2378 + $0x60] sm:$0xff]
      %v2386 = vld [vmem:[%s2378 + $0x70] sm:$0xff]
      %v2387 = vpack.c.bf16 %v2380, %v2379
      %v2388 = vpack.c.bf16 %v2382, %v2381
      %v2389 = vpack.c.bf16 %v2384, %v2383
      %v2390 = vpack.c.bf16 %v2386, %v2385
      %v2391 = vld [vmem:[%s2107 + $0x80] sm:$0xf]
      %v2392 = vld [vmem:[%s2107 + $0x84] sm:$0xf]
      %v2393 = vld [vmem:[%s2107 + $0x88] sm:$0xf]
      %v2394 = vld [vmem:[%s2107 + $0x8c] sm:$0xf]
      %v2395 = vld [vmem:[%s2107 + $0x90] sm:$0xf]
      %v2396 = vld [vmem:[%s2107 + $0x94] sm:$0xf]
      %v2397 = vld [vmem:[%s2107 + $0x98] sm:$0xf]
      %v2398 = vld [vmem:[%s2107 + $0x9c] sm:$0xf]
      %v2399 = vld [vmem:[%s2107 + $0xa0] sm:$0xf]
      %v2400 = vld [vmem:[%s2107 + $0xa4] sm:$0xf]
      %v2401 = vld [vmem:[%s2107 + $0xa8] sm:$0xf]
      %v2402 = vld [vmem:[%s2107 + $0xac] sm:$0xf]
      %v2403 = vld [vmem:[%s2107 + $0xb0] sm:$0xf]
      %v2404 = vld [vmem:[%s2107 + $0xb4] sm:$0xf]
      %v2405 = vld [vmem:[%s2107 + $0xb8] sm:$0xf]
      %v2406 = vld [vmem:[%s2107 + $0xbc] sm:$0xf]
      %v2423 = vunpack.c.l.b16 %v2391
      %v2424 = vunpack.c.l.b16 %v2392
      %v2425 = vunpack.c.l.b16 %v2393
      %v2426 = vunpack.c.l.b16 %v2394
      %v2427 = vunpack.c.l.b16 %v2395
      %v2428 = vunpack.c.l.b16 %v2396
      %v2429 = vunpack.c.l.b16 %v2397
      %v2430 = vunpack.c.l.b16 %v2398
      %v2431 = vunpack.c.l.b16 %v2399
      %v2432 = vunpack.c.l.b16 %v2400
      %v2433 = vunpack.c.l.b16 %v2401
      %v2434 = vunpack.c.l.b16 %v2402
      %v2435 = vunpack.c.l.b16 %v2403
      %v2436 = vunpack.c.l.b16 %v2404
      %v2437 = vunpack.c.l.b16 %v2405
      %v2438 = vunpack.c.l.b16 %v2406
      %v2439 = vpack.c.b16 %v2424, %v2423
      %v2440 = vpack.c.b16 %v2426, %v2425
      %v2441 = vpack.c.b16 %v2428, %v2427
      %v2442 = vpack.c.b16 %v2430, %v2429
      %v2443 = vpack.c.b16 %v2432, %v2431
      %v2444 = vpack.c.b16 %v2434, %v2433
      %v2445 = vpack.c.b16 %v2436, %v2435
      %v2446 = vpack.c.b16 %v2438, %v2437
      %2455 = vmatprep.subr.bf16.mxu0 0
      %2456 = vmatpush1.bf16.msra.mxu0 %v2446
      %2457 = vmatprep.subr.bf16.mxu0 0
      %2458 = vmatpush1.bf16.msra.mxu0 %v2445
      %2459 = vmatprep.subr.bf16.mxu0 0
      %2460 = vmatpush1.bf16.msra.mxu0 %v2444
      %2461 = vmatprep.subr.bf16.mxu0 0
      %2462 = vmatpush1.bf16.msra.mxu0 %v2443
      %2463 = vmatprep.subr.bf16.mxu0 0
      %2464 = vmatpush1.bf16.msra.mxu0 %v2442
      %2465 = vmatprep.subr.bf16.mxu0 0
      %2466 = vmatpush1.bf16.msra.mxu0 %v2441
      %2467 = vmatprep.subr.bf16.mxu0 0
      %2468 = vmatpush1.bf16.msra.mxu0 %v2440
      %2469 = vmatprep.subr.bf16.mxu0 0
      %2470 = vmatpush1.bf16.msra.mxu0 %v2439
      %2471 = vmatprep.subr.bf16.mxu0 0
      %2472 = vmatpush2.bf16.msra.mxu0 0
      %2473 = vmatprep.subr.bf16.mxu0 0
      %2474 = vmatpush2.bf16.msra.mxu0 0
      %2475 = vmatprep.subr.bf16.mxu0 0
      %2476 = vmatpush2.bf16.msra.mxu0 0
      %2477 = vmatprep.subr.bf16.mxu0 0
      %2478 = vmatpush2.bf16.msra.mxu0 0
      %2479 = vmatprep.subr.bf16.mxu0 0
      %2480 = vmatpush2.bf16.msra.mxu0 0
      %2481 = vmatprep.subr.bf16.mxu0 0
      %2482 = vmatpush2.bf16.msra.mxu0 0
      %2483 = vmatprep.subr.bf16.mxu0 0
      %2484 = vmatpush2.bf16.msra.mxu0 0
      %2485 = vmatprep.subr.bf16.mxu0 0
      %2486 = vmatpush2.bf16.msra.mxu0 0
      %2487 = vmatprep.mubr.bf16.mxu0 0
      %2488 = vmatmul.mubr.bf16.gmra.mxu0 %v2387
      %v2489 = vpop.f32.mrf.mxu0
      %v2490 = vadd.f32 0.0, %v2489
      %v2491 = vpop.f32.mrf.mxu0
      %v2492 = vpop.f32.mrf.mxu0
      %v2493 = vadd.f32 0.0, %v2492
      %v2494 = vpop.f32.mrf.mxu0
      %2495 = vmatprep.mubr.bf16.mxu0 0
      %2496 = vmatmul.mubr.bf16.gmra.mxu0 %v2388
      %v2497 = vpop.f32.mrf.mxu0
      %v2498 = vadd.f32 0.0, %v2497
      %v2499 = vpop.f32.mrf.mxu0
      %v2500 = vpop.f32.mrf.mxu0
      %v2501 = vadd.f32 0.0, %v2500
      %v2502 = vpop.f32.mrf.mxu0
      %2503 = vmatprep.mubr.bf16.mxu0 0
      %2504 = vmatmul.mubr.bf16.gmra.mxu0 %v2389
      %v2505 = vpop.f32.mrf.mxu0
      %v2506 = vadd.f32 0.0, %v2505
      %v2507 = vpop.f32.mrf.mxu0
      %v2508 = vpop.f32.mrf.mxu0
      %v2509 = vadd.f32 0.0, %v2508
      %v2510 = vpop.f32.mrf.mxu0
      %2511 = vmatprep.mubr.bf16.mxu0 0
      %2512 = vmatmul.mubr.bf16.gmra.mxu0 %v2390
      %v2513 = vpop.f32.mrf.mxu0
      %v2514 = vadd.f32 0.0, %v2513
      %v2515 = vpop.f32.mrf.mxu0
      %v2516 = vpop.f32.mrf.mxu0
      %v2517 = vadd.f32 0.0, %v2516
      %v2518 = vpop.f32.mrf.mxu0
      %2519 = vdwg.mxu0
      %v2520 = vadd.f32 %v2348, %v2490
      %v2521 = vadd.f32 %v2351, %v2493
      %v2522 = vadd.f32 %v2356, %v2498
      %v2523 = vadd.f32 %v2359, %v2501
      %v2524 = vadd.f32 %v2364, %v2506
      %v2525 = vadd.f32 %v2367, %v2509
      %v2526 = vadd.f32 %v2372, %v2514
      %v2527 = vadd.f32 %v2375, %v2517
      %v2528 = vld [vmem:[%s2378 + $0x1] sm:$0xff]
      %v2529 = vld [vmem:[%s2378 + $0x11] sm:$0xff]
      %v2530 = vld [vmem:[%s2378 + $0x21] sm:$0xff]
      %v2531 = vld [vmem:[%s2378 + $0x31] sm:$0xff]
      %v2532 = vld [vmem:[%s2378 + $0x41] sm:$0xff]
      %v2533 = vld [vmem:[%s2378 + $0x51] sm:$0xff]
      %v2534 = vld [vmem:[%s2378 + $0x61] sm:$0xff]
      %v2535 = vld [vmem:[%s2378 + $0x71] sm:$0xff]
      %v2536 = vpack.c.bf16 %v2529, %v2528
      %v2537 = vpack.c.bf16 %v2531, %v2530
      %v2538 = vpack.c.bf16 %v2533, %v2532
      %v2539 = vpack.c.bf16 %v2535, %v2534
      %v2540 = vld [vmem:[%s2107 + $0xc0] sm:$0xf]
      %v2541 = vld [vmem:[%s2107 + $0xc4] sm:$0xf]
      %v2542 = vld [vmem:[%s2107 + $0xc8] sm:$0xf]
      %v2543 = vld [vmem:[%s2107 + $0xcc] sm:$0xf]
      %v2544 = vld [vmem:[%s2107 + $0xd0] sm:$0xf]
      %v2545 = vld [vmem:[%s2107 + $0xd4] sm:$0xf]
      %v2546 = vld [vmem:[%s2107 + $0xd8] sm:$0xf]
      %v2547 = vld [vmem:[%s2107 + $0xdc] sm:$0xf]
      %v2548 = vld [vmem:[%s2107 + $0xe0] sm:$0xf]
      %v2549 = vld [vmem:[%s2107 + $0xe4] sm:$0xf]
      %v2550 = vld [vmem:[%s2107 + $0xe8] sm:$0xf]
      %v2551 = vld [vmem:[%s2107 + $0xec] sm:$0xf]
      %v2552 = vld [vmem:[%s2107 + $0xf0] sm:$0xf]
      %v2553 = vld [vmem:[%s2107 + $0xf4] sm:$0xf]
      %v2554 = vld [vmem:[%s2107 + $0xf8] sm:$0xf]
      %v2555 = vld [vmem:[%s2107 + $0xfc] sm:$0xf]
      %v2572 = vunpack.c.l.b16 %v2540
      %v2573 = vunpack.c.l.b16 %v2541
      %v2574 = vunpack.c.l.b16 %v2542
      %v2575 = vunpack.c.l.b16 %v2543
      %v2576 = vunpack.c.l.b16 %v2544
      %v2577 = vunpack.c.l.b16 %v2545
      %v2578 = vunpack.c.l.b16 %v2546
      %v2579 = vunpack.c.l.b16 %v2547
      %v2580 = vunpack.c.l.b16 %v2548
      %v2581 = vunpack.c.l.b16 %v2549
      %v2582 = vunpack.c.l.b16 %v2550
      %v2583 = vunpack.c.l.b16 %v2551
      %v2584 = vunpack.c.l.b16 %v2552
      %v2585 = vunpack.c.l.b16 %v2553
      %v2586 = vunpack.c.l.b16 %v2554
      %v2587 = vunpack.c.l.b16 %v2555
      %v2588 = vpack.c.b16 %v2573, %v2572
      %v2589 = vpack.c.b16 %v2575, %v2574
      %v2590 = vpack.c.b16 %v2577, %v2576
      %v2591 = vpack.c.b16 %v2579, %v2578
      %v2592 = vpack.c.b16 %v2581, %v2580
      %v2593 = vpack.c.b16 %v2583, %v2582
      %v2594 = vpack.c.b16 %v2585, %v2584
      %v2595 = vpack.c.b16 %v2587, %v2586
      %2604 = vmatprep.subr.bf16.mxu0 0
      %2605 = vmatpush1.bf16.msra.mxu0 %v2595
      %2606 = vmatprep.subr.bf16.mxu0 0
      %2607 = vmatpush1.bf16.msra.mxu0 %v2594
      %2608 = vmatprep.subr.bf16.mxu0 0
      %2609 = vmatpush1.bf16.msra.mxu0 %v2593
      %2610 = vmatprep.subr.bf16.mxu0 0
      %2611 = vmatpush1.bf16.msra.mxu0 %v2592
      %2612 = vmatprep.subr.bf16.mxu0 0
      %2613 = vmatpush1.bf16.msra.mxu0 %v2591
      %2614 = vmatprep.subr.bf16.mxu0 0
      %2615 = vmatpush1.bf16.msra.mxu0 %v2590
      %2616 = vmatprep.subr.bf16.mxu0 0
      %2617 = vmatpush1.bf16.msra.mxu0 %v2589
      %2618 = vmatprep.subr.bf16.mxu0 0
      %2619 = vmatpush1.bf16.msra.mxu0 %v2588
      %2620 = vmatprep.subr.bf16.mxu0 0
      %2621 = vmatpush2.bf16.msra.mxu0 0
      %2622 = vmatprep.subr.bf16.mxu0 0
      %2623 = vmatpush2.bf16.msra.mxu0 0
      %2624 = vmatprep.subr.bf16.mxu0 0
      %2625 = vmatpush2.bf16.msra.mxu0 0
      %2626 = vmatprep.subr.bf16.mxu0 0
      %2627 = vmatpush2.bf16.msra.mxu0 0
      %2628 = vmatprep.subr.bf16.mxu0 0
      %2629 = vmatpush2.bf16.msra.mxu0 0
      %2630 = vmatprep.subr.bf16.mxu0 0
      %2631 = vmatpush2.bf16.msra.mxu0 0
      %2632 = vmatprep.subr.bf16.mxu0 0
      %2633 = vmatpush2.bf16.msra.mxu0 0
      %2634 = vmatprep.subr.bf16.mxu0 0
      %2635 = vmatpush2.bf16.msra.mxu0 0
      %2636 = vmatprep.mubr.bf16.mxu0 0
      %2637 = vmatmul.mubr.bf16.gmra.mxu0 %v2536
      %v2638 = vpop.f32.mrf.mxu0
      %v2639 = vadd.f32 0.0, %v2638
      %v2640 = vpop.f32.mrf.mxu0
      %v2641 = vpop.f32.mrf.mxu0
      %v2642 = vadd.f32 0.0, %v2641
      %v2643 = vpop.f32.mrf.mxu0
      %2644 = vmatprep.mubr.bf16.mxu0 0
      %2645 = vmatmul.mubr.bf16.gmra.mxu0 %v2537
      %v2646 = vpop.f32.mrf.mxu0
      %v2647 = vadd.f32 0.0, %v2646
      %v2648 = vpop.f32.mrf.mxu0
      %v2649 = vpop.f32.mrf.mxu0
      %v2650 = vadd.f32 0.0, %v2649
      %v2651 = vpop.f32.mrf.mxu0
      %2652 = vmatprep.mubr.bf16.mxu0 0
      %2653 = vmatmul.mubr.bf16.gmra.mxu0 %v2538
      %v2654 = vpop.f32.mrf.mxu0
      %v2655 = vadd.f32 0.0, %v2654
      %v2656 = vpop.f32.mrf.mxu0
      %v2657 = vpop.f32.mrf.mxu0
      %v2658 = vadd.f32 0.0, %v2657
      %v2659 = vpop.f32.mrf.mxu0
      %2660 = vmatprep.mubr.bf16.mxu0 0
      %2661 = vmatmul.mubr.bf16.gmra.mxu0 %v2539
      %v2662 = vpop.f32.mrf.mxu0
      %v2663 = vadd.f32 0.0, %v2662
      %v2664 = vpop.f32.mrf.mxu0
      %v2665 = vpop.f32.mrf.mxu0
      %v2666 = vadd.f32 0.0, %v2665
      %v2667 = vpop.f32.mrf.mxu0
      %2668 = vdwg.mxu0
      %v2669 = vadd.f32 %v2520, %v2639
      %v2670 = vadd.f32 %v2521, %v2642
      %v2671 = vadd.f32 %v2522, %v2647
      %v2672 = vadd.f32 %v2523, %v2650
      %v2673 = vadd.f32 %v2524, %v2655
      %v2674 = vadd.f32 %v2525, %v2658
      %v2675 = vadd.f32 %v2526, %v2663
      %v2676 = vadd.f32 %v2527, %v2666
      %v2677 = vadd.f32 %v2669, %v1363
      %v2678 = vadd.f32 %v2670, %v1363
      %v2679 = vadd.f32 %v2671, %v1363
      %v2680 = vadd.f32 %v2672, %v1363
      %v2681 = vadd.f32 %v2673, %v1363
      %v2682 = vadd.f32 %v2674, %v1363
      %v2683 = vadd.f32 %v2675, %v1363
      %v2684 = vadd.f32 %v2676, %v1363
      %s2685 = scalar_lea.vmem %s224, 128
      %2686 = vst.msk [vmem:[%s2685] sm:$0xff] %vm1373, %v2677
      %2687 = vst.msk [vmem:[%s2685 + $0x8] sm:$0xff] %vm1373, %v2678
      %2688 = vst.msk [vmem:[%s2685 + $0x10] sm:$0xff] %vm1373, %v2679
      %2689 = vst.msk [vmem:[%s2685 + $0x18] sm:$0xff] %vm1373, %v2680
      %2690 = vst.msk [vmem:[%s2685 + $0x20] sm:$0xff] %vm1373, %v2681
      %2691 = vst.msk [vmem:[%s2685 + $0x28] sm:$0xff] %vm1373, %v2682
      %2692 = vst.msk [vmem:[%s2685 + $0x30] sm:$0xff] %vm1373, %v2683
      %2693 = vst.msk [vmem:[%s2685 + $0x38] sm:$0xff] %vm1373, %v2684
      %2694 = vst.msk [vmem:[%s2685] sm:$0xff] %vm1414, %v228
      %2695 = vst.msk [vmem:[%s2685 + $0x8] sm:$0xff] %vm1414, %v230
      %2696 = vst.msk [vmem:[%s2685 + $0x10] sm:$0xff] %vm1414, %v232
      %2697 = vst.msk [vmem:[%s2685 + $0x18] sm:$0xff] %vm1414, %v234
      %2698 = vst.msk [vmem:[%s2685 + $0x20] sm:$0xff] %vm1414, %v236
      %2699 = vst.msk [vmem:[%s2685 + $0x28] sm:$0xff] %vm1414, %v238
      %2700 = vst.msk [vmem:[%s2685 + $0x30] sm:$0xff] %vm1414, %v240
      %2701 = vst.msk [vmem:[%s2685 + $0x38] sm:$0xff] %vm1414, %v242
      %v2702 = vld [vmem:[%s769 + $0x1] sm:$0xff]
      %v2703 = vld [vmem:[%s769 + $0x11] sm:$0xff]
      %v2704 = vld [vmem:[%s769 + $0x21] sm:$0xff]
      %v2705 = vld [vmem:[%s769 + $0x31] sm:$0xff]
      %v2706 = vld [vmem:[%s769 + $0x41] sm:$0xff]
      %v2707 = vld [vmem:[%s769 + $0x51] sm:$0xff]
      %v2708 = vld [vmem:[%s769 + $0x61] sm:$0xff]
      %v2709 = vld [vmem:[%s769 + $0x71] sm:$0xff]
      %v2710 = vpack.c.bf16 %v2703, %v2702
      %v2711 = vpack.c.bf16 %v2705, %v2704
      %v2712 = vpack.c.bf16 %v2707, %v2706
      %v2713 = vpack.c.bf16 %v2709, %v2708
      %s2714 = scalar_lea.vmem %s3, 768
      %v2715 = vld [vmem:[%s2714] sm:$0xf]
      %v2716 = vld [vmem:[%s2714 + $0x4] sm:$0xf]
      %v2717 = vld [vmem:[%s2714 + $0x8] sm:$0xf]
      %v2718 = vld [vmem:[%s2714 + $0xc] sm:$0xf]
      %v2719 = vld [vmem:[%s2714 + $0x10] sm:$0xf]
      %v2720 = vld [vmem:[%s2714 + $0x14] sm:$0xf]
      %v2721 = vld [vmem:[%s2714 + $0x18] sm:$0xf]
      %v2722 = vld [vmem:[%s2714 + $0x1c] sm:$0xf]
      %v2723 = vld [vmem:[%s2714 + $0x20] sm:$0xf]
      %v2724 = vld [vmem:[%s2714 + $0x24] sm:$0xf]
      %v2725 = vld [vmem:[%s2714 + $0x28] sm:$0xf]
      %v2726 = vld [vmem:[%s2714 + $0x2c] sm:$0xf]
      %v2727 = vld [vmem:[%s2714 + $0x30] sm:$0xf]
      %v2728 = vld [vmem:[%s2714 + $0x34] sm:$0xf]
      %v2729 = vld [vmem:[%s2714 + $0x38] sm:$0xf]
      %v2730 = vld [vmem:[%s2714 + $0x3c] sm:$0xf]
      %v2731 = vld [vmem:[%s769 + $0x2] sm:$0xff]
      %v2732 = vld [vmem:[%s769 + $0x12] sm:$0xff]
      %v2733 = vld [vmem:[%s769 + $0x22] sm:$0xff]
      %v2734 = vld [vmem:[%s769 + $0x32] sm:$0xff]
      %v2735 = vld [vmem:[%s769 + $0x42] sm:$0xff]
      %v2736 = vld [vmem:[%s769 + $0x52] sm:$0xff]
      %v2737 = vld [vmem:[%s769 + $0x62] sm:$0xff]
      %v2738 = vld [vmem:[%s769 + $0x72] sm:$0xff]
      %v2739 = vpack.c.bf16 %v2732, %v2731
      %v2740 = vpack.c.bf16 %v2734, %v2733
      %v2741 = vpack.c.bf16 %v2736, %v2735
      %v2742 = vpack.c.bf16 %v2738, %v2737
      %v2743 = vld [vmem:[%s2714 + $0x40] sm:$0xf]
      %v2744 = vld [vmem:[%s2714 + $0x44] sm:$0xf]
      %v2745 = vld [vmem:[%s2714 + $0x48] sm:$0xf]
      %v2746 = vld [vmem:[%s2714 + $0x4c] sm:$0xf]
      %v2747 = vld [vmem:[%s2714 + $0x50] sm:$0xf]
      %v2748 = vld [vmem:[%s2714 + $0x54] sm:$0xf]
      %v2749 = vld [vmem:[%s2714 + $0x58] sm:$0xf]
      %v2750 = vld [vmem:[%s2714 + $0x5c] sm:$0xf]
      %v2751 = vld [vmem:[%s2714 + $0x60] sm:$0xf]
      %v2752 = vld [vmem:[%s2714 + $0x64] sm:$0xf]
      %v2753 = vld [vmem:[%s2714 + $0x68] sm:$0xf]
      %v2754 = vld [vmem:[%s2714 + $0x6c] sm:$0xf]
      %v2755 = vld [vmem:[%s2714 + $0x70] sm:$0xf]
      %v2756 = vld [vmem:[%s2714 + $0x74] sm:$0xf]
      %v2757 = vld [vmem:[%s2714 + $0x78] sm:$0xf]
      %v2758 = vld [vmem:[%s2714 + $0x7c] sm:$0xf]
      %v2775 = vunpack.c.l.b16 %v2743
      %v2776 = vunpack.c.l.b16 %v2744
      %v2777 = vunpack.c.l.b16 %v2745
      %v2778 = vunpack.c.l.b16 %v2746
      %v2779 = vunpack.c.l.b16 %v2747
      %v2780 = vunpack.c.l.b16 %v2748
      %v2781 = vunpack.c.l.b16 %v2749
      %v2782 = vunpack.c.l.b16 %v2750
      %v2783 = vunpack.c.l.b16 %v2751
      %v2784 = vunpack.c.l.b16 %v2752
      %v2785 = vunpack.c.l.b16 %v2753
      %v2786 = vunpack.c.l.b16 %v2754
      %v2787 = vunpack.c.l.b16 %v2755
      %v2788 = vunpack.c.l.b16 %v2756
      %v2789 = vunpack.c.l.b16 %v2757
      %v2790 = vunpack.c.l.b16 %v2758
      %v2791 = vpack.c.b16 %v2776, %v2775
      %v2792 = vpack.c.b16 %v2778, %v2777
      %v2793 = vpack.c.b16 %v2780, %v2779
      %v2794 = vpack.c.b16 %v2782, %v2781
      %v2795 = vpack.c.b16 %v2784, %v2783
      %v2796 = vpack.c.b16 %v2786, %v2785
      %v2797 = vpack.c.b16 %v2788, %v2787
      %v2798 = vpack.c.b16 %v2790, %v2789
      %2807 = vmatprep.subr.bf16.mxu0 0
      %2808 = vmatpush1.bf16.msra.mxu0 %v2798
      %2809 = vmatprep.subr.bf16.mxu0 0
      %2810 = vmatpush1.bf16.msra.mxu0 %v2797
      %2811 = vmatprep.subr.bf16.mxu0 0
      %2812 = vmatpush1.bf16.msra.mxu0 %v2796
      %2813 = vmatprep.subr.bf16.mxu0 0
      %2814 = vmatpush1.bf16.msra.mxu0 %v2795
      %2815 = vmatprep.subr.bf16.mxu0 0
      %2816 = vmatpush1.bf16.msra.mxu0 %v2794
      %2817 = vmatprep.subr.bf16.mxu0 0
      %2818 = vmatpush1.bf16.msra.mxu0 %v2793
      %2819 = vmatprep.subr.bf16.mxu0 0
      %2820 = vmatpush1.bf16.msra.mxu0 %v2792
      %2821 = vmatprep.subr.bf16.mxu0 0
      %2822 = vmatpush1.bf16.msra.mxu0 %v2791
      %2823 = vmatprep.subr.bf16.mxu0 0
      %2824 = vmatpush2.bf16.msra.mxu0 0
      %2825 = vmatprep.subr.bf16.mxu0 0
      %2826 = vmatpush2.bf16.msra.mxu0 0
      %2827 = vmatprep.subr.bf16.mxu0 0
      %2828 = vmatpush2.bf16.msra.mxu0 0
      %2829 = vmatprep.subr.bf16.mxu0 0
      %2830 = vmatpush2.bf16.msra.mxu0 0
      %2831 = vmatprep.subr.bf16.mxu0 0
      %2832 = vmatpush2.bf16.msra.mxu0 0
      %2833 = vmatprep.subr.bf16.mxu0 0
      %2834 = vmatpush2.bf16.msra.mxu0 0
      %2835 = vmatprep.subr.bf16.mxu0 0
      %2836 = vmatpush2.bf16.msra.mxu0 0
      %2837 = vmatprep.subr.bf16.mxu0 0
      %2838 = vmatpush2.bf16.msra.mxu0 0
      %2839 = vmatprep.mubr.bf16.mxu0 0
      %2840 = vmatmul.mubr.bf16.gmra.mxu0 %v2739
      %v2841 = vpop.f32.mrf.mxu0
      %v2842 = vadd.f32 0.0, %v2841
      %v2843 = vpop.f32.mrf.mxu0
      %v2844 = vpop.f32.mrf.mxu0
      %v2845 = vadd.f32 0.0, %v2844
      %v2846 = vpop.f32.mrf.mxu0
      %2847 = vmatprep.mubr.bf16.mxu0 0
      %2848 = vmatmul.mubr.bf16.gmra.mxu0 %v2740
      %v2849 = vpop.f32.mrf.mxu0
      %v2850 = vadd.f32 0.0, %v2849
      %v2851 = vpop.f32.mrf.mxu0
      %v2852 = vpop.f32.mrf.mxu0
      %v2853 = vadd.f32 0.0, %v2852
      %v2854 = vpop.f32.mrf.mxu0
      %2855 = vmatprep.mubr.bf16.mxu0 0
      %2856 = vmatmul.mubr.bf16.gmra.mxu0 %v2741
      %v2857 = vpop.f32.mrf.mxu0
      %v2858 = vadd.f32 0.0, %v2857
      %v2859 = vpop.f32.mrf.mxu0
      %v2860 = vpop.f32.mrf.mxu0
      %v2861 = vadd.f32 0.0, %v2860
      %v2862 = vpop.f32.mrf.mxu0
      %2863 = vmatprep.mubr.bf16.mxu0 0
      %2864 = vmatmul.mubr.bf16.gmra.mxu0 %v2742
      %v2865 = vpop.f32.mrf.mxu0
      %v2866 = vadd.f32 0.0, %v2865
      %v2867 = vpop.f32.mrf.mxu0
      %v2868 = vpop.f32.mrf.mxu0
      %v2869 = vadd.f32 0.0, %v2868
      %v2870 = vpop.f32.mrf.mxu0
      %2871 = vdwg.mxu0
      %v2888 = vunpack.c.l.b16 %v2715
      %v2889 = vunpack.c.l.b16 %v2716
      %v2890 = vunpack.c.l.b16 %v2717
      %v2891 = vunpack.c.l.b16 %v2718
      %v2892 = vunpack.c.l.b16 %v2719
      %v2893 = vunpack.c.l.b16 %v2720
      %v2894 = vunpack.c.l.b16 %v2721
      %v2895 = vunpack.c.l.b16 %v2722
      %v2896 = vunpack.c.l.b16 %v2723
      %v2897 = vunpack.c.l.b16 %v2724
      %v2898 = vunpack.c.l.b16 %v2725
      %v2899 = vunpack.c.l.b16 %v2726
      %v2900 = vunpack.c.l.b16 %v2727
      %v2901 = vunpack.c.l.b16 %v2728
      %v2902 = vunpack.c.l.b16 %v2729
      %v2903 = vunpack.c.l.b16 %v2730
      %v2904 = vpack.c.b16 %v2889, %v2888
      %v2905 = vpack.c.b16 %v2891, %v2890
      %v2906 = vpack.c.b16 %v2893, %v2892
      %v2907 = vpack.c.b16 %v2895, %v2894
      %v2908 = vpack.c.b16 %v2897, %v2896
      %v2909 = vpack.c.b16 %v2899, %v2898
      %v2910 = vpack.c.b16 %v2901, %v2900
      %v2911 = vpack.c.b16 %v2903, %v2902
      %2920 = vmatprep.subr.bf16.mxu0 0
      %2921 = vmatpush1.bf16.msra.mxu0 %v2911
      %2922 = vmatprep.subr.bf16.mxu0 0
      %2923 = vmatpush1.bf16.msra.mxu0 %v2910
      %2924 = vmatprep.subr.bf16.mxu0 0
      %2925 = vmatpush1.bf16.msra.mxu0 %v2909
      %2926 = vmatprep.subr.bf16.mxu0 0
      %2927 = vmatpush1.bf16.msra.mxu0 %v2908
      %2928 = vmatprep.subr.bf16.mxu0 0
      %2929 = vmatpush1.bf16.msra.mxu0 %v2907
      %2930 = vmatprep.subr.bf16.mxu0 0
      %2931 = vmatpush1.bf16.msra.mxu0 %v2906
      %2932 = vmatprep.subr.bf16.mxu0 0
      %2933 = vmatpush1.bf16.msra.mxu0 %v2905
      %2934 = vmatprep.subr.bf16.mxu0 0
      %2935 = vmatpush1.bf16.msra.mxu0 %v2904
      %2936 = vmatprep.subr.bf16.mxu0 0
      %2937 = vmatpush2.bf16.msra.mxu0 0
      %2938 = vmatprep.subr.bf16.mxu0 0
      %2939 = vmatpush2.bf16.msra.mxu0 0
      %2940 = vmatprep.subr.bf16.mxu0 0
      %2941 = vmatpush2.bf16.msra.mxu0 0
      %2942 = vmatprep.subr.bf16.mxu0 0
      %2943 = vmatpush2.bf16.msra.mxu0 0
      %2944 = vmatprep.subr.bf16.mxu0 0
      %2945 = vmatpush2.bf16.msra.mxu0 0
      %2946 = vmatprep.subr.bf16.mxu0 0
      %2947 = vmatpush2.bf16.msra.mxu0 0
      %2948 = vmatprep.subr.bf16.mxu0 0
      %2949 = vmatpush2.bf16.msra.mxu0 0
      %2950 = vmatprep.subr.bf16.mxu0 0
      %2951 = vmatpush2.bf16.msra.mxu0 0
      %2952 = vmatprep.mubr.bf16.mxu0 0
      %2953 = vmatmul.mubr.bf16.gmra.mxu0 %v2710
      %v2954 = vpop.f32.mrf.mxu0
      %v2955 = vadd.f32 %v2842, %v2954
      %v2956 = vpop.f32.mrf.mxu0
      %v2957 = vpop.f32.mrf.mxu0
      %v2958 = vadd.f32 %v2845, %v2957
      %v2959 = vpop.f32.mrf.mxu0
      %2960 = vmatprep.mubr.bf16.mxu0 0
      %2961 = vmatmul.mubr.bf16.gmra.mxu0 %v2711
      %v2962 = vpop.f32.mrf.mxu0
      %v2963 = vadd.f32 %v2850, %v2962
      %v2964 = vpop.f32.mrf.mxu0
      %v2965 = vpop.f32.mrf.mxu0
      %v2966 = vadd.f32 %v2853, %v2965
      %v2967 = vpop.f32.mrf.mxu0
      %2968 = vmatprep.mubr.bf16.mxu0 0
      %2969 = vmatmul.mubr.bf16.gmra.mxu0 %v2712
      %v2970 = vpop.f32.mrf.mxu0
      %v2971 = vadd.f32 %v2858, %v2970
      %v2972 = vpop.f32.mrf.mxu0
      %v2973 = vpop.f32.mrf.mxu0
      %v2974 = vadd.f32 %v2861, %v2973
      %v2975 = vpop.f32.mrf.mxu0
      %2976 = vmatprep.mubr.bf16.mxu0 0
      %2977 = vmatmul.mubr.bf16.gmra.mxu0 %v2713
      %v2978 = vpop.f32.mrf.mxu0
      %v2979 = vadd.f32 %v2866, %v2978
      %v2980 = vpop.f32.mrf.mxu0
      %v2981 = vpop.f32.mrf.mxu0
      %v2982 = vadd.f32 %v2869, %v2981
      %v2983 = vpop.f32.mrf.mxu0
      %2984 = vdwg.mxu0
      %v2985 = vld [vmem:[%s2378 + $0x1] sm:$0xff]
      %v2986 = vld [vmem:[%s2378 + $0x11] sm:$0xff]
      %v2987 = vld [vmem:[%s2378 + $0x21] sm:$0xff]
      %v2988 = vld [vmem:[%s2378 + $0x31] sm:$0xff]
      %v2989 = vld [vmem:[%s2378 + $0x41] sm:$0xff]
      %v2990 = vld [vmem:[%s2378 + $0x51] sm:$0xff]
      %v2991 = vld [vmem:[%s2378 + $0x61] sm:$0xff]
      %v2992 = vld [vmem:[%s2378 + $0x71] sm:$0xff]
      %v2993 = vpack.c.bf16 %v2986, %v2985
      %v2994 = vpack.c.bf16 %v2988, %v2987
      %v2995 = vpack.c.bf16 %v2990, %v2989
      %v2996 = vpack.c.bf16 %v2992, %v2991
      %v2997 = vld [vmem:[%s2714 + $0x80] sm:$0xf]
      %v2998 = vld [vmem:[%s2714 + $0x84] sm:$0xf]
      %v2999 = vld [vmem:[%s2714 + $0x88] sm:$0xf]
      %v3000 = vld [vmem:[%s2714 + $0x8c] sm:$0xf]
      %v3001 = vld [vmem:[%s2714 + $0x90] sm:$0xf]
      %v3002 = vld [vmem:[%s2714 + $0x94] sm:$0xf]
      %v3003 = vld [vmem:[%s2714 + $0x98] sm:$0xf]
      %v3004 = vld [vmem:[%s2714 + $0x9c] sm:$0xf]
      %v3005 = vld [vmem:[%s2714 + $0xa0] sm:$0xf]
      %v3006 = vld [vmem:[%s2714 + $0xa4] sm:$0xf]
      %v3007 = vld [vmem:[%s2714 + $0xa8] sm:$0xf]
      %v3008 = vld [vmem:[%s2714 + $0xac] sm:$0xf]
      %v3009 = vld [vmem:[%s2714 + $0xb0] sm:$0xf]
      %v3010 = vld [vmem:[%s2714 + $0xb4] sm:$0xf]
      %v3011 = vld [vmem:[%s2714 + $0xb8] sm:$0xf]
      %v3012 = vld [vmem:[%s2714 + $0xbc] sm:$0xf]
      %v3029 = vunpack.c.l.b16 %v2997
      %v3030 = vunpack.c.l.b16 %v2998
      %v3031 = vunpack.c.l.b16 %v2999
      %v3032 = vunpack.c.l.b16 %v3000
      %v3033 = vunpack.c.l.b16 %v3001
      %v3034 = vunpack.c.l.b16 %v3002
      %v3035 = vunpack.c.l.b16 %v3003
      %v3036 = vunpack.c.l.b16 %v3004
      %v3037 = vunpack.c.l.b16 %v3005
      %v3038 = vunpack.c.l.b16 %v3006
      %v3039 = vunpack.c.l.b16 %v3007
      %v3040 = vunpack.c.l.b16 %v3008
      %v3041 = vunpack.c.l.b16 %v3009
      %v3042 = vunpack.c.l.b16 %v3010
      %v3043 = vunpack.c.l.b16 %v3011
      %v3044 = vunpack.c.l.b16 %v3012
      %v3045 = vpack.c.b16 %v3030, %v3029
      %v3046 = vpack.c.b16 %v3032, %v3031
      %v3047 = vpack.c.b16 %v3034, %v3033
      %v3048 = vpack.c.b16 %v3036, %v3035
      %v3049 = vpack.c.b16 %v3038, %v3037
      %v3050 = vpack.c.b16 %v3040, %v3039
      %v3051 = vpack.c.b16 %v3042, %v3041
      %v3052 = vpack.c.b16 %v3044, %v3043
      %3061 = vmatprep.subr.bf16.mxu0 0
      %3062 = vmatpush1.bf16.msra.mxu0 %v3052
      %3063 = vmatprep.subr.bf16.mxu0 0
      %3064 = vmatpush1.bf16.msra.mxu0 %v3051
      %3065 = vmatprep.subr.bf16.mxu0 0
      %3066 = vmatpush1.bf16.msra.mxu0 %v3050
      %3067 = vmatprep.subr.bf16.mxu0 0
      %3068 = vmatpush1.bf16.msra.mxu0 %v3049
      %3069 = vmatprep.subr.bf16.mxu0 0
      %3070 = vmatpush1.bf16.msra.mxu0 %v3048
      %3071 = vmatprep.subr.bf16.mxu0 0
      %3072 = vmatpush1.bf16.msra.mxu0 %v3047
      %3073 = vmatprep.subr.bf16.mxu0 0
      %3074 = vmatpush1.bf16.msra.mxu0 %v3046
      %3075 = vmatprep.subr.bf16.mxu0 0
      %3076 = vmatpush1.bf16.msra.mxu0 %v3045
      %3077 = vmatprep.subr.bf16.mxu0 0
      %3078 = vmatpush2.bf16.msra.mxu0 0
      %3079 = vmatprep.subr.bf16.mxu0 0
      %3080 = vmatpush2.bf16.msra.mxu0 0
      %3081 = vmatprep.subr.bf16.mxu0 0
      %3082 = vmatpush2.bf16.msra.mxu0 0
      %3083 = vmatprep.subr.bf16.mxu0 0
      %3084 = vmatpush2.bf16.msra.mxu0 0
      %3085 = vmatprep.subr.bf16.mxu0 0
      %3086 = vmatpush2.bf16.msra.mxu0 0
      %3087 = vmatprep.subr.bf16.mxu0 0
      %3088 = vmatpush2.bf16.msra.mxu0 0
      %3089 = vmatprep.subr.bf16.mxu0 0
      %3090 = vmatpush2.bf16.msra.mxu0 0
      %3091 = vmatprep.subr.bf16.mxu0 0
      %3092 = vmatpush2.bf16.msra.mxu0 0
      %3093 = vmatprep.mubr.bf16.mxu0 0
      %3094 = vmatmul.mubr.bf16.gmra.mxu0 %v2993
      %v3095 = vpop.f32.mrf.mxu0
      %v3096 = vadd.f32 0.0, %v3095
      %v3097 = vpop.f32.mrf.mxu0
      %v3098 = vpop.f32.mrf.mxu0
      %v3099 = vadd.f32 0.0, %v3098
      %v3100 = vpop.f32.mrf.mxu0
      %3101 = vmatprep.mubr.bf16.mxu0 0
      %3102 = vmatmul.mubr.bf16.gmra.mxu0 %v2994
      %v3103 = vpop.f32.mrf.mxu0
      %v3104 = vadd.f32 0.0, %v3103
      %v3105 = vpop.f32.mrf.mxu0
      %v3106 = vpop.f32.mrf.mxu0
      %v3107 = vadd.f32 0.0, %v3106
      %v3108 = vpop.f32.mrf.mxu0
      %3109 = vmatprep.mubr.bf16.mxu0 0
      %3110 = vmatmul.mubr.bf16.gmra.mxu0 %v2995
      %v3111 = vpop.f32.mrf.mxu0
      %v3112 = vadd.f32 0.0, %v3111
      %v3113 = vpop.f32.mrf.mxu0
      %v3114 = vpop.f32.mrf.mxu0
      %v3115 = vadd.f32 0.0, %v3114
      %v3116 = vpop.f32.mrf.mxu0
      %3117 = vmatprep.mubr.bf16.mxu0 0
      %3118 = vmatmul.mubr.bf16.gmra.mxu0 %v2996
      %v3119 = vpop.f32.mrf.mxu0
      %v3120 = vadd.f32 0.0, %v3119
      %v3121 = vpop.f32.mrf.mxu0
      %v3122 = vpop.f32.mrf.mxu0
      %v3123 = vadd.f32 0.0, %v3122
      %v3124 = vpop.f32.mrf.mxu0
      %3125 = vdwg.mxu0
      %v3126 = vadd.f32 %v2955, %v3096
      %v3127 = vadd.f32 %v2958, %v3099
      %v3128 = vadd.f32 %v2963, %v3104
      %v3129 = vadd.f32 %v2966, %v3107
      %v3130 = vadd.f32 %v2971, %v3112
      %v3131 = vadd.f32 %v2974, %v3115
      %v3132 = vadd.f32 %v2979, %v3120
      %v3133 = vadd.f32 %v2982, %v3123
      %v3134 = vld [vmem:[%s2378 + $0x2] sm:$0xff]
      %v3135 = vld [vmem:[%s2378 + $0x12] sm:$0xff]
      %v3136 = vld [vmem:[%s2378 + $0x22] sm:$0xff]
      %v3137 = vld [vmem:[%s2378 + $0x32] sm:$0xff]
      %v3138 = vld [vmem:[%s2378 + $0x42] sm:$0xff]
      %v3139 = vld [vmem:[%s2378 + $0x52] sm:$0xff]
      %v3140 = vld [vmem:[%s2378 + $0x62] sm:$0xff]
      %v3141 = vld [vmem:[%s2378 + $0x72] sm:$0xff]
      %v3142 = vpack.c.bf16 %v3135, %v3134
      %v3143 = vpack.c.bf16 %v3137, %v3136
      %v3144 = vpack.c.bf16 %v3139, %v3138
      %v3145 = vpack.c.bf16 %v3141, %v3140
      %v3146 = vld [vmem:[%s2714 + $0xc0] sm:$0xf]
      %v3147 = vld [vmem:[%s2714 + $0xc4] sm:$0xf]
      %v3148 = vld [vmem:[%s2714 + $0xc8] sm:$0xf]
      %v3149 = vld [vmem:[%s2714 + $0xcc] sm:$0xf]
      %v3150 = vld [vmem:[%s2714 + $0xd0] sm:$0xf]
      %v3151 = vld [vmem:[%s2714 + $0xd4] sm:$0xf]
      %v3152 = vld [vmem:[%s2714 + $0xd8] sm:$0xf]
      %v3153 = vld [vmem:[%s2714 + $0xdc] sm:$0xf]
      %v3154 = vld [vmem:[%s2714 + $0xe0] sm:$0xf]
      %v3155 = vld [vmem:[%s2714 + $0xe4] sm:$0xf]
      %v3156 = vld [vmem:[%s2714 + $0xe8] sm:$0xf]
      %v3157 = vld [vmem:[%s2714 + $0xec] sm:$0xf]
      %v3158 = vld [vmem:[%s2714 + $0xf0] sm:$0xf]
      %v3159 = vld [vmem:[%s2714 + $0xf4] sm:$0xf]
      %v3160 = vld [vmem:[%s2714 + $0xf8] sm:$0xf]
      %v3161 = vld [vmem:[%s2714 + $0xfc] sm:$0xf]
      %v3178 = vunpack.c.l.b16 %v3146
      %v3179 = vunpack.c.l.b16 %v3147
      %v3180 = vunpack.c.l.b16 %v3148
      %v3181 = vunpack.c.l.b16 %v3149
      %v3182 = vunpack.c.l.b16 %v3150
      %v3183 = vunpack.c.l.b16 %v3151
      %v3184 = vunpack.c.l.b16 %v3152
      %v3185 = vunpack.c.l.b16 %v3153
      %v3186 = vunpack.c.l.b16 %v3154
      %v3187 = vunpack.c.l.b16 %v3155
      %v3188 = vunpack.c.l.b16 %v3156
      %v3189 = vunpack.c.l.b16 %v3157
      %v3190 = vunpack.c.l.b16 %v3158
      %v3191 = vunpack.c.l.b16 %v3159
      %v3192 = vunpack.c.l.b16 %v3160
      %v3193 = vunpack.c.l.b16 %v3161
      %v3194 = vpack.c.b16 %v3179, %v3178
      %v3195 = vpack.c.b16 %v3181, %v3180
      %v3196 = vpack.c.b16 %v3183, %v3182
      %v3197 = vpack.c.b16 %v3185, %v3184
      %v3198 = vpack.c.b16 %v3187, %v3186
      %v3199 = vpack.c.b16 %v3189, %v3188
      %v3200 = vpack.c.b16 %v3191, %v3190
      %v3201 = vpack.c.b16 %v3193, %v3192
      %3210 = vmatprep.subr.bf16.mxu0 0
      %3211 = vmatpush1.bf16.msra.mxu0 %v3201
      %3212 = vmatprep.subr.bf16.mxu0 0
      %3213 = vmatpush1.bf16.msra.mxu0 %v3200
      %3214 = vmatprep.subr.bf16.mxu0 0
      %3215 = vmatpush1.bf16.msra.mxu0 %v3199
      %3216 = vmatprep.subr.bf16.mxu0 0
      %3217 = vmatpush1.bf16.msra.mxu0 %v3198
      %3218 = vmatprep.subr.bf16.mxu0 0
      %3219 = vmatpush1.bf16.msra.mxu0 %v3197
      %3220 = vmatprep.subr.bf16.mxu0 0
      %3221 = vmatpush1.bf16.msra.mxu0 %v3196
      %3222 = vmatprep.subr.bf16.mxu0 0
      %3223 = vmatpush1.bf16.msra.mxu0 %v3195
      %3224 = vmatprep.subr.bf16.mxu0 0
      %3225 = vmatpush1.bf16.msra.mxu0 %v3194
      %3226 = vmatprep.subr.bf16.mxu0 0
      %3227 = vmatpush2.bf16.msra.mxu0 0
      %3228 = vmatprep.subr.bf16.mxu0 0
      %3229 = vmatpush2.bf16.msra.mxu0 0
      %3230 = vmatprep.subr.bf16.mxu0 0
      %3231 = vmatpush2.bf16.msra.mxu0 0
      %3232 = vmatprep.subr.bf16.mxu0 0
      %3233 = vmatpush2.bf16.msra.mxu0 0
      %3234 = vmatprep.subr.bf16.mxu0 0
      %3235 = vmatpush2.bf16.msra.mxu0 0
      %3236 = vmatprep.subr.bf16.mxu0 0
      %3237 = vmatpush2.bf16.msra.mxu0 0
      %3238 = vmatprep.subr.bf16.mxu0 0
      %3239 = vmatpush2.bf16.msra.mxu0 0
      %3240 = vmatprep.subr.bf16.mxu0 0
      %3241 = vmatpush2.bf16.msra.mxu0 0
      %3242 = vmatprep.mubr.bf16.mxu0 0
      %3243 = vmatmul.mubr.bf16.gmra.mxu0 %v3142
      %v3244 = vpop.f32.mrf.mxu0
      %v3245 = vadd.f32 0.0, %v3244
      %v3246 = vpop.f32.mrf.mxu0
      %v3247 = vpop.f32.mrf.mxu0
      %v3248 = vadd.f32 0.0, %v3247
      %v3249 = vpop.f32.mrf.mxu0
      %3250 = vmatprep.mubr.bf16.mxu0 0
      %3251 = vmatmul.mubr.bf16.gmra.mxu0 %v3143
      %v3252 = vpop.f32.mrf.mxu0
      %v3253 = vadd.f32 0.0, %v3252
      %v3254 = vpop.f32.mrf.mxu0
      %v3255 = vpop.f32.mrf.mxu0
      %v3256 = vadd.f32 0.0, %v3255
      %v3257 = vpop.f32.mrf.mxu0
      %3258 = vmatprep.mubr.bf16.mxu0 0
      %3259 = vmatmul.mubr.bf16.gmra.mxu0 %v3144
      %v3260 = vpop.f32.mrf.mxu0
      %v3261 = vadd.f32 0.0, %v3260
      %v3262 = vpop.f32.mrf.mxu0
      %v3263 = vpop.f32.mrf.mxu0
      %v3264 = vadd.f32 0.0, %v3263
      %v3265 = vpop.f32.mrf.mxu0
      %3266 = vmatprep.mubr.bf16.mxu0 0
      %3267 = vmatmul.mubr.bf16.gmra.mxu0 %v3145
      %v3268 = vpop.f32.mrf.mxu0
      %v3269 = vadd.f32 0.0, %v3268
      %v3270 = vpop.f32.mrf.mxu0
      %v3271 = vpop.f32.mrf.mxu0
      %v3272 = vadd.f32 0.0, %v3271
      %v3273 = vpop.f32.mrf.mxu0
      %3274 = vdwg.mxu0
      %v3275 = vadd.f32 %v3126, %v3245
      %v3276 = vadd.f32 %v3127, %v3248
      %v3277 = vadd.f32 %v3128, %v3253
      %v3278 = vadd.f32 %v3129, %v3256
      %v3279 = vadd.f32 %v3130, %v3261
      %v3280 = vadd.f32 %v3131, %v3264
      %v3281 = vadd.f32 %v3132, %v3269
      %v3282 = vadd.f32 %v3133, %v3272
      %v3283 = vadd.f32 %v3275, %v1363
      %v3284 = vadd.f32 %v3276, %v1363
      %v3285 = vadd.f32 %v3277, %v1363
      %v3286 = vadd.f32 %v3278, %v1363
      %v3287 = vadd.f32 %v3279, %v1363
      %v3288 = vadd.f32 %v3280, %v1363
      %v3289 = vadd.f32 %v3281, %v1363
      %v3290 = vadd.f32 %v3282, %v1363
      %s3291 = scalar_lea.vmem %s224, 192
      %3292 = vst.msk [vmem:[%s3291] sm:$0xff] %vm1373, %v3283
      %3293 = vst.msk [vmem:[%s3291 + $0x8] sm:$0xff] %vm1373, %v3284
      %3294 = vst.msk [vmem:[%s3291 + $0x10] sm:$0xff] %vm1373, %v3285
      %3295 = vst.msk [vmem:[%s3291 + $0x18] sm:$0xff] %vm1373, %v3286
      %3296 = vst.msk [vmem:[%s3291 + $0x20] sm:$0xff] %vm1373, %v3287
      %3297 = vst.msk [vmem:[%s3291 + $0x28] sm:$0xff] %vm1373, %v3288
      %3298 = vst.msk [vmem:[%s3291 + $0x30] sm:$0xff] %vm1373, %v3289
      %3299 = vst.msk [vmem:[%s3291 + $0x38] sm:$0xff] %vm1373, %v3290
      %3302 = vrot.lane.b32.xlu0 %v228, 4
      %v3303 = vpop.permute.xlu0 %3302
      %3304 = vrot.lane.b32.xlu0 %v229, 4
      %v3305 = vpop.permute.xlu0 %3304
      %3306 = vrot.lane.b32.xlu0 %v230, 4
      %v3307 = vpop.permute.xlu0 %3306
      %3308 = vrot.lane.b32.xlu0 %v231, 4
      %v3309 = vpop.permute.xlu0 %3308
      %3310 = vrot.lane.b32.xlu0 %v232, 4
      %v3311 = vpop.permute.xlu0 %3310
      %3312 = vrot.lane.b32.xlu0 %v233, 4
      %v3313 = vpop.permute.xlu0 %3312
      %3314 = vrot.lane.b32.xlu0 %v234, 4
      %v3315 = vpop.permute.xlu0 %3314
      %3316 = vrot.lane.b32.xlu0 %v235, 4
      %v3317 = vpop.permute.xlu0 %3316
      %3318 = vrot.lane.b32.xlu0 %v236, 4
      %v3319 = vpop.permute.xlu0 %3318
      %3320 = vrot.lane.b32.xlu0 %v237, 4
      %v3321 = vpop.permute.xlu0 %3320
      %3322 = vrot.lane.b32.xlu0 %v238, 4
      %v3323 = vpop.permute.xlu0 %3322
      %3324 = vrot.lane.b32.xlu0 %v239, 4
      %v3325 = vpop.permute.xlu0 %3324
      %3326 = vrot.lane.b32.xlu0 %v240, 4
      %v3327 = vpop.permute.xlu0 %3326
      %3328 = vrot.lane.b32.xlu0 %v241, 4
      %v3329 = vpop.permute.xlu0 %3328
      %3330 = vrot.lane.b32.xlu0 %v242, 4
      %v3331 = vpop.permute.xlu0 %3330
      %3332 = vrot.lane.b32.xlu0 %v243, 4
      %v3333 = vpop.permute.xlu0 %3332
      %3350 = vst.msk [vmem:[%s3291 - $0x1] sm:$0xfe] %vm2077, %v3303
      %3351 = vst.msk [vmem:[%s3291 + $0x7] sm:$0x1] %vm2079, %v3305
      %3352 = vst.msk [vmem:[%s3291 + $0x7] sm:$0xfe] %vm2077, %v3307
      %3353 = vst.msk [vmem:[%s3291 + $0xf] sm:$0x1] %vm2079, %v3309
      %3354 = vst.msk [vmem:[%s3291 + $0xf] sm:$0xfe] %vm2077, %v3311
      %3355 = vst.msk [vmem:[%s3291 + $0x17] sm:$0x1] %vm2079, %v3313
      %3356 = vst.msk [vmem:[%s3291 + $0x17] sm:$0xfe] %vm2077, %v3315
      %3357 = vst.msk [vmem:[%s3291 + $0x1f] sm:$0x1] %vm2079, %v3317
      %3358 = vst.msk [vmem:[%s3291 + $0x1f] sm:$0xfe] %vm2077, %v3319
      %3359 = vst.msk [vmem:[%s3291 + $0x27] sm:$0x1] %vm2079, %v3321
      %3360 = vst.msk [vmem:[%s3291 + $0x27] sm:$0xfe] %vm2077, %v3323
      %3361 = vst.msk [vmem:[%s3291 + $0x2f] sm:$0x1] %vm2079, %v3325
      %3362 = vst.msk [vmem:[%s3291 + $0x2f] sm:$0xfe] %vm2077, %v3327
      %3363 = vst.msk [vmem:[%s3291 + $0x37] sm:$0x1] %vm2079, %v3329
      %3364 = vst.msk [vmem:[%s3291 + $0x37] sm:$0xfe] %vm2077, %v3331
      %3365 = vst.msk [vmem:[%s3291 + $0x3f] sm:$0x1] %vm2079, %v3333
      %p3366 = scmp.lt.s32.totalorder %s16, 1
      %s3367 = scalar_select %p3366, %s16, 1
      %s3368 = smul.addr %s3367, 32
      %s3369 = smul.addr %s3368, 8
      %s3370 = scalar_lea.vmem %s5, %s3369
      // Predicated region
      $region41: #{unet_innermost_forward.1} parent=39 // pred_check
        %p3371 = pneg %p144
      $region42: #{unet_innermost_forward.1} parent=39 // pred_check_branch
        %3373 = sbr.rel (%p3371) target = $region44
      $region43: #{unet_innermost_forward.1} parent=39 // pred_region
        _
      $region44: #{unet_innermost_forward.1} parent=39 // pred_fallthru
        _
    $region40: #{unet_innermost_forward.1} parent=5 // pred_fallthru
      _
    %p3374 = scmp.le.s32.totalorder 2, %s11
    // Predicated region
    $region45: #{unet_innermost_forward.1} parent=5 // pred_check
      %p3375 = pneg %p3374
    $region46: #{unet_innermost_forward.1} parent=5 // pred_check_branch
      %3377 = sbr.rel (%p3375) target = $region48
    $region47: #{unet_innermost_forward.1} parent=5 // pred_region
      %s3378 = ssub.s32 %s11, 2
      // Predicated region
      $region49: #{unet_innermost_forward.1} parent=47 // pred_check
        %p3379 = pneg %p150
      $region50: #{unet_innermost_forward.1} parent=47 // pred_check_branch
        %3381 = sbr.rel (%p3379) target = $region52
      $region51: #{unet_innermost_forward.1} parent=47 // pred_region
        %p3382 = scmp.lt.s32.totalorder %s17, 1
        %s3383 = scalar_select %p3382, %s17, 1
        %s3384 = smul.addr %s3383, 32
        %s3385 = smul.addr %s3384, 8
        %s3386 = scalar_lea.vmem %s5, %s3385
      $region52: #{unet_innermost_forward.1} parent=47 // pred_fallthru
        _
    $region48: #{unet_innermost_forward.1} parent=5 // pred_fallthru
      _
  $region6: #{unet_innermost_forward.1} parent=0 // loop_footer
    %s15 = sadd.s32 1, %s11
  $region7: #{unet_innermost_forward.1} parent=0 // loop_footer_branch
    %10 = sbr.rel target = $region3
  $region8: #{unet_innermost_forward.1} parent=0 // loop_exit
    _

</llo_original>
